<compile_context>
chip_gen: v7x
topology: tpu7x:2x2x1
jax: 0.10.0
libtpu: 0.0.40
codegen_flags: <defaults>
</compile_context>

<pallas_src>
import jax
import jax.numpy as jnp
from jax.experimental import pallas as pl
from jax.experimental.pallas import tpu as pltpu

BN_EPS = 1e-5
LANE = 128


def _round_up(x, m):
    return (x + m - 1) // m * m


def _pick_images_per_step(n, h, w, cin_p, c_p,
                          budget_bytes=24 * 1024 * 1024, max_rows=4096):
    """Largest divisor b of n such that b images per grid step stay inside a
    conservative VMEM budget (fits the 32 MiB default scoped VMEM, incl. v7x)
    while keeping the MXU M-dimension reasonably large."""
    hw = h * w
    best = 1
    for b in range(1, n + 1):
        if n % b:
            continue
        per_step = (
            2 * b * hw * cin_p * 2                  # input block (double-buffered)
            + 2 * b * hw * c_p * 2                  # raw output block (double-buffered)
            + b * (h + 2) * (w + 16) * cin_p * 4    # f32 zero-halo value
            + b * hw * 9 * cin_p * 2                # bf16 im2col patch
            + b * hw * c_p * 4                      # f32 matmul accumulator
            + 9 * cin_p * c_p * 2                   # resident im2col weights
        )
        if b * hw <= max_rows and per_step <= budget_bytes:
            best = b
    return best


# ---------------------------------------------------------------------------
# Conv kernels: 3x3, stride 1, pad 1 (halo built in VMEM) + BN statistics.
# ---------------------------------------------------------------------------
def _make_conv_kernel(b_img, H, W, cin_p, c_p, fuse_bn_relu):
    HW = H * W
    M = b_img * HW
    PADW = 8   # sublane-aligned zero margin along W (only 1 column is needed)

    def conv_body(interior_f32, w_ref, raw_ref, sum_ref, sq_ref):
        # interior_f32 : (b_img, H, W, cin_p) f32 pre-conv activation block
        # w_ref        : (9*cin_p, c_p) bf16 im2col weight (resident)
        # raw_ref      : (M, c_p) bf16 raw conv output block
        # sum_ref/sq_ref: (1, 1, c_p) f32 per-step BN partials
        #
        # Zero halo built as a VMEM value (never round-trips through HBM).
        zw = jnp.zeros((b_img, H, PADW, cin_p), jnp.float32)
        zh = jnp.zeros((b_img, 1, W + 2 * PADW, cin_p), jnp.float32)
        xp = jnp.concatenate(
            [zh, jnp.concatenate([zw, interior_f32, zw], axis=2), zh], axis=1)

        # In-kernel im2col: nine shifted taps -> one (M, 9*cin_p) x (9*cin_p, c_p)
        # bf16 MXU matmul with f32 accumulation and a single store (no RMW).
        taps = [
            xp[:, kh:kh + H, kw + PADW - 1:kw + PADW - 1 + W, :]
            .reshape(M, cin_p).astype(jnp.bfloat16)
            for kh in range(3) for kw in range(3)
        ]
        patch = jnp.concatenate(taps, axis=1)                    # (M, 9*cin_p)
        acc = jnp.dot(patch, w_ref[...],
                      preferred_element_type=jnp.float32)        # (M, c_p) f32

        # Per-step BN partial statistics from the f32 accumulator (reduced
        # outside the kernel; keeps the grid axis fully parallel).
        sum_ref[...] = jnp.sum(acc, axis=0, keepdims=True).reshape(1, 1, c_p)
        sq_ref[...] = jnp.sum(acc * acc, axis=0,
                              keepdims=True).reshape(1, 1, c_p)

        # Single bf16 store of the raw conv output (halves HBM writeback).
        raw_ref[...] = acc.astype(raw_ref.dtype)

    if fuse_bn_relu:
        def kernel(raw_in_ref, scale_ref, shift_ref, w_ref,
                   raw_ref, sum_ref, sq_ref):
            # Fused BN1 affine + ReLU on the previous conv's raw output.
            h = (raw_in_ref[...].astype(jnp.float32) * scale_ref[...]
                 + shift_ref[...])
            h = jnp.maximum(h, 0.0).reshape(b_img, H, W, cin_p)
            conv_body(h, w_ref, raw_ref, sum_ref, sq_ref)
    else:
        def kernel(x_ref, w_ref, raw_ref, sum_ref, sq_ref):
            conv_body(x_ref[...].astype(jnp.float32),
                      w_ref, raw_ref, sum_ref, sq_ref)

    return kernel


def _conv1_stats(x_img, w_im2col):
    """x_img: (N, H, W, cin_p) bf16 (channel-padded, no halo).
    Returns raw (N*H*W, c_p) bf16 and per-channel (sum, sumsq) f32."""
    N, H, W, cin_p = x_img.shape
    c_p = w_im2col.shape[1]
    HW = H * W
    b_img = _pick_images_per_step(N, H, W, cin_p, c_p)
    G = N // b_img
    kernel = _make_conv_kernel(b_img, H, W, cin_p, c_p, fuse_bn_relu=False)
    raw, psum, psq = pl.pallas_call(
        kernel,
        out_shape=(jax.ShapeDtypeStruct((N * HW, c_p), jnp.bfloat16),
                   jax.ShapeDtypeStruct((G, 1, c_p), jnp.float32),
                   jax.ShapeDtypeStruct((G, 1, c_p), jnp.float32)),
        grid=(G,),
        in_specs=[
            pl.BlockSpec((b_img, H, W, cin_p), lambda g: (g, 0, 0, 0)),
            pl.BlockSpec((9 * cin_p, c_p), lambda g: (0, 0)),
        ],
        out_specs=(
            pl.BlockSpec((b_img * HW, c_p), lambda g: (g, 0)),
            pl.BlockSpec((1, 1, c_p), lambda g: (g, 0, 0)),
            pl.BlockSpec((1, 1, c_p), lambda g: (g, 0, 0)),
        ),
        compiler_params=pltpu.CompilerParams(
            dimension_semantics=("parallel",)),
    )(x_img, w_im2col)
    return raw, jnp.sum(psum, axis=(0, 1)), jnp.sum(psq, axis=(0, 1))


def _conv2_fused_stats(raw_in, scale, shift, w_im2col, n, h, w):
    """Conv2 with BN1 affine + ReLU + zero-halo padding fused into the kernel.
    raw_in: (N*H*W, c_p) bf16; scale/shift: (1, c_p) f32 folded BN1 params."""
    m, c_p = raw_in.shape
    HW = h * w
    b_img = _pick_images_per_step(n, h, w, c_p, c_p)
    G = n // b_img
    kernel = _make_conv_kernel(b_img, h, w, c_p, c_p, fuse_bn_relu=True)
    raw2, psum, psq = pl.pallas_call(
        kernel,
        out_shape=(jax.ShapeDtypeStruct((m, c_p), jnp.bfloat16),
                   jax.ShapeDtypeStruct((G, 1, c_p), jnp.float32),
                   jax.ShapeDtypeStruct((G, 1, c_p), jnp.float32)),
        grid=(G,),
        in_specs=[
            pl.BlockSpec((b_img * HW, c_p), lambda g: (g, 0)),
            pl.BlockSpec((1, c_p), lambda g: (0, 0)),
            pl.BlockSpec((1, c_p), lambda g: (0, 0)),
            pl.BlockSpec((9 * c_p, c_p), lambda g: (0, 0)),
        ],
        out_specs=(
            pl.BlockSpec((b_img * HW, c_p), lambda g: (g, 0)),
            pl.BlockSpec((1, 1, c_p), lambda g: (g, 0, 0)),
            pl.BlockSpec((1, 1, c_p), lambda g: (g, 0, 0)),
        ),
        compiler_params=pltpu.CompilerParams(
            dimension_semantics=("parallel",)),
    )(raw_in, scale, shift, w_im2col)
    return raw2, jnp.sum(psum, axis=(0, 1)), jnp.sum(psq, axis=(0, 1))


# ---------------------------------------------------------------------------
# Kernel C: folded-BN2 affine + identity residual + ReLU, row-tiled.
# ---------------------------------------------------------------------------
def _bn_add_relu_kernel(raw_ref, scale_ref, shift_ref, res_ref, out_ref):
    y = (raw_ref[...].astype(jnp.float32) * scale_ref[...] + shift_ref[...]
         + res_ref[...].astype(jnp.float32))
    out_ref[...] = jnp.maximum(y, 0.0).astype(out_ref.dtype)


def _bn_add_relu(raw, scale, shift, residual, out_dtype=jnp.float32):
    m, c_p = raw.shape
    tm = min(m, 1024)                      # bounded tile; cdiv grid, no m-divisor search
    return pl.pallas_call(
        _bn_add_relu_kernel,
        out_shape=jax.ShapeDtypeStruct((m, c_p), out_dtype),
        grid=(pl.cdiv(m, tm),),
        in_specs=[
            pl.BlockSpec((tm, c_p), lambda i: (i, 0)),
            pl.BlockSpec((1, c_p), lambda i: (0, 0)),
            pl.BlockSpec((1, c_p), lambda i: (0, 0)),
            pl.BlockSpec((tm, c_p), lambda i: (i, 0)),
        ],
        out_specs=pl.BlockSpec((tm, c_p), lambda i: (i, 0)),
        compiler_params=pltpu.CompilerParams(
            dimension_semantics=("parallel",)),
    )(raw, scale, shift, residual)


# ---------------------------------------------------------------------------
# Glue helpers
# ---------------------------------------------------------------------------
def _pack_weight_im2col(w_oihw, cin_p, c_p):
    """(Cout, Cin, 3, 3) -> (9*cin_p, c_p) bf16 im2col weight, channel-padded.
    Row order matches the in-kernel tap order (kh, kw, ci)."""
    cout, cin = w_oihw.shape[0], w_oihw.shape[1]
    w = jnp.transpose(w_oihw.astype(jnp.float32), (2, 3, 1, 0))   # (3,3,Cin,Cout)
    w = jnp.pad(w, ((0, 0), (0, 0), (0, cin_p - cin), (0, c_p - cout)))
    return w.reshape(9 * cin_p, c_p).astype(jnp.bfloat16)


def _bn_fold(total, total_sq, gamma, beta, m_rows, c, c_p):
    """Fold train-mode batch norm into a per-channel scale/shift (f32).
    Uses E[x^2]-E[x]^2 variance; conv outputs are near zero-mean so the
    cancellation concern from the review is benign here."""
    mean = total / m_rows
    var = jnp.maximum(total_sq / m_rows - mean * mean, 0.0)   # biased variance
    inv_std = jax.lax.rsqrt(var + BN_EPS)
    g = jnp.pad(gamma.astype(jnp.float32), (0, c_p - c))
    b = jnp.pad(beta.astype(jnp.float32), (0, c_p - c))
    scale = g * inv_std
    shift = b - mean * scale
    return scale.reshape(1, c_p), shift.reshape(1, c_p)


# ---------------------------------------------------------------------------
# BasicBlock forward
# ---------------------------------------------------------------------------
def basic_block_forward(x_nchw,
                        conv1_w, conv1_b, bn1_gamma, bn1_beta,
                        conv2_w, conv2_b, bn2_gamma, bn2_beta):
    """ResNet BasicBlock forward (stride=1, downsample=None), NCHW in/out."""
    # TODO(synk): stride>1 and the optional downsample shortcut are not
    # implemented (module defaults stride=1, downsample=None are used).
    # Conv biases are exactly cancelled by train-mode BN mean subtraction.
    del conv1_b, conv2_b

    N, cin, H, W = x_nchw.shape
    planes = conv1_w.shape[0]
    assert conv2_w.shape[:2] == (planes, planes)
    assert cin == planes, "identity shortcut requires inplanes == planes"

    cin_p = _round_up(cin, LANE)
    c_p = _round_up(planes, LANE)
    m = N * H * W

    # NHWC, cast to bf16 *before* padding; only channels are padded in HBM
    # (the spatial halo is built in-kernel).  The same array doubles as the
    # bf16 residual stream for the epilogue kernel.
    # TODO(synk): for very small channel counts the 128-lane padding still
    # inflates HBM traffic; avoiding it needs a non-padded lane layout.
    x_img = jnp.pad(
        jnp.transpose(x_nchw, (0, 2, 3, 1)).astype(jnp.bfloat16),
        ((0, 0), (0, 0), (0, 0), (0, cin_p - cin)))

    w1 = _pack_weight_im2col(conv1_w, cin_p, c_p)
    w2 = _pack_weight_im2col(conv2_w, c_p, c_p)

    # conv1 + batch statistics
    raw1, sum1, sq1 = _conv1_stats(x_img, w1)
    scale1, shift1 = _bn_fold(sum1, sq1, bn1_gamma, bn1_beta, m, planes, c_p)

    # conv2 with BN1 + ReLU + halo padding fused into the kernel
    raw2, sum2, sq2 = _conv2_fused_stats(raw1, scale1, shift1, w2, N, H, W)
    scale2, shift2 = _bn_fold(sum2, sq2, bn2_gamma, bn2_beta, m, planes, c_p)

    # BN2 affine + identity residual + ReLU
    identity = x_img.reshape(m, cin_p)
    out_flat = _bn_add_relu(raw2, scale2, shift2, identity,
                            out_dtype=jnp.float32)

    out = out_flat.reshape(N, H, W, c_p)[:, :, :, :planes]
    return jnp.transpose(out, (0, 3, 1, 2))


# ---------------------------------------------------------------------------
# Pure-JAX reference (train-mode BN) for a loose self-check.
# ---------------------------------------------------------------------------
def _reference_basic_block(x, w1, b1, g1, be1, w2, b2, g2, be2):
    def conv(xx, ww, bb):
        y = jax.lax.conv_general_dilated(
            xx, ww, window_strides=(1, 1), padding=((1, 1), (1, 1)),
            dimension_numbers=("NCHW", "OIHW", "NCHW"))
        return y + bb.reshape(1, -1, 1, 1)

    def bn_train(y, gamma, beta):
        mean = jnp.mean(y, axis=(0, 2, 3), keepdims=True)
        var = jnp.var(y, axis=(0, 2, 3), keepdims=True)     # biased
        return ((y - mean) * jax.lax.rsqrt(var + BN_EPS)
                * gamma.reshape(1, -1, 1, 1) + beta.reshape(1, -1, 1, 1))

    out = jax.nn.relu(bn_train(conv(x, w1, b1), g1, be1))
    out = bn_train(conv(out, w2, b2), g2, be2)
    return jax.nn.relu(out + x)


if __name__ == "__main__":
    # BasicBlock(inplanes=4, planes=4, stride=1, downsample=None)
    N, C, H, W = 2, 4, 16, 16
    key = jax.random.PRNGKey(0)
    kx, kw1, kb1, kw2, kb2 = jax.random.split(key, 5)

    x = jax.random.normal(kx, (N, C, H, W), dtype=jnp.float32)

    fan_in = C * 3 * 3
    bound = 1.0 / (fan_in ** 0.5)
    conv1_w = jax.random.uniform(kw1, (C, C, 3, 3), jnp.float32,
                                 minval=-bound, maxval=bound)
    conv1_b = jax.random.uniform(kb1, (C,), jnp.float32,
                                 minval=-bound, maxval=bound)
    conv2_w = jax.random.uniform(kw2, (C, C, 3, 3), jnp.float32,
                                 minval=-bound, maxval=bound)
    conv2_b = jax.random.uniform(kb2, (C,), jnp.float32,
                                 minval=-bound, maxval=bound)
    bn1_gamma = jnp.ones((C,), jnp.float32)    # nn.BatchNorm2d default weight
    bn1_beta = jnp.zeros((C,), jnp.float32)    # nn.BatchNorm2d default bias
    bn2_gamma = jnp.ones((C,), jnp.float32)
    bn2_beta = jnp.zeros((C,), jnp.float32)

    out = basic_block_forward(x, conv1_w, conv1_b, bn1_gamma, bn1_beta,
                              conv2_w, conv2_b, bn2_gamma, bn2_beta)
    out = jax.block_until_ready(out)

    assert out.shape == (N, C, H, W)
    assert bool(jnp.all(jnp.isfinite(out)))

    # Loose self-check vs. a pure-JAX f32 reference (kernel matmuls are bf16,
    # so ~1e-2 absolute deviation is expected).
    ref = _reference_basic_block(x, conv1_w, conv1_b, bn1_gamma, bn1_beta,
                                 conv2_w, conv2_b, bn2_gamma, bn2_beta)
    max_err = float(jnp.max(jnp.abs(out - ref)))
    assert max_err < 0.1, f"max abs error vs reference: {max_err}"

    print("KERNEL_OK")
</pallas_src>

<mosaic_0001>
module attributes {stable_mosaic.version = 11 : i64} {
  func.func @kernel(%arg0: i32, %arg1: memref<2x16x16x128xbf16, #tpu.memory_space<vmem>>, %arg2: memref<1152x128xbf16, #tpu.memory_space<vmem>>, %arg3: memref<512x128xbf16, #tpu.memory_space<vmem>>, %arg4: memref<1x1x128xf32, #tpu.memory_space<vmem>>, %arg5: memref<1x1x128xf32, #tpu.memory_space<vmem>>) attributes {dimension_semantics = [#tpu.dimension_semantics<parallel>], iteration_bounds = array<i64: 1>, scalar_prefetch = 0 : i64, scratch_operands = 0 : i64, tpu.core_type = #tpu.core_type<tc>, window_params = [{transform_indices = @transform_0, window_bounds = array<i64: 2, 16, 16, 128>}, {pipeline_mode = #tpu.pipeline_mode<synchronous>, transform_indices = @transform_1, window_bounds = array<i64: 1152, 128>}, {transform_indices = @transform_2, window_bounds = array<i64: 512, 128>}, {transform_indices = @transform_3, window_bounds = array<i64: 1, 1, 128>}, {transform_indices = @transform_4, window_bounds = array<i64: 1, 1, 128>}]} {
    %c0 = arith.constant 0 : index
    %c0_0 = arith.constant 0 : index
    %c0_1 = arith.constant 0 : index
    %c0_2 = arith.constant 0 : index
    %0 = vector.load %arg1[%c0, %c0_0, %c0_1, %c0_2] : memref<2x16x16x128xbf16, #tpu.memory_space<vmem>>, vector<2x16x16x128xbf16>
    %1 = arith.extf %0 : vector<2x16x16x128xbf16> to vector<2x16x16x128xf32>
    %cst = arith.constant 0.000000e+00 : f32
    %2 = vector.broadcast %cst : f32 to vector<2x16x8x128xf32>
    %cst_3 = arith.constant 0.000000e+00 : f32
    %3 = vector.broadcast %cst_3 : f32 to vector<2x1x32x128xf32>
    %4 = tpu.concatenate %2, %1, %2 in 2 : vector<2x16x8x128xf32>, vector<2x16x16x128xf32>, vector<2x16x8x128xf32> -> vector<2x16x32x128xf32>
    %5 = tpu.concatenate %3, %4, %3 in 1 : vector<2x1x32x128xf32>, vector<2x16x32x128xf32>, vector<2x1x32x128xf32> -> vector<2x18x32x128xf32>
    %6 = vector.extract_strided_slice %5 {offsets = [0, 0, 7, 0], sizes = [2, 16, 16, 128], strides = [1, 1, 1, 1]} : vector<2x18x32x128xf32> to vector<2x16x16x128xf32>
    %7 = vector.shape_cast %6 : vector<2x16x16x128xf32> to vector<512x128xf32>
    %8 = arith.truncf %7 : vector<512x128xf32> to vector<512x128xbf16>
    %9 = vector.extract_strided_slice %5 {offsets = [0, 0, 8, 0], sizes = [2, 16, 16, 128], strides = [1, 1, 1, 1]} : vector<2x18x32x128xf32> to vector<2x16x16x128xf32>
    %10 = vector.shape_cast %9 : vector<2x16x16x128xf32> to vector<512x128xf32>
    %11 = arith.truncf %10 : vector<512x128xf32> to vector<512x128xbf16>
    %12 = vector.extract_strided_slice %5 {offsets = [0, 0, 9, 0], sizes = [2, 16, 16, 128], strides = [1, 1, 1, 1]} : vector<2x18x32x128xf32> to vector<2x16x16x128xf32>
    %13 = vector.shape_cast %12 : vector<2x16x16x128xf32> to vector<512x128xf32>
    %14 = arith.truncf %13 : vector<512x128xf32> to vector<512x128xbf16>
    %15 = vector.extract_strided_slice %5 {offsets = [0, 1, 7, 0], sizes = [2, 16, 16, 128], strides = [1, 1, 1, 1]} : vector<2x18x32x128xf32> to vector<2x16x16x128xf32>
    %16 = vector.shape_cast %15 : vector<2x16x16x128xf32> to vector<512x128xf32>
    %17 = arith.truncf %16 : vector<512x128xf32> to vector<512x128xbf16>
    %18 = vector.extract_strided_slice %5 {offsets = [0, 1, 8, 0], sizes = [2, 16, 16, 128], strides = [1, 1, 1, 1]} : vector<2x18x32x128xf32> to vector<2x16x16x128xf32>
    %19 = vector.shape_cast %18 : vector<2x16x16x128xf32> to vector<512x128xf32>
    %20 = arith.truncf %19 : vector<512x128xf32> to vector<512x128xbf16>
    %21 = vector.extract_strided_slice %5 {offsets = [0, 1, 9, 0], sizes = [2, 16, 16, 128], strides = [1, 1, 1, 1]} : vector<2x18x32x128xf32> to vector<2x16x16x128xf32>
    %22 = vector.shape_cast %21 : vector<2x16x16x128xf32> to vector<512x128xf32>
    %23 = arith.truncf %22 : vector<512x128xf32> to vector<512x128xbf16>
    %24 = vector.extract_strided_slice %5 {offsets = [0, 2, 7, 0], sizes = [2, 16, 16, 128], strides = [1, 1, 1, 1]} : vector<2x18x32x128xf32> to vector<2x16x16x128xf32>
    %25 = vector.shape_cast %24 : vector<2x16x16x128xf32> to vector<512x128xf32>
    %26 = arith.truncf %25 : vector<512x128xf32> to vector<512x128xbf16>
    %27 = vector.extract_strided_slice %5 {offsets = [0, 2, 8, 0], sizes = [2, 16, 16, 128], strides = [1, 1, 1, 1]} : vector<2x18x32x128xf32> to vector<2x16x16x128xf32>
    %28 = vector.shape_cast %27 : vector<2x16x16x128xf32> to vector<512x128xf32>
    %29 = arith.truncf %28 : vector<512x128xf32> to vector<512x128xbf16>
    %30 = vector.extract_strided_slice %5 {offsets = [0, 2, 9, 0], sizes = [2, 16, 16, 128], strides = [1, 1, 1, 1]} : vector<2x18x32x128xf32> to vector<2x16x16x128xf32>
    %31 = vector.shape_cast %30 : vector<2x16x16x128xf32> to vector<512x128xf32>
    %32 = arith.truncf %31 : vector<512x128xf32> to vector<512x128xbf16>
    %33 = tpu.concatenate %8, %11, %14, %17, %20, %23, %26, %29, %32 in 1 : vector<512x128xbf16>, vector<512x128xbf16>, vector<512x128xbf16>, vector<512x128xbf16>, vector<512x128xbf16>, vector<512x128xbf16>, vector<512x128xbf16>, vector<512x128xbf16>, vector<512x128xbf16> -> vector<512x1152xbf16>
    %c0_4 = arith.constant 0 : index
    %c0_5 = arith.constant 0 : index
    %34 = vector.load %arg2[%c0_4, %c0_5] : memref<1152x128xbf16, #tpu.memory_space<vmem>>, vector<1152x128xbf16>
    %cst_6 = arith.constant dense<0.000000e+00> : vector<512x128xf32>
    %35 = tpu.matmul %33, %34, %cst_6 {dimension_numbers = #tpu.dot_dimension_numbers<[1], [0], [0], [1], [0, 0, 1, 1], [], []>} : vector<512x1152xbf16>, vector<1152x128xbf16>, vector<512x128xf32> -> vector<512x128xf32>
    %cst_7 = arith.constant dense<0.000000e+00> : vector<128xf32>
    %36 = vector.multi_reduction <add>, %35, %cst_7 [0] : vector<512x128xf32> to vector<128xf32>
    %37 = vector.shape_cast %36 : vector<128xf32> to vector<1x128xf32>
    %38 = vector.shape_cast %37 : vector<1x128xf32> to vector<1x1x128xf32>
    %c0_8 = arith.constant 0 : index
    %c0_9 = arith.constant 0 : index
    %c0_10 = arith.constant 0 : index
    %39 = vector.load %arg4[%c0_8, %c0_9, %c0_10] : memref<1x1x128xf32, #tpu.memory_space<vmem>>, vector<1x1x128xf32>
    tpu.vector_store %arg4[%c0_8, %c0_9, %c0_10], %38 {strides = array<i32>} : memref<1x1x128xf32, #tpu.memory_space<vmem>>, vector<1x1x128xf32>,
    %40 = arith.mulf %35, %35 : vector<512x128xf32>
    %cst_11 = arith.constant dense<0.000000e+00> : vector<128xf32>
    %41 = vector.multi_reduction <add>, %40, %cst_11 [0] : vector<512x128xf32> to vector<128xf32>
    %42 = vector.shape_cast %41 : vector<128xf32> to vector<1x128xf32>
    %43 = vector.shape_cast %42 : vector<1x128xf32> to vector<1x1x128xf32>
    %c0_12 = arith.constant 0 : index
    %c0_13 = arith.constant 0 : index
    %c0_14 = arith.constant 0 : index
    %44 = vector.load %arg5[%c0_12, %c0_13, %c0_14] : memref<1x1x128xf32, #tpu.memory_space<vmem>>, vector<1x1x128xf32>
    tpu.vector_store %arg5[%c0_12, %c0_13, %c0_14], %43 {strides = array<i32>} : memref<1x1x128xf32, #tpu.memory_space<vmem>>, vector<1x1x128xf32>,
    %45 = arith.truncf %35 : vector<512x128xf32> to vector<512x128xbf16>
    %c0_15 = arith.constant 0 : index
    %c0_16 = arith.constant 0 : index
    %46 = vector.load %arg3[%c0_15, %c0_16] : memref<512x128xbf16, #tpu.memory_space<vmem>>, vector<512x128xbf16>
    tpu.vector_store %arg3[%c0_15, %c0_16], %45 {strides = array<i32>} : memref<512x128xbf16, #tpu.memory_space<vmem>>, vector<512x128xbf16>,
    return
  }
  func.func @transform_0(%arg0: i32) -> (i32, i32, i32, i32) {
    %c0_i32 = arith.constant 0 : i32
    %c0_i32_0 = arith.constant 0 : i32
    %c0_i32_1 = arith.constant 0 : i32
    %c0_i32_2 = arith.constant 0 : i32
    return %arg0, %c0_i32, %c0_i32_0, %c0_i32_1 : i32, i32, i32, i32
  }
  func.func @transform_1(%arg0: i32) -> (i32, i32) {
    %c0_i32 = arith.constant 0 : i32
    %c0_i32_0 = arith.constant 0 : i32
    %c0_i32_1 = arith.constant 0 : i32
    return %c0_i32, %c0_i32_0 : i32, i32
  }
  func.func @transform_2(%arg0: i32) -> (i32, i32) {
    %c0_i32 = arith.constant 0 : i32
    %c0_i32_0 = arith.constant 0 : i32
    return %arg0, %c0_i32 : i32, i32
  }
  func.func @transform_3(%arg0: i32) -> (i32, i32, i32) {
    %c0_i32 = arith.constant 0 : i32
    %c0_i32_0 = arith.constant 0 : i32
    %c0_i32_1 = arith.constant 0 : i32
    return %arg0, %c0_i32, %c0_i32_0 : i32, i32, i32
  }
  func.func @transform_4(%arg0: i32) -> (i32, i32, i32) {
    %c0_i32 = arith.constant 0 : i32
    %c0_i32_0 = arith.constant 0 : i32
    %c0_i32_1 = arith.constant 0 : i32
    return %arg0, %c0_i32, %c0_i32_0 : i32, i32, i32
  }
}

</mosaic_0001>

<llo_original>
// kernel: tpu_custom_call.1
$region0: #{tpu_custom_call.1}
  #allocation0 [shape = 'u32[]', space=smem, size = 0x4, offset = 0x4, fixed_abs, tag = 'smem constant byte address 0x4 - core index']
  #allocation1 [shape = 'u32[144,128]{1,0:T(1,128)}', space=vmem, size = 0x12000, scoped, tag = 'internal scratch']
  %s0 = inlined_call_operand.hbm [shape: bf16[2,16,16,128], index: 0, kind: input, shape index: {}]
  %s1 = inlined_call_operand.hbm [shape: bf16[1152,128], index: 1, kind: input, shape index: {}]
  %s2 = inlined_call_operand.hbm [shape: bf16[512,128], index: 2, kind: output, shape index: {0}]
  %s3 = inlined_call_operand.hbm [shape: f32[1,1,128], index: 3, kind: output, shape index: {1}]
  %s4 = inlined_call_operand.hbm [shape: f32[1,1,128], index: 4, kind: output, shape index: {2}]
  %5 = xla_tuple %s2, %s3, %s4
  %s6 = sld [smem:[#allocation0]]
  $region42: #{tpu_custom_call.1} parent=0
    _
  %s8 = ssub.s32 1, %s6
  %s9 = scalar_select 0, %s8, %s6
  $region1: #{tpu_custom_call.1} parent=0
    #allocation2 [shape = 'u8[131072]{0}', space=vmem, size = 0x20000, scoped, tag = 'input window, operand 0, single buffered']
    #allocation3 [shape = 's32[1]{0}', space=sflag, size = 0x4, scoped, tag = 'scoped memory for tpu_custom_call.1']
    #allocation4 [shape = 's32[1]{0}', space=sflag, size = 0x4, scoped, tag = 'scoped memory for tpu_custom_call.1']
    #allocation5 [shape = 'u8[294912]{0}', space=vmem, size = 0x48000, scoped, tag = 'input window, operand 1, single buffered']
    #allocation6 [shape = 's32[1]{0}', space=sflag, size = 0x4, scoped, tag = 'scoped memory for tpu_custom_call.1']
    #allocation7 [shape = 'u8[131072]{0}', space=vmem, size = 0x20000, scoped, tag = 'output window, operand 0, single buffered']
    #allocation8 [shape = 'u8[512]{0}', space=vmem, size = 0x400, scoped, tag = 'output window, operand 1, single buffered']
    #allocation9 [shape = 's32[1]{0}', space=sflag, size = 0x4, scoped, tag = 'scoped memory for tpu_custom_call.1']
    #allocation10 [shape = 'u8[512]{0}', space=vmem, size = 0x400, scoped, tag = 'output window, operand 2, single buffered']
    %10 = vsyncpa [#allocation3], 0
    %11 = vsyncpa [#allocation6], 0
    %12 = vsyncpa [#allocation4], 0
    %13 = vsyncpa [#allocation9], 0
    // Predicated region
    $region2: #{tpu_custom_call.1} parent=1 // pred_check
      _
    $region3: #{tpu_custom_call.1} parent=1 // pred_check_branch
      %15 = sbr.rel (0) target = $region5
    $region4: #{tpu_custom_call.1} parent=1 // pred_region
      %s17 = ssub.s32 4096, 4096
      %18 = vsyncadd [#allocation3], %s17
      %s19 = sshll.u32 [#allocation2], 4
      %s20 = int_to_ptr.vmem [resolvable:$true] %s19
      %25 = dma.hbm_to_vmem [thread:$0]  %s0, 4096, %s20, [#allocation3], 64, 64, 4
    $region5: #{tpu_custom_call.1} parent=1 // pred_fallthru
      _
    // Predicated region
    $region6: #{tpu_custom_call.1} parent=1 // pred_check
      _
    $region7: #{tpu_custom_call.1} parent=1 // pred_check_branch
      %27 = sbr.rel (0) target = $region9
    $region8: #{tpu_custom_call.1} parent=1 // pred_region
      %s29 = ssub.s32 9216, 9216
      %30 = vsyncadd [#allocation6], %s29
      %s31 = sshll.u32 [#allocation5], 4
      %s32 = int_to_ptr.vmem [resolvable:$true] %s31
      %37 = dma.hbm_to_vmem [thread:$0]  %s1, 9216, %s32, [#allocation6], 64, 64, 4
    $region9: #{tpu_custom_call.1} parent=1 // pred_fallthru
      _
    // Predicated region
    $region10: #{tpu_custom_call.1} parent=1 // pred_check
      _
    $region11: #{tpu_custom_call.1} parent=1 // pred_check_branch
      %39 = sbr.rel (0) target = $region13
    $region12: #{tpu_custom_call.1} parent=1 // pred_region
      %40 = dma.done [#allocation3], 4096
    $region13: #{tpu_custom_call.1} parent=1 // pred_fallthru
      _
    // Predicated region
    $region14: #{tpu_custom_call.1} parent=1 // pred_check
      _
    $region15: #{tpu_custom_call.1} parent=1 // pred_check_branch
      %42 = sbr.rel (0) target = $region17
    $region16: #{tpu_custom_call.1} parent=1 // pred_region
      %43 = dma.done [#allocation6], 9216
    $region17: #{tpu_custom_call.1} parent=1 // pred_fallthru
      _
    %v45 = vld [vmem:[#allocation2] sm:$0xf]
    %v46 = vld [vmem:[#allocation2 + $0x4] sm:$0xf]
    %v47 = vld [vmem:[#allocation2 + $0x8] sm:$0xf]
    %v48 = vld [vmem:[#allocation2 + $0xc] sm:$0xf]
    %v49 = vld [vmem:[#allocation2 + $0x10] sm:$0xf]
    %v50 = vld [vmem:[#allocation2 + $0x14] sm:$0xf]
    %v51 = vld [vmem:[#allocation2 + $0x18] sm:$0xf]
    %v52 = vld [vmem:[#allocation2 + $0x1c] sm:$0xf]
    %v53 = vld [vmem:[#allocation2 + $0x20] sm:$0xf]
    %v54 = vld [vmem:[#allocation2 + $0x24] sm:$0xf]
    %v55 = vld [vmem:[#allocation2 + $0x28] sm:$0xf]
    %v56 = vld [vmem:[#allocation2 + $0x2c] sm:$0xf]
    %v57 = vld [vmem:[#allocation2 + $0x30] sm:$0xf]
    %v58 = vld [vmem:[#allocation2 + $0x34] sm:$0xf]
    %v59 = vld [vmem:[#allocation2 + $0x38] sm:$0xf]
    %v60 = vld [vmem:[#allocation2 + $0x3c] sm:$0xf]
    %v61 = vld [vmem:[#allocation2 + $0x40] sm:$0xf]
    %v62 = vld [vmem:[#allocation2 + $0x44] sm:$0xf]
    %v63 = vld [vmem:[#allocation2 + $0x48] sm:$0xf]
    %v64 = vld [vmem:[#allocation2 + $0x4c] sm:$0xf]
    %v65 = vld [vmem:[#allocation2 + $0x50] sm:$0xf]
    %v66 = vld [vmem:[#allocation2 + $0x54] sm:$0xf]
    %v67 = vld [vmem:[#allocation2 + $0x58] sm:$0xf]
    %v68 = vld [vmem:[#allocation2 + $0x5c] sm:$0xf]
    %v69 = vld [vmem:[#allocation2 + $0x60] sm:$0xf]
    %v70 = vld [vmem:[#allocation2 + $0x64] sm:$0xf]
    %v71 = vld [vmem:[#allocation2 + $0x68] sm:$0xf]
    %v72 = vld [vmem:[#allocation2 + $0x6c] sm:$0xf]
    %v73 = vld [vmem:[#allocation2 + $0x70] sm:$0xf]
    %v74 = vld [vmem:[#allocation2 + $0x74] sm:$0xf]
    %v75 = vld [vmem:[#allocation2 + $0x78] sm:$0xf]
    %v76 = vld [vmem:[#allocation2 + $0x7c] sm:$0xf]
    %v77 = vld [vmem:[#allocation2 + $0x80] sm:$0xf]
    %v78 = vld [vmem:[#allocation2 + $0x84] sm:$0xf]
    %v79 = vld [vmem:[#allocation2 + $0x88] sm:$0xf]
    %v80 = vld [vmem:[#allocation2 + $0x8c] sm:$0xf]
    %v81 = vld [vmem:[#allocation2 + $0x90] sm:$0xf]
    %v82 = vld [vmem:[#allocation2 + $0x94] sm:$0xf]
    %v83 = vld [vmem:[#allocation2 + $0x98] sm:$0xf]
    %v84 = vld [vmem:[#allocation2 + $0x9c] sm:$0xf]
    %v85 = vld [vmem:[#allocation2 + $0xa0] sm:$0xf]
    %v86 = vld [vmem:[#allocation2 + $0xa4] sm:$0xf]
    %v87 = vld [vmem:[#allocation2 + $0xa8] sm:$0xf]
    %v88 = vld [vmem:[#allocation2 + $0xac] sm:$0xf]
    %v89 = vld [vmem:[#allocation2 + $0xb0] sm:$0xf]
    %v90 = vld [vmem:[#allocation2 + $0xb4] sm:$0xf]
    %v91 = vld [vmem:[#allocation2 + $0xb8] sm:$0xf]
    %v92 = vld [vmem:[#allocation2 + $0xbc] sm:$0xf]
    %v93 = vld [vmem:[#allocation2 + $0xc0] sm:$0xf]
    %v94 = vld [vmem:[#allocation2 + $0xc4] sm:$0xf]
    %v95 = vld [vmem:[#allocation2 + $0xc8] sm:$0xf]
    %v96 = vld [vmem:[#allocation2 + $0xcc] sm:$0xf]
    %v97 = vld [vmem:[#allocation2 + $0xd0] sm:$0xf]
    %v98 = vld [vmem:[#allocation2 + $0xd4] sm:$0xf]
    %v99 = vld [vmem:[#allocation2 + $0xd8] sm:$0xf]
    %v100 = vld [vmem:[#allocation2 + $0xdc] sm:$0xf]
    %v101 = vld [vmem:[#allocation2 + $0xe0] sm:$0xf]
    %v102 = vld [vmem:[#allocation2 + $0xe4] sm:$0xf]
    %v103 = vld [vmem:[#allocation2 + $0xe8] sm:$0xf]
    %v104 = vld [vmem:[#allocation2 + $0xec] sm:$0xf]
    %v105 = vld [vmem:[#allocation2 + $0xf0] sm:$0xf]
    %v106 = vld [vmem:[#allocation2 + $0xf4] sm:$0xf]
    %v107 = vld [vmem:[#allocation2 + $0xf8] sm:$0xf]
    %v108 = vld [vmem:[#allocation2 + $0xfc] sm:$0xf]
    %v109 = vunpack.c.l.bf16 %v45
    %v110 = vunpack.c.l.bf16 %v46
    %v111 = vunpack.c.l.bf16 %v47
    %v112 = vunpack.c.l.bf16 %v48
    %v113 = vunpack.c.l.bf16 %v49
    %v114 = vunpack.c.l.bf16 %v50
    %v115 = vunpack.c.l.bf16 %v51
    %v116 = vunpack.c.l.bf16 %v52
    %v117 = vunpack.c.l.bf16 %v53
    %v118 = vunpack.c.l.bf16 %v54
    %v119 = vunpack.c.l.bf16 %v55
    %v120 = vunpack.c.l.bf16 %v56
    %v121 = vunpack.c.l.bf16 %v57
    %v122 = vunpack.c.l.bf16 %v58
    %v123 = vunpack.c.l.bf16 %v59
    %v124 = vunpack.c.l.bf16 %v60
    %v125 = vunpack.c.l.bf16 %v61
    %v126 = vunpack.c.l.bf16 %v62
    %v127 = vunpack.c.l.bf16 %v63
    %v128 = vunpack.c.l.bf16 %v64
    %v129 = vunpack.c.l.bf16 %v65
    %v130 = vunpack.c.l.bf16 %v66
    %v131 = vunpack.c.l.bf16 %v67
    %v132 = vunpack.c.l.bf16 %v68
    %v133 = vunpack.c.l.bf16 %v69
    %v134 = vunpack.c.l.bf16 %v70
    %v135 = vunpack.c.l.bf16 %v71
    %v136 = vunpack.c.l.bf16 %v72
    %v137 = vunpack.c.l.bf16 %v73
    %v138 = vunpack.c.l.bf16 %v74
    %v139 = vunpack.c.l.bf16 %v75
    %v140 = vunpack.c.l.bf16 %v76
    %v141 = vunpack.c.l.bf16 %v77
    %v142 = vunpack.c.l.bf16 %v78
    %v143 = vunpack.c.l.bf16 %v79
    %v144 = vunpack.c.l.bf16 %v80
    %v145 = vunpack.c.l.bf16 %v81
    %v146 = vunpack.c.l.bf16 %v82
    %v147 = vunpack.c.l.bf16 %v83
    %v148 = vunpack.c.l.bf16 %v84
    %v149 = vunpack.c.l.bf16 %v85
    %v150 = vunpack.c.l.bf16 %v86
    %v151 = vunpack.c.l.bf16 %v87
    %v152 = vunpack.c.l.bf16 %v88
    %v153 = vunpack.c.l.bf16 %v89
    %v154 = vunpack.c.l.bf16 %v90
    %v155 = vunpack.c.l.bf16 %v91
    %v156 = vunpack.c.l.bf16 %v92
    %v157 = vunpack.c.l.bf16 %v93
    %v158 = vunpack.c.l.bf16 %v94
    %v159 = vunpack.c.l.bf16 %v95
    %v160 = vunpack.c.l.bf16 %v96
    %v161 = vunpack.c.l.bf16 %v97
    %v162 = vunpack.c.l.bf16 %v98
    %v163 = vunpack.c.l.bf16 %v99
    %v164 = vunpack.c.l.bf16 %v100
    %v165 = vunpack.c.l.bf16 %v101
    %v166 = vunpack.c.l.bf16 %v102
    %v167 = vunpack.c.l.bf16 %v103
    %v168 = vunpack.c.l.bf16 %v104
    %v169 = vunpack.c.l.bf16 %v105
    %v170 = vunpack.c.l.bf16 %v106
    %v171 = vunpack.c.l.bf16 %v107
    %v172 = vunpack.c.l.bf16 %v108
    %vm234 = vcmask 1040384
    %v235 = vrot.slane 0.0, 7
    %v236 = vsel %vm234, %v235, %v235
    %v237 = vrot.slane %v109, 7
    %v238 = vsel %vm234, %v235, %v237
    %v239 = vrot.slane %v110, 7
    %v240 = vsel %vm234, %v237, %v239
    %v241 = vrot.slane %v111, 7
    %v242 = vsel %vm234, %v235, %v241
    %v243 = vrot.slane %v112, 7
    %v244 = vsel %vm234, %v241, %v243
    %v245 = vrot.slane %v113, 7
    %v246 = vsel %vm234, %v235, %v245
    %v247 = vrot.slane %v114, 7
    %v248 = vsel %vm234, %v245, %v247
    %v249 = vrot.slane %v115, 7
    %v250 = vsel %vm234, %v235, %v249
    %v251 = vrot.slane %v116, 7
    %v252 = vsel %vm234, %v249, %v251
    %v253 = vrot.slane %v117, 7
    %v254 = vsel %vm234, %v235, %v253
    %v255 = vrot.slane %v118, 7
    %v256 = vsel %vm234, %v253, %v255
    %v257 = vrot.slane %v119, 7
    %v258 = vsel %vm234, %v235, %v257
    %v259 = vrot.slane %v120, 7
    %v260 = vsel %vm234, %v257, %v259
    %v261 = vrot.slane %v121, 7
    %v262 = vsel %vm234, %v235, %v261
    %v263 = vrot.slane %v122, 7
    %v264 = vsel %vm234, %v261, %v263
    %v265 = vrot.slane %v123, 7
    %v266 = vsel %vm234, %v235, %v265
    %v267 = vrot.slane %v124, 7
    %v268 = vsel %vm234, %v265, %v267
    %v269 = vrot.slane %v125, 7
    %v270 = vsel %vm234, %v235, %v269
    %v271 = vrot.slane %v126, 7
    %v272 = vsel %vm234, %v269, %v271
    %v273 = vrot.slane %v127, 7
    %v274 = vsel %vm234, %v235, %v273
    %v275 = vrot.slane %v128, 7
    %v276 = vsel %vm234, %v273, %v275
    %v277 = vrot.slane %v129, 7
    %v278 = vsel %vm234, %v235, %v277
    %v279 = vrot.slane %v130, 7
    %v280 = vsel %vm234, %v277, %v279
    %v281 = vrot.slane %v131, 7
    %v282 = vsel %vm234, %v235, %v281
    %v283 = vrot.slane %v132, 7
    %v284 = vsel %vm234, %v281, %v283
    %v285 = vrot.slane %v133, 7
    %v286 = vsel %vm234, %v235, %v285
    %v287 = vrot.slane %v134, 7
    %v288 = vsel %vm234, %v285, %v287
    %v289 = vrot.slane %v135, 7
    %v290 = vsel %vm234, %v235, %v289
    %v291 = vrot.slane %v136, 7
    %v292 = vsel %vm234, %v289, %v291
    %v293 = vrot.slane %v137, 7
    %v294 = vsel %vm234, %v235, %v293
    %v295 = vrot.slane %v138, 7
    %v296 = vsel %vm234, %v293, %v295
    %v297 = vrot.slane %v141, 7
    %v298 = vsel %vm234, %v235, %v297
    %v299 = vrot.slane %v142, 7
    %v300 = vsel %vm234, %v297, %v299
    %v301 = vrot.slane %v143, 7
    %v302 = vsel %vm234, %v235, %v301
    %v303 = vrot.slane %v144, 7
    %v304 = vsel %vm234, %v301, %v303
    %v305 = vrot.slane %v145, 7
    %v306 = vsel %vm234, %v235, %v305
    %v307 = vrot.slane %v146, 7
    %v308 = vsel %vm234, %v305, %v307
    %v309 = vrot.slane %v147, 7
    %v310 = vsel %vm234, %v235, %v309
    %v311 = vrot.slane %v148, 7
    %v312 = vsel %vm234, %v309, %v311
    %v313 = vrot.slane %v149, 7
    %v314 = vsel %vm234, %v235, %v313
    %v315 = vrot.slane %v150, 7
    %v316 = vsel %vm234, %v313, %v315
    %v317 = vrot.slane %v151, 7
    %v318 = vsel %vm234, %v235, %v317
    %v319 = vrot.slane %v152, 7
    %v320 = vsel %vm234, %v317, %v319
    %v321 = vrot.slane %v153, 7
    %v322 = vsel %vm234, %v235, %v321
    %v323 = vrot.slane %v154, 7
    %v324 = vsel %vm234, %v321, %v323
    %v325 = vrot.slane %v155, 7
    %v326 = vsel %vm234, %v235, %v325
    %v327 = vrot.slane %v156, 7
    %v328 = vsel %vm234, %v325, %v327
    %v329 = vrot.slane %v157, 7
    %v330 = vsel %vm234, %v235, %v329
    %v331 = vrot.slane %v158, 7
    %v332 = vsel %vm234, %v329, %v331
    %v333 = vrot.slane %v159, 7
    %v334 = vsel %vm234, %v235, %v333
    %v335 = vrot.slane %v160, 7
    %v336 = vsel %vm234, %v333, %v335
    %v337 = vrot.slane %v161, 7
    %v338 = vsel %vm234, %v235, %v337
    %v339 = vrot.slane %v162, 7
    %v340 = vsel %vm234, %v337, %v339
    %v341 = vrot.slane %v163, 7
    %v342 = vsel %vm234, %v235, %v341
    %v343 = vrot.slane %v164, 7
    %v344 = vsel %vm234, %v341, %v343
    %v345 = vrot.slane %v165, 7
    %v346 = vsel %vm234, %v235, %v345
    %v347 = vrot.slane %v166, 7
    %v348 = vsel %vm234, %v345, %v347
    %v349 = vrot.slane %v167, 7
    %v350 = vsel %vm234, %v235, %v349
    %v351 = vrot.slane %v168, 7
    %v352 = vsel %vm234, %v349, %v351
    %v353 = vrot.slane %v169, 7
    %v354 = vsel %vm234, %v235, %v353
    %v355 = vrot.slane %v170, 7
    %v356 = vsel %vm234, %v353, %v355
    %v418 = vpack.c.bf16 %v236, %v236
    %v419 = vpack.c.bf16 %v240, %v238
    %v420 = vpack.c.bf16 %v244, %v242
    %v421 = vpack.c.bf16 %v248, %v246
    %v422 = vpack.c.bf16 %v252, %v250
    %v423 = vpack.c.bf16 %v256, %v254
    %v424 = vpack.c.bf16 %v260, %v258
    %v425 = vpack.c.bf16 %v264, %v262
    %v426 = vpack.c.bf16 %v268, %v266
    %v427 = vpack.c.bf16 %v272, %v270
    %v428 = vpack.c.bf16 %v276, %v274
    %v429 = vpack.c.bf16 %v280, %v278
    %v430 = vpack.c.bf16 %v284, %v282
    %v431 = vpack.c.bf16 %v288, %v286
    %v432 = vpack.c.bf16 %v292, %v290
    %v433 = vpack.c.bf16 %v296, %v294
    %v434 = vpack.c.bf16 %v300, %v298
    %v435 = vpack.c.bf16 %v304, %v302
    %v436 = vpack.c.bf16 %v308, %v306
    %v437 = vpack.c.bf16 %v312, %v310
    %v438 = vpack.c.bf16 %v316, %v314
    %v439 = vpack.c.bf16 %v320, %v318
    %v440 = vpack.c.bf16 %v324, %v322
    %v441 = vpack.c.bf16 %v328, %v326
    %v442 = vpack.c.bf16 %v332, %v330
    %v443 = vpack.c.bf16 %v336, %v334
    %v444 = vpack.c.bf16 %v340, %v338
    %v445 = vpack.c.bf16 %v344, %v342
    %v446 = vpack.c.bf16 %v348, %v346
    %v447 = vpack.c.bf16 %v352, %v350
    %v448 = vpack.c.bf16 %v356, %v354
    %v449 = vpack.c.bf16 0.0, 0.0
    %v450 = vpack.c.bf16 %v110, %v109
    %v451 = vpack.c.bf16 %v112, %v111
    %v452 = vpack.c.bf16 %v114, %v113
    %v453 = vpack.c.bf16 %v116, %v115
    %v454 = vpack.c.bf16 %v118, %v117
    %v455 = vpack.c.bf16 %v120, %v119
    %v456 = vpack.c.bf16 %v122, %v121
    %v457 = vpack.c.bf16 %v124, %v123
    %v458 = vpack.c.bf16 %v126, %v125
    %v459 = vpack.c.bf16 %v128, %v127
    %v460 = vpack.c.bf16 %v130, %v129
    %v461 = vpack.c.bf16 %v132, %v131
    %v462 = vpack.c.bf16 %v134, %v133
    %v463 = vpack.c.bf16 %v136, %v135
    %v464 = vpack.c.bf16 %v138, %v137
    %v465 = vpack.c.bf16 %v142, %v141
    %v466 = vpack.c.bf16 %v144, %v143
    %v467 = vpack.c.bf16 %v146, %v145
    %v468 = vpack.c.bf16 %v148, %v147
    %v469 = vpack.c.bf16 %v150, %v149
    %v470 = vpack.c.bf16 %v152, %v151
    %v471 = vpack.c.bf16 %v154, %v153
    %v472 = vpack.c.bf16 %v156, %v155
    %v473 = vpack.c.bf16 %v158, %v157
    %v474 = vpack.c.bf16 %v160, %v159
    %v475 = vpack.c.bf16 %v162, %v161
    %v476 = vpack.c.bf16 %v164, %v163
    %v477 = vpack.c.bf16 %v166, %v165
    %v478 = vpack.c.bf16 %v168, %v167
    %v479 = vpack.c.bf16 %v170, %v169
    %vm480 = vcmask 1046528
    %v481 = vrot.slane 0.0, 1
    %v482 = vsel %vm480, %v481, %v481
    %v483 = vrot.slane %v109, 1
    %v484 = vrot.slane %v110, 1
    %v485 = vsel %vm480, %v483, %v484
    %v486 = vsel %vm480, %v484, %v481
    %v487 = vrot.slane %v111, 1
    %v488 = vrot.slane %v112, 1
    %v489 = vsel %vm480, %v487, %v488
    %v490 = vsel %vm480, %v488, %v481
    %v491 = vrot.slane %v113, 1
    %v492 = vrot.slane %v114, 1
    %v493 = vsel %vm480, %v491, %v492
    %v494 = vsel %vm480, %v492, %v481
    %v495 = vrot.slane %v115, 1
    %v496 = vrot.slane %v116, 1
    %v497 = vsel %vm480, %v495, %v496
    %v498 = vsel %vm480, %v496, %v481
    %v499 = vrot.slane %v117, 1
    %v500 = vrot.slane %v118, 1
    %v501 = vsel %vm480, %v499, %v500
    %v502 = vsel %vm480, %v500, %v481
    %v503 = vrot.slane %v119, 1
    %v504 = vrot.slane %v120, 1
    %v505 = vsel %vm480, %v503, %v504
    %v506 = vsel %vm480, %v504, %v481
    %v507 = vrot.slane %v121, 1
    %v508 = vrot.slane %v122, 1
    %v509 = vsel %vm480, %v507, %v508
    %v510 = vsel %vm480, %v508, %v481
    %v511 = vrot.slane %v123, 1
    %v512 = vrot.slane %v124, 1
    %v513 = vsel %vm480, %v511, %v512
    %v514 = vsel %vm480, %v512, %v481
    %v515 = vrot.slane %v125, 1
    %v516 = vrot.slane %v126, 1
    %v517 = vsel %vm480, %v515, %v516
    %v518 = vsel %vm480, %v516, %v481
    %v519 = vrot.slane %v127, 1
    %v520 = vrot.slane %v128, 1
    %v521 = vsel %vm480, %v519, %v520
    %v522 = vsel %vm480, %v520, %v481
    %v523 = vrot.slane %v129, 1
    %v524 = vrot.slane %v130, 1
    %v525 = vsel %vm480, %v523, %v524
    %v526 = vsel %vm480, %v524, %v481
    %v527 = vrot.slane %v131, 1
    %v528 = vrot.slane %v132, 1
    %v529 = vsel %vm480, %v527, %v528
    %v530 = vsel %vm480, %v528, %v481
    %v531 = vrot.slane %v133, 1
    %v532 = vrot.slane %v134, 1
    %v533 = vsel %vm480, %v531, %v532
    %v534 = vsel %vm480, %v532, %v481
    %v535 = vrot.slane %v135, 1
    %v536 = vrot.slane %v136, 1
    %v537 = vsel %vm480, %v535, %v536
    %v538 = vsel %vm480, %v536, %v481
    %v539 = vrot.slane %v137, 1
    %v540 = vrot.slane %v138, 1
    %v541 = vsel %vm480, %v539, %v540
    %v542 = vsel %vm480, %v540, %v481
    %v543 = vrot.slane %v141, 1
    %v544 = vrot.slane %v142, 1
    %v545 = vsel %vm480, %v543, %v544
    %v546 = vsel %vm480, %v544, %v481
    %v547 = vrot.slane %v143, 1
    %v548 = vrot.slane %v144, 1
    %v549 = vsel %vm480, %v547, %v548
    %v550 = vsel %vm480, %v548, %v481
    %v551 = vrot.slane %v145, 1
    %v552 = vrot.slane %v146, 1
    %v553 = vsel %vm480, %v551, %v552
    %v554 = vsel %vm480, %v552, %v481
    %v555 = vrot.slane %v147, 1
    %v556 = vrot.slane %v148, 1
    %v557 = vsel %vm480, %v555, %v556
    %v558 = vsel %vm480, %v556, %v481
    %v559 = vrot.slane %v149, 1
    %v560 = vrot.slane %v150, 1
    %v561 = vsel %vm480, %v559, %v560
    %v562 = vsel %vm480, %v560, %v481
    %v563 = vrot.slane %v151, 1
    %v564 = vrot.slane %v152, 1
    %v565 = vsel %vm480, %v563, %v564
    %v566 = vsel %vm480, %v564, %v481
    %v567 = vrot.slane %v153, 1
    %v568 = vrot.slane %v154, 1
    %v569 = vsel %vm480, %v567, %v568
    %v570 = vsel %vm480, %v568, %v481
    %v571 = vrot.slane %v155, 1
    %v572 = vrot.slane %v156, 1
    %v573 = vsel %vm480, %v571, %v572
    %v574 = vsel %vm480, %v572, %v481
    %v575 = vrot.slane %v157, 1
    %v576 = vrot.slane %v158, 1
    %v577 = vsel %vm480, %v575, %v576
    %v578 = vsel %vm480, %v576, %v481
    %v579 = vrot.slane %v159, 1
    %v580 = vrot.slane %v160, 1
    %v581 = vsel %vm480, %v579, %v580
    %v582 = vsel %vm480, %v580, %v481
    %v583 = vrot.slane %v161, 1
    %v584 = vrot.slane %v162, 1
    %v585 = vsel %vm480, %v583, %v584
    %v586 = vsel %vm480, %v584, %v481
    %v587 = vrot.slane %v163, 1
    %v588 = vrot.slane %v164, 1
    %v589 = vsel %vm480, %v587, %v588
    %v590 = vsel %vm480, %v588, %v481
    %v591 = vrot.slane %v165, 1
    %v592 = vrot.slane %v166, 1
    %v593 = vsel %vm480, %v591, %v592
    %v594 = vsel %vm480, %v592, %v481
    %v595 = vrot.slane %v167, 1
    %v596 = vrot.slane %v168, 1
    %v597 = vsel %vm480, %v595, %v596
    %v598 = vsel %vm480, %v596, %v481
    %v599 = vrot.slane %v169, 1
    %v600 = vrot.slane %v170, 1
    %v601 = vsel %vm480, %v599, %v600
    %v602 = vsel %vm480, %v600, %v481
    %v664 = vpack.c.bf16 %v482, %v482
    %v665 = vpack.c.bf16 %v486, %v485
    %v666 = vpack.c.bf16 %v490, %v489
    %v667 = vpack.c.bf16 %v494, %v493
    %v668 = vpack.c.bf16 %v498, %v497
    %v669 = vpack.c.bf16 %v502, %v501
    %v670 = vpack.c.bf16 %v506, %v505
    %v671 = vpack.c.bf16 %v510, %v509
    %v672 = vpack.c.bf16 %v514, %v513
    %v673 = vpack.c.bf16 %v518, %v517
    %v674 = vpack.c.bf16 %v522, %v521
    %v675 = vpack.c.bf16 %v526, %v525
    %v676 = vpack.c.bf16 %v530, %v529
    %v677 = vpack.c.bf16 %v534, %v533
    %v678 = vpack.c.bf16 %v538, %v537
    %v679 = vpack.c.bf16 %v542, %v541
    %v680 = vpack.c.bf16 %v546, %v545
    %v681 = vpack.c.bf16 %v550, %v549
    %v682 = vpack.c.bf16 %v554, %v553
    %v683 = vpack.c.bf16 %v558, %v557
    %v684 = vpack.c.bf16 %v562, %v561
    %v685 = vpack.c.bf16 %v566, %v565
    %v686 = vpack.c.bf16 %v570, %v569
    %v687 = vpack.c.bf16 %v574, %v573
    %v688 = vpack.c.bf16 %v578, %v577
    %v689 = vpack.c.bf16 %v582, %v581
    %v690 = vpack.c.bf16 %v586, %v585
    %v691 = vpack.c.bf16 %v590, %v589
    %v692 = vpack.c.bf16 %v594, %v593
    %v693 = vpack.c.bf16 %v598, %v597
    %v694 = vpack.c.bf16 %v602, %v601
    %v699 = vrot.slane %v139, 7
    %v700 = vsel %vm234, %v235, %v699
    %v701 = vrot.slane %v140, 7
    %v702 = vsel %vm234, %v699, %v701
    %v703 = vrot.slane %v171, 7
    %v704 = vsel %vm234, %v235, %v703
    %v705 = vrot.slane %v172, 7
    %v706 = vsel %vm234, %v703, %v705
    %v711 = vpack.c.bf16 %v702, %v700
    %v712 = vpack.c.bf16 %v706, %v704
    %v713 = vpack.c.bf16 %v140, %v139
    %v714 = vpack.c.bf16 %v172, %v171
    %v715 = vrot.slane %v139, 1
    %v716 = vrot.slane %v140, 1
    %v717 = vsel %vm480, %v715, %v716
    %v718 = vsel %vm480, %v716, %v481
    %v719 = vrot.slane %v171, 1
    %v720 = vrot.slane %v172, 1
    %v721 = vsel %vm480, %v719, %v720
    %v722 = vsel %vm480, %v720, %v481
    %v727 = vpack.c.bf16 %v718, %v717
    %v728 = vpack.c.bf16 %v722, %v721
    %v729 = vld [vmem:[#allocation5] sm:$0xf]
    %v730 = vld [vmem:[#allocation5 + $0x4] sm:$0xf]
    %v731 = vld [vmem:[#allocation5 + $0x8] sm:$0xf]
    %v732 = vld [vmem:[#allocation5 + $0xc] sm:$0xf]
    %v733 = vld [vmem:[#allocation5 + $0x10] sm:$0xf]
    %v734 = vld [vmem:[#allocation5 + $0x14] sm:$0xf]
    %v735 = vld [vmem:[#allocation5 + $0x18] sm:$0xf]
    %v736 = vld [vmem:[#allocation5 + $0x1c] sm:$0xf]
    %v737 = vld [vmem:[#allocation5 + $0x20] sm:$0xf]
    %v738 = vld [vmem:[#allocation5 + $0x24] sm:$0xf]
    %v739 = vld [vmem:[#allocation5 + $0x28] sm:$0xf]
    %v740 = vld [vmem:[#allocation5 + $0x2c] sm:$0xf]
    %v741 = vld [vmem:[#allocation5 + $0x30] sm:$0xf]
    %v742 = vld [vmem:[#allocation5 + $0x34] sm:$0xf]
    %v743 = vld [vmem:[#allocation5 + $0x38] sm:$0xf]
    %v744 = vld [vmem:[#allocation5 + $0x3c] sm:$0xf]
    %v745 = vld [vmem:[#allocation5 + $0x40] sm:$0xf]
    %v746 = vld [vmem:[#allocation5 + $0x44] sm:$0xf]
    %v747 = vld [vmem:[#allocation5 + $0x48] sm:$0xf]
    %v748 = vld [vmem:[#allocation5 + $0x4c] sm:$0xf]
    %v749 = vld [vmem:[#allocation5 + $0x50] sm:$0xf]
    %v750 = vld [vmem:[#allocation5 + $0x54] sm:$0xf]
    %v751 = vld [vmem:[#allocation5 + $0x58] sm:$0xf]
    %v752 = vld [vmem:[#allocation5 + $0x5c] sm:$0xf]
    %v753 = vld [vmem:[#allocation5 + $0x60] sm:$0xf]
    %v754 = vld [vmem:[#allocation5 + $0x64] sm:$0xf]
    %v755 = vld [vmem:[#allocation5 + $0x68] sm:$0xf]
    %v756 = vld [vmem:[#allocation5 + $0x6c] sm:$0xf]
    %v757 = vld [vmem:[#allocation5 + $0x70] sm:$0xf]
    %v758 = vld [vmem:[#allocation5 + $0x74] sm:$0xf]
    %v759 = vld [vmem:[#allocation5 + $0x78] sm:$0xf]
    %v760 = vld [vmem:[#allocation5 + $0x7c] sm:$0xf]
    %v761 = vld [vmem:[#allocation5 + $0x80] sm:$0xf]
    %v762 = vld [vmem:[#allocation5 + $0x84] sm:$0xf]
    %v763 = vld [vmem:[#allocation5 + $0x88] sm:$0xf]
    %v764 = vld [vmem:[#allocation5 + $0x8c] sm:$0xf]
    %v765 = vld [vmem:[#allocation5 + $0x90] sm:$0xf]
    %v766 = vld [vmem:[#allocation5 + $0x94] sm:$0xf]
    %v767 = vld [vmem:[#allocation5 + $0x98] sm:$0xf]
    %v768 = vld [vmem:[#allocation5 + $0x9c] sm:$0xf]
    %v769 = vld [vmem:[#allocation5 + $0xa0] sm:$0xf]
    %v770 = vld [vmem:[#allocation5 + $0xa4] sm:$0xf]
    %v771 = vld [vmem:[#allocation5 + $0xa8] sm:$0xf]
    %v772 = vld [vmem:[#allocation5 + $0xac] sm:$0xf]
    %v773 = vld [vmem:[#allocation5 + $0xb0] sm:$0xf]
    %v774 = vld [vmem:[#allocation5 + $0xb4] sm:$0xf]
    %v775 = vld [vmem:[#allocation5 + $0xb8] sm:$0xf]
    %v776 = vld [vmem:[#allocation5 + $0xbc] sm:$0xf]
    %v777 = vld [vmem:[#allocation5 + $0xc0] sm:$0xf]
    %v778 = vld [vmem:[#allocation5 + $0xc4] sm:$0xf]
    %v779 = vld [vmem:[#allocation5 + $0xc8] sm:$0xf]
    %v780 = vld [vmem:[#allocation5 + $0xcc] sm:$0xf]
    %v781 = vld [vmem:[#allocation5 + $0xd0] sm:$0xf]
    %v782 = vld [vmem:[#allocation5 + $0xd4] sm:$0xf]
    %v783 = vld [vmem:[#allocation5 + $0xd8] sm:$0xf]
    %v784 = vld [vmem:[#allocation5 + $0xdc] sm:$0xf]
    %v785 = vld [vmem:[#allocation5 + $0xe0] sm:$0xf]
    %v786 = vld [vmem:[#allocation5 + $0xe4] sm:$0xf]
    %v787 = vld [vmem:[#allocation5 + $0xe8] sm:$0xf]
    %v788 = vld [vmem:[#allocation5 + $0xec] sm:$0xf]
    %v789 = vld [vmem:[#allocation5 + $0xf0] sm:$0xf]
    %v790 = vld [vmem:[#allocation5 + $0xf4] sm:$0xf]
    %v791 = vld [vmem:[#allocation5 + $0xf8] sm:$0xf]
    %v792 = vld [vmem:[#allocation5 + $0xfc] sm:$0xf]
    %v793 = vld [vmem:[#allocation5 + $0x100] sm:$0xf]
    %v794 = vld [vmem:[#allocation5 + $0x104] sm:$0xf]
    %v795 = vld [vmem:[#allocation5 + $0x108] sm:$0xf]
    %v796 = vld [vmem:[#allocation5 + $0x10c] sm:$0xf]
    %v797 = vld [vmem:[#allocation5 + $0x110] sm:$0xf]
    %v798 = vld [vmem:[#allocation5 + $0x114] sm:$0xf]
    %v799 = vld [vmem:[#allocation5 + $0x118] sm:$0xf]
    %v800 = vld [vmem:[#allocation5 + $0x11c] sm:$0xf]
    %v801 = vld [vmem:[#allocation5 + $0x120] sm:$0xf]
    %v802 = vld [vmem:[#allocation5 + $0x124] sm:$0xf]
    %v803 = vld [vmem:[#allocation5 + $0x128] sm:$0xf]
    %v804 = vld [vmem:[#allocation5 + $0x12c] sm:$0xf]
    %v805 = vld [vmem:[#allocation5 + $0x130] sm:$0xf]
    %v806 = vld [vmem:[#allocation5 + $0x134] sm:$0xf]
    %v807 = vld [vmem:[#allocation5 + $0x138] sm:$0xf]
    %v808 = vld [vmem:[#allocation5 + $0x13c] sm:$0xf]
    %v809 = vld [vmem:[#allocation5 + $0x140] sm:$0xf]
    %v810 = vld [vmem:[#allocation5 + $0x144] sm:$0xf]
    %v811 = vld [vmem:[#allocation5 + $0x148] sm:$0xf]
    %v812 = vld [vmem:[#allocation5 + $0x14c] sm:$0xf]
    %v813 = vld [vmem:[#allocation5 + $0x150] sm:$0xf]
    %v814 = vld [vmem:[#allocation5 + $0x154] sm:$0xf]
    %v815 = vld [vmem:[#allocation5 + $0x158] sm:$0xf]
    %v816 = vld [vmem:[#allocation5 + $0x15c] sm:$0xf]
    %v817 = vld [vmem:[#allocation5 + $0x160] sm:$0xf]
    %v818 = vld [vmem:[#allocation5 + $0x164] sm:$0xf]
    %v819 = vld [vmem:[#allocation5 + $0x168] sm:$0xf]
    %v820 = vld [vmem:[#allocation5 + $0x16c] sm:$0xf]
    %v821 = vld [vmem:[#allocation5 + $0x170] sm:$0xf]
    %v822 = vld [vmem:[#allocation5 + $0x174] sm:$0xf]
    %v823 = vld [vmem:[#allocation5 + $0x178] sm:$0xf]
    %v824 = vld [vmem:[#allocation5 + $0x17c] sm:$0xf]
    %v825 = vld [vmem:[#allocation5 + $0x180] sm:$0xf]
    %v826 = vld [vmem:[#allocation5 + $0x184] sm:$0xf]
    %v827 = vld [vmem:[#allocation5 + $0x188] sm:$0xf]
    %v828 = vld [vmem:[#allocation5 + $0x18c] sm:$0xf]
    %v829 = vld [vmem:[#allocation5 + $0x190] sm:$0xf]
    %v830 = vld [vmem:[#allocation5 + $0x194] sm:$0xf]
    %v831 = vld [vmem:[#allocation5 + $0x198] sm:$0xf]
    %v832 = vld [vmem:[#allocation5 + $0x19c] sm:$0xf]
    %v833 = vld [vmem:[#allocation5 + $0x1a0] sm:$0xf]
    %v834 = vld [vmem:[#allocation5 + $0x1a4] sm:$0xf]
    %v835 = vld [vmem:[#allocation5 + $0x1a8] sm:$0xf]
    %v836 = vld [vmem:[#allocation5 + $0x1ac] sm:$0xf]
    %v837 = vld [vmem:[#allocation5 + $0x1b0] sm:$0xf]
    %v838 = vld [vmem:[#allocation5 + $0x1b4] sm:$0xf]
    %v839 = vld [vmem:[#allocation5 + $0x1b8] sm:$0xf]
    %v840 = vld [vmem:[#allocation5 + $0x1bc] sm:$0xf]
    %v841 = vld [vmem:[#allocation5 + $0x1c0] sm:$0xf]
    %v842 = vld [vmem:[#allocation5 + $0x1c4] sm:$0xf]
    %v843 = vld [vmem:[#allocation5 + $0x1c8] sm:$0xf]
    %v844 = vld [vmem:[#allocation5 + $0x1cc] sm:$0xf]
    %v845 = vld [vmem:[#allocation5 + $0x1d0] sm:$0xf]
    %v846 = vld [vmem:[#allocation5 + $0x1d4] sm:$0xf]
    %v847 = vld [vmem:[#allocation5 + $0x1d8] sm:$0xf]
    %v848 = vld [vmem:[#allocation5 + $0x1dc] sm:$0xf]
    %v849 = vld [vmem:[#allocation5 + $0x1e0] sm:$0xf]
    %v850 = vld [vmem:[#allocation5 + $0x1e4] sm:$0xf]
    %v851 = vld [vmem:[#allocation5 + $0x1e8] sm:$0xf]
    %v852 = vld [vmem:[#allocation5 + $0x1ec] sm:$0xf]
    %v853 = vld [vmem:[#allocation5 + $0x1f0] sm:$0xf]
    %v854 = vld [vmem:[#allocation5 + $0x1f4] sm:$0xf]
    %v855 = vld [vmem:[#allocation5 + $0x1f8] sm:$0xf]
    %v856 = vld [vmem:[#allocation5 + $0x1fc] sm:$0xf]
    %v857 = vld [vmem:[#allocation5 + $0x200] sm:$0xf]
    %v858 = vld [vmem:[#allocation5 + $0x204] sm:$0xf]
    %v859 = vld [vmem:[#allocation5 + $0x208] sm:$0xf]
    %v860 = vld [vmem:[#allocation5 + $0x20c] sm:$0xf]
    %v861 = vld [vmem:[#allocation5 + $0x210] sm:$0xf]
    %v862 = vld [vmem:[#allocation5 + $0x214] sm:$0xf]
    %v863 = vld [vmem:[#allocation5 + $0x218] sm:$0xf]
    %v864 = vld [vmem:[#allocation5 + $0x21c] sm:$0xf]
    %v865 = vld [vmem:[#allocation5 + $0x220] sm:$0xf]
    %v866 = vld [vmem:[#allocation5 + $0x224] sm:$0xf]
    %v867 = vld [vmem:[#allocation5 + $0x228] sm:$0xf]
    %v868 = vld [vmem:[#allocation5 + $0x22c] sm:$0xf]
    %v869 = vld [vmem:[#allocation5 + $0x230] sm:$0xf]
    %v870 = vld [vmem:[#allocation5 + $0x234] sm:$0xf]
    %v871 = vld [vmem:[#allocation5 + $0x238] sm:$0xf]
    %v872 = vld [vmem:[#allocation5 + $0x23c] sm:$0xf]
    %v1017 = vunpack.c.l.b16 %v729
    %v1018 = vunpack.c.l.b16 %v730
    %v1019 = vunpack.c.l.b16 %v731
    %v1020 = vunpack.c.l.b16 %v732
    %v1021 = vunpack.c.l.b16 %v733
    %v1022 = vunpack.c.l.b16 %v734
    %v1023 = vunpack.c.l.b16 %v735
    %v1024 = vunpack.c.l.b16 %v736
    %v1025 = vunpack.c.l.b16 %v737
    %v1026 = vunpack.c.l.b16 %v738
    %v1027 = vunpack.c.l.b16 %v739
    %v1028 = vunpack.c.l.b16 %v740
    %v1029 = vunpack.c.l.b16 %v741
    %v1030 = vunpack.c.l.b16 %v742
    %v1031 = vunpack.c.l.b16 %v743
    %v1032 = vunpack.c.l.b16 %v744
    %v1033 = vunpack.c.l.b16 %v745
    %v1034 = vunpack.c.l.b16 %v746
    %v1035 = vunpack.c.l.b16 %v747
    %v1036 = vunpack.c.l.b16 %v748
    %v1037 = vunpack.c.l.b16 %v749
    %v1038 = vunpack.c.l.b16 %v750
    %v1039 = vunpack.c.l.b16 %v751
    %v1040 = vunpack.c.l.b16 %v752
    %v1041 = vunpack.c.l.b16 %v753
    %v1042 = vunpack.c.l.b16 %v754
    %v1043 = vunpack.c.l.b16 %v755
    %v1044 = vunpack.c.l.b16 %v756
    %v1045 = vunpack.c.l.b16 %v757
    %v1046 = vunpack.c.l.b16 %v758
    %v1047 = vunpack.c.l.b16 %v759
    %v1048 = vunpack.c.l.b16 %v760
    %v1049 = vunpack.c.l.b16 %v761
    %v1050 = vunpack.c.l.b16 %v762
    %v1051 = vunpack.c.l.b16 %v763
    %v1052 = vunpack.c.l.b16 %v764
    %v1053 = vunpack.c.l.b16 %v765
    %v1054 = vunpack.c.l.b16 %v766
    %v1055 = vunpack.c.l.b16 %v767
    %v1056 = vunpack.c.l.b16 %v768
    %v1057 = vunpack.c.l.b16 %v769
    %v1058 = vunpack.c.l.b16 %v770
    %v1059 = vunpack.c.l.b16 %v771
    %v1060 = vunpack.c.l.b16 %v772
    %v1061 = vunpack.c.l.b16 %v773
    %v1062 = vunpack.c.l.b16 %v774
    %v1063 = vunpack.c.l.b16 %v775
    %v1064 = vunpack.c.l.b16 %v776
    %v1065 = vunpack.c.l.b16 %v777
    %v1066 = vunpack.c.l.b16 %v778
    %v1067 = vunpack.c.l.b16 %v779
    %v1068 = vunpack.c.l.b16 %v780
    %v1069 = vunpack.c.l.b16 %v781
    %v1070 = vunpack.c.l.b16 %v782
    %v1071 = vunpack.c.l.b16 %v783
    %v1072 = vunpack.c.l.b16 %v784
    %v1073 = vunpack.c.l.b16 %v785
    %v1074 = vunpack.c.l.b16 %v786
    %v1075 = vunpack.c.l.b16 %v787
    %v1076 = vunpack.c.l.b16 %v788
    %v1077 = vunpack.c.l.b16 %v789
    %v1078 = vunpack.c.l.b16 %v790
    %v1079 = vunpack.c.l.b16 %v791
    %v1080 = vunpack.c.l.b16 %v792
    %v1081 = vunpack.c.l.b16 %v793
    %v1082 = vunpack.c.l.b16 %v794
    %v1083 = vunpack.c.l.b16 %v795
    %v1084 = vunpack.c.l.b16 %v796
    %v1085 = vunpack.c.l.b16 %v797
    %v1086 = vunpack.c.l.b16 %v798
    %v1087 = vunpack.c.l.b16 %v799
    %v1088 = vunpack.c.l.b16 %v800
    %v1089 = vunpack.c.l.b16 %v801
    %v1090 = vunpack.c.l.b16 %v802
    %v1091 = vunpack.c.l.b16 %v803
    %v1092 = vunpack.c.l.b16 %v804
    %v1093 = vunpack.c.l.b16 %v805
    %v1094 = vunpack.c.l.b16 %v806
    %v1095 = vunpack.c.l.b16 %v807
    %v1096 = vunpack.c.l.b16 %v808
    %v1097 = vunpack.c.l.b16 %v809
    %v1098 = vunpack.c.l.b16 %v810
    %v1099 = vunpack.c.l.b16 %v811
    %v1100 = vunpack.c.l.b16 %v812
    %v1101 = vunpack.c.l.b16 %v813
    %v1102 = vunpack.c.l.b16 %v814
    %v1103 = vunpack.c.l.b16 %v815
    %v1104 = vunpack.c.l.b16 %v816
    %v1105 = vunpack.c.l.b16 %v817
    %v1106 = vunpack.c.l.b16 %v818
    %v1107 = vunpack.c.l.b16 %v819
    %v1108 = vunpack.c.l.b16 %v820
    %v1109 = vunpack.c.l.b16 %v821
    %v1110 = vunpack.c.l.b16 %v822
    %v1111 = vunpack.c.l.b16 %v823
    %v1112 = vunpack.c.l.b16 %v824
    %v1113 = vunpack.c.l.b16 %v825
    %v1114 = vunpack.c.l.b16 %v826
    %v1115 = vunpack.c.l.b16 %v827
    %v1116 = vunpack.c.l.b16 %v828
    %v1117 = vunpack.c.l.b16 %v829
    %v1118 = vunpack.c.l.b16 %v830
    %v1119 = vunpack.c.l.b16 %v831
    %v1120 = vunpack.c.l.b16 %v832
    %v1121 = vunpack.c.l.b16 %v833
    %v1122 = vunpack.c.l.b16 %v834
    %v1123 = vunpack.c.l.b16 %v835
    %v1124 = vunpack.c.l.b16 %v836
    %v1125 = vunpack.c.l.b16 %v837
    %v1126 = vunpack.c.l.b16 %v838
    %v1127 = vunpack.c.l.b16 %v839
    %v1128 = vunpack.c.l.b16 %v840
    %v1129 = vunpack.c.l.b16 %v841
    %v1130 = vunpack.c.l.b16 %v842
    %v1131 = vunpack.c.l.b16 %v843
    %v1132 = vunpack.c.l.b16 %v844
    %v1133 = vunpack.c.l.b16 %v845
    %v1134 = vunpack.c.l.b16 %v846
    %v1135 = vunpack.c.l.b16 %v847
    %v1136 = vunpack.c.l.b16 %v848
    %v1137 = vunpack.c.l.b16 %v849
    %v1138 = vunpack.c.l.b16 %v850
    %v1139 = vunpack.c.l.b16 %v851
    %v1140 = vunpack.c.l.b16 %v852
    %v1141 = vunpack.c.l.b16 %v853
    %v1142 = vunpack.c.l.b16 %v854
    %v1143 = vunpack.c.l.b16 %v855
    %v1144 = vunpack.c.l.b16 %v856
    %v1145 = vunpack.c.l.b16 %v857
    %v1146 = vunpack.c.l.b16 %v858
    %v1147 = vunpack.c.l.b16 %v859
    %v1148 = vunpack.c.l.b16 %v860
    %v1149 = vunpack.c.l.b16 %v861
    %v1150 = vunpack.c.l.b16 %v862
    %v1151 = vunpack.c.l.b16 %v863
    %v1152 = vunpack.c.l.b16 %v864
    %v1153 = vunpack.c.l.b16 %v865
    %v1154 = vunpack.c.l.b16 %v866
    %v1155 = vunpack.c.l.b16 %v867
    %v1156 = vunpack.c.l.b16 %v868
    %v1157 = vunpack.c.l.b16 %v869
    %v1158 = vunpack.c.l.b16 %v870
    %v1159 = vunpack.c.l.b16 %v871
    %v1160 = vunpack.c.l.b16 %v872
    %v1161 = vpack.c.b16 %v1018, %v1017
    %v1162 = vpack.c.b16 %v1020, %v1019
    %v1163 = vpack.c.b16 %v1022, %v1021
    %v1164 = vpack.c.b16 %v1024, %v1023
    %v1165 = vpack.c.b16 %v1026, %v1025
    %v1166 = vpack.c.b16 %v1028, %v1027
    %v1167 = vpack.c.b16 %v1030, %v1029
    %v1168 = vpack.c.b16 %v1032, %v1031
    %v1169 = vpack.c.b16 %v1034, %v1033
    %v1170 = vpack.c.b16 %v1036, %v1035
    %v1171 = vpack.c.b16 %v1038, %v1037
    %v1172 = vpack.c.b16 %v1040, %v1039
    %v1173 = vpack.c.b16 %v1042, %v1041
    %v1174 = vpack.c.b16 %v1044, %v1043
    %v1175 = vpack.c.b16 %v1046, %v1045
    %v1176 = vpack.c.b16 %v1048, %v1047
    %v1177 = vpack.c.b16 %v1050, %v1049
    %v1178 = vpack.c.b16 %v1052, %v1051
    %v1179 = vpack.c.b16 %v1054, %v1053
    %v1180 = vpack.c.b16 %v1056, %v1055
    %v1181 = vpack.c.b16 %v1058, %v1057
    %v1182 = vpack.c.b16 %v1060, %v1059
    %v1183 = vpack.c.b16 %v1062, %v1061
    %v1184 = vpack.c.b16 %v1064, %v1063
    %v1185 = vpack.c.b16 %v1066, %v1065
    %v1186 = vpack.c.b16 %v1068, %v1067
    %v1187 = vpack.c.b16 %v1070, %v1069
    %v1188 = vpack.c.b16 %v1072, %v1071
    %v1189 = vpack.c.b16 %v1074, %v1073
    %v1190 = vpack.c.b16 %v1076, %v1075
    %v1191 = vpack.c.b16 %v1078, %v1077
    %v1192 = vpack.c.b16 %v1080, %v1079
    %v1193 = vpack.c.b16 %v1082, %v1081
    %v1194 = vpack.c.b16 %v1084, %v1083
    %v1195 = vpack.c.b16 %v1086, %v1085
    %v1196 = vpack.c.b16 %v1088, %v1087
    %v1197 = vpack.c.b16 %v1090, %v1089
    %v1198 = vpack.c.b16 %v1092, %v1091
    %v1199 = vpack.c.b16 %v1094, %v1093
    %v1200 = vpack.c.b16 %v1096, %v1095
    %v1201 = vpack.c.b16 %v1098, %v1097
    %v1202 = vpack.c.b16 %v1100, %v1099
    %v1203 = vpack.c.b16 %v1102, %v1101
    %v1204 = vpack.c.b16 %v1104, %v1103
    %v1205 = vpack.c.b16 %v1106, %v1105
    %v1206 = vpack.c.b16 %v1108, %v1107
    %v1207 = vpack.c.b16 %v1110, %v1109
    %v1208 = vpack.c.b16 %v1112, %v1111
    %v1209 = vpack.c.b16 %v1114, %v1113
    %v1210 = vpack.c.b16 %v1116, %v1115
    %v1211 = vpack.c.b16 %v1118, %v1117
    %v1212 = vpack.c.b16 %v1120, %v1119
    %v1213 = vpack.c.b16 %v1122, %v1121
    %v1214 = vpack.c.b16 %v1124, %v1123
    %v1215 = vpack.c.b16 %v1126, %v1125
    %v1216 = vpack.c.b16 %v1128, %v1127
    %v1217 = vpack.c.b16 %v1130, %v1129
    %v1218 = vpack.c.b16 %v1132, %v1131
    %v1219 = vpack.c.b16 %v1134, %v1133
    %v1220 = vpack.c.b16 %v1136, %v1135
    %v1221 = vpack.c.b16 %v1138, %v1137
    %v1222 = vpack.c.b16 %v1140, %v1139
    %v1223 = vpack.c.b16 %v1142, %v1141
    %v1224 = vpack.c.b16 %v1144, %v1143
    %v1225 = vpack.c.b16 %v1146, %v1145
    %v1226 = vpack.c.b16 %v1148, %v1147
    %v1227 = vpack.c.b16 %v1150, %v1149
    %v1228 = vpack.c.b16 %v1152, %v1151
    %v1229 = vpack.c.b16 %v1154, %v1153
    %v1230 = vpack.c.b16 %v1156, %v1155
    %v1231 = vpack.c.b16 %v1158, %v1157
    %v1232 = vpack.c.b16 %v1160, %v1159
    %1305 = vmatprep.subr.bf16.mxu0 0
    %1306 = vmatpush1.bf16.msra.mxu0 %v1161
    %1307 = vmatprep.subr.bf16.mxu0 0
    %1308 = vmatpush1.bf16.msra.mxu0 %v1162
    %1309 = vmatprep.subr.bf16.mxu0 0
    %1310 = vmatpush1.bf16.msra.mxu0 %v1163
    %1311 = vmatprep.subr.bf16.mxu0 0
    %1312 = vmatpush1.bf16.msra.mxu0 %v1164
    %1313 = vmatprep.subr.bf16.mxu0 0
    %1314 = vmatpush1.bf16.msra.mxu0 %v1165
    %1315 = vmatprep.subr.bf16.mxu0 0
    %1316 = vmatpush1.bf16.msra.mxu0 %v1166
    %1317 = vmatprep.subr.bf16.mxu0 0
    %1318 = vmatpush1.bf16.msra.mxu0 %v1167
    %1319 = vmatprep.subr.bf16.mxu0 0
    %1320 = vmatpush1.bf16.msra.mxu0 %v1168
    %1321 = vmatprep.subr.bf16.mxu0 0
    %1322 = vmatpush1.bf16.msra.mxu0 %v1169
    %1323 = vmatprep.subr.bf16.mxu0 0
    %1324 = vmatpush1.bf16.msra.mxu0 %v1170
    %1325 = vmatprep.subr.bf16.mxu0 0
    %1326 = vmatpush1.bf16.msra.mxu0 %v1171
    %1327 = vmatprep.subr.bf16.mxu0 0
    %1328 = vmatpush1.bf16.msra.mxu0 %v1172
    %1329 = vmatprep.subr.bf16.mxu0 0
    %1330 = vmatpush1.bf16.msra.mxu0 %v1173
    %1331 = vmatprep.subr.bf16.mxu0 0
    %1332 = vmatpush1.bf16.msra.mxu0 %v1174
    %1333 = vmatprep.subr.bf16.mxu0 0
    %1334 = vmatpush1.bf16.msra.mxu0 %v1175
    %1335 = vmatprep.subr.bf16.mxu0 0
    %1336 = vmatpush1.bf16.msra.mxu0 %v1176
    %1337 = vmatprep.mubr.bf16.mxu0 %v449
    %1338 = vmatmul.mubr.bf16.gmra.mrb[0].mxu0 %v418
    %v1339 = vpop.f32.mrb[0].mxu0
    %v1340 = vadd.f32 0.0, %v1339
    %v1341 = vpop.f32.mrb[0].mxu0
    %v1342 = vpop.f32.mrb[0].mxu0
    %v1343 = vadd.f32 0.0, %v1342
    %v1344 = vpop.f32.mrb[0].mxu0
    %1345 = vmatprep.mubr.bf16.mxu0 %v450
    %1346 = vmatmul.mubr.bf16.gmra.mrb[0].mxu0 %v419
    %v1347 = vpop.f32.mrb[0].mxu0
    %v1348 = vadd.f32 0.0, %v1347
    %v1349 = vpop.f32.mrb[0].mxu0
    %v1350 = vpop.f32.mrb[0].mxu0
    %v1351 = vadd.f32 0.0, %v1350
    %v1352 = vpop.f32.mrb[0].mxu0
    %1353 = vmatprep.mubr.bf16.mxu0 %v451
    %1354 = vmatmul.mubr.bf16.gmra.mrb[0].mxu0 %v420
    %v1355 = vpop.f32.mrb[0].mxu0
    %v1356 = vadd.f32 0.0, %v1355
    %v1357 = vpop.f32.mrb[0].mxu0
    %v1358 = vpop.f32.mrb[0].mxu0
    %v1359 = vadd.f32 0.0, %v1358
    %v1360 = vpop.f32.mrb[0].mxu0
    %1361 = vmatprep.mubr.bf16.mxu0 %v452
    %1362 = vmatmul.mubr.bf16.gmra.mrb[0].mxu0 %v421
    %v1363 = vpop.f32.mrb[0].mxu0
    %v1364 = vadd.f32 0.0, %v1363
    %v1365 = vpop.f32.mrb[0].mxu0
    %v1366 = vpop.f32.mrb[0].mxu0
    %v1367 = vadd.f32 0.0, %v1366
    %v1368 = vpop.f32.mrb[0].mxu0
    %1369 = vmatprep.mubr.bf16.mxu0 %v453
    %1370 = vmatmul.mubr.bf16.gmra.mrb[0].mxu0 %v422
    %v1371 = vpop.f32.mrb[0].mxu0
    %v1372 = vadd.f32 0.0, %v1371
    %v1373 = vpop.f32.mrb[0].mxu0
    %v1374 = vpop.f32.mrb[0].mxu0
    %v1375 = vadd.f32 0.0, %v1374
    %v1376 = vpop.f32.mrb[0].mxu0
    %1377 = vmatprep.mubr.bf16.mxu0 %v454
    %1378 = vmatmul.mubr.bf16.gmra.mrb[0].mxu0 %v423
    %v1379 = vpop.f32.mrb[0].mxu0
    %v1380 = vadd.f32 0.0, %v1379
    %v1381 = vpop.f32.mrb[0].mxu0
    %v1382 = vpop.f32.mrb[0].mxu0
    %v1383 = vadd.f32 0.0, %v1382
    %v1384 = vpop.f32.mrb[0].mxu0
    %1385 = vmatprep.mubr.bf16.mxu0 %v455
    %1386 = vmatmul.mubr.bf16.gmra.mrb[0].mxu0 %v424
    %v1387 = vpop.f32.mrb[0].mxu0
    %v1388 = vadd.f32 0.0, %v1387
    %v1389 = vpop.f32.mrb[0].mxu0
    %v1390 = vpop.f32.mrb[0].mxu0
    %v1391 = vadd.f32 0.0, %v1390
    %v1392 = vpop.f32.mrb[0].mxu0
    %1393 = vmatprep.mubr.bf16.mxu0 %v456
    %1394 = vmatmul.mubr.bf16.gmra.mrb[0].mxu0 %v425
    %v1395 = vpop.f32.mrb[0].mxu0
    %v1396 = vadd.f32 0.0, %v1395
    %v1397 = vpop.f32.mrb[0].mxu0
    %v1398 = vpop.f32.mrb[0].mxu0
    %v1399 = vadd.f32 0.0, %v1398
    %v1400 = vpop.f32.mrb[0].mxu0
    %1401 = vmatprep.mubr.bf16.mxu0 %v457
    %1402 = vmatmul.mubr.bf16.gmra.mrb[0].mxu0 %v426
    %v1403 = vpop.f32.mrb[0].mxu0
    %v1404 = vadd.f32 0.0, %v1403
    %v1405 = vpop.f32.mrb[0].mxu0
    %v1406 = vpop.f32.mrb[0].mxu0
    %v1407 = vadd.f32 0.0, %v1406
    %v1408 = vpop.f32.mrb[0].mxu0
    %1409 = vmatprep.mubr.bf16.mxu0 %v458
    %1410 = vmatmul.mubr.bf16.gmra.mrb[0].mxu0 %v427
    %v1411 = vpop.f32.mrb[0].mxu0
    %v1412 = vadd.f32 0.0, %v1411
    %v1413 = vpop.f32.mrb[0].mxu0
    %v1414 = vpop.f32.mrb[0].mxu0
    %v1415 = vadd.f32 0.0, %v1414
    %v1416 = vpop.f32.mrb[0].mxu0
    %1417 = vmatprep.mubr.bf16.mxu0 %v459
    %1418 = vmatmul.mubr.bf16.gmra.mrb[0].mxu0 %v428
    %v1419 = vpop.f32.mrb[0].mxu0
    %v1420 = vadd.f32 0.0, %v1419
    %v1421 = vpop.f32.mrb[0].mxu0
    %v1422 = vpop.f32.mrb[0].mxu0
    %v1423 = vadd.f32 0.0, %v1422
    %v1424 = vpop.f32.mrb[0].mxu0
    %1425 = vmatprep.mubr.bf16.mxu0 %v460
    %1426 = vmatmul.mubr.bf16.gmra.mrb[0].mxu0 %v429
    %v1427 = vpop.f32.mrb[0].mxu0
    %v1428 = vadd.f32 0.0, %v1427
    %v1429 = vpop.f32.mrb[0].mxu0
    %v1430 = vpop.f32.mrb[0].mxu0
    %v1431 = vadd.f32 0.0, %v1430
    %v1432 = vpop.f32.mrb[0].mxu0
    %1433 = vmatprep.mubr.bf16.mxu0 %v461
    %1434 = vmatmul.mubr.bf16.gmra.mrb[0].mxu0 %v430
    %v1435 = vpop.f32.mrb[0].mxu0
    %v1436 = vadd.f32 0.0, %v1435
    %v1437 = vpop.f32.mrb[0].mxu0
    %v1438 = vpop.f32.mrb[0].mxu0
    %v1439 = vadd.f32 0.0, %v1438
    %v1440 = vpop.f32.mrb[0].mxu0
    %1441 = vmatprep.mubr.bf16.mxu0 %v462
    %1442 = vmatmul.mubr.bf16.gmra.mrb[0].mxu0 %v431
    %v1443 = vpop.f32.mrb[0].mxu0
    %v1444 = vadd.f32 0.0, %v1443
    %v1445 = vpop.f32.mrb[0].mxu0
    %v1446 = vpop.f32.mrb[0].mxu0
    %v1447 = vadd.f32 0.0, %v1446
    %v1448 = vpop.f32.mrb[0].mxu0
    %1449 = vmatprep.mubr.bf16.mxu0 %v463
    %1450 = vmatmul.mubr.bf16.gmra.mrb[0].mxu0 %v432
    %v1451 = vpop.f32.mrb[0].mxu0
    %v1452 = vadd.f32 0.0, %v1451
    %v1453 = vpop.f32.mrb[0].mxu0
    %v1454 = vpop.f32.mrb[0].mxu0
    %v1455 = vadd.f32 0.0, %v1454
    %v1456 = vpop.f32.mrb[0].mxu0
    %1457 = vmatprep.mubr.bf16.mxu0 %v464
    %1458 = vmatmul.mubr.bf16.gmra.mrb[0].mxu0 %v433
    %v1459 = vpop.f32.mrb[0].mxu0
    %v1460 = vadd.f32 0.0, %v1459
    %v1461 = vpop.f32.mrb[0].mxu0
    %v1462 = vpop.f32.mrb[0].mxu0
    %v1463 = vadd.f32 0.0, %v1462
    %v1464 = vpop.f32.mrb[0].mxu0
    %1465 = vmatprep.mubr.bf16.mxu0 %v449
    %1466 = vmatmul.mubr.bf16.gmra.mrb[0].mxu0 %v418
    %v1467 = vpop.f32.mrb[0].mxu0
    %v1468 = vadd.f32 0.0, %v1467
    %v1469 = vpop.f32.mrb[0].mxu0
    %v1470 = vpop.f32.mrb[0].mxu0
    %v1471 = vadd.f32 0.0, %v1470
    %v1472 = vpop.f32.mrb[0].mxu0
    %1473 = vmatprep.mubr.bf16.mxu0 %v465
    %1474 = vmatmul.mubr.bf16.gmra.mrb[0].mxu0 %v434
    %v1475 = vpop.f32.mrb[0].mxu0
    %v1476 = vadd.f32 0.0, %v1475
    %v1477 = vpop.f32.mrb[0].mxu0
    %v1478 = vpop.f32.mrb[0].mxu0
    %v1479 = vadd.f32 0.0, %v1478
    %v1480 = vpop.f32.mrb[0].mxu0
    %1481 = vmatprep.mubr.bf16.mxu0 %v466
    %1482 = vmatmul.mubr.bf16.gmra.mrb[0].mxu0 %v435
    %v1483 = vpop.f32.mrb[0].mxu0
    %v1484 = vadd.f32 0.0, %v1483
    %v1485 = vpop.f32.mrb[0].mxu0
    %v1486 = vpop.f32.mrb[0].mxu0
    %v1487 = vadd.f32 0.0, %v1486
    %v1488 = vpop.f32.mrb[0].mxu0
    %1489 = vmatprep.mubr.bf16.mxu0 %v467
    %1490 = vmatmul.mubr.bf16.gmra.mrb[0].mxu0 %v436
    %v1491 = vpop.f32.mrb[0].mxu0
    %v1492 = vadd.f32 0.0, %v1491
    %v1493 = vpop.f32.mrb[0].mxu0
    %v1494 = vpop.f32.mrb[0].mxu0
    %v1495 = vadd.f32 0.0, %v1494
    %v1496 = vpop.f32.mrb[0].mxu0
    %1497 = vmatprep.mubr.bf16.mxu0 %v468
    %1498 = vmatmul.mubr.bf16.gmra.mrb[0].mxu0 %v437
    %v1499 = vpop.f32.mrb[0].mxu0
    %v1500 = vadd.f32 0.0, %v1499
    %v1501 = vpop.f32.mrb[0].mxu0
    %v1502 = vpop.f32.mrb[0].mxu0
    %v1503 = vadd.f32 0.0, %v1502
    %v1504 = vpop.f32.mrb[0].mxu0
    %1505 = vmatprep.mubr.bf16.mxu0 %v469
    %1506 = vmatmul.mubr.bf16.gmra.mrb[0].mxu0 %v438
    %v1507 = vpop.f32.mrb[0].mxu0
    %v1508 = vadd.f32 0.0, %v1507
    %v1509 = vpop.f32.mrb[0].mxu0
    %v1510 = vpop.f32.mrb[0].mxu0
    %v1511 = vadd.f32 0.0, %v1510
    %v1512 = vpop.f32.mrb[0].mxu0
    %1513 = vmatprep.mubr.bf16.mxu0 %v470
    %1514 = vmatmul.mubr.bf16.gmra.mrb[0].mxu0 %v439
    %v1515 = vpop.f32.mrb[0].mxu0
    %v1516 = vadd.f32 0.0, %v1515
    %v1517 = vpop.f32.mrb[0].mxu0
    %v1518 = vpop.f32.mrb[0].mxu0
    %v1519 = vadd.f32 0.0, %v1518
    %v1520 = vpop.f32.mrb[0].mxu0
    %1521 = vmatprep.mubr.bf16.mxu0 %v471
    %1522 = vmatmul.mubr.bf16.gmra.mrb[0].mxu0 %v440
    %v1523 = vpop.f32.mrb[0].mxu0
    %v1524 = vadd.f32 0.0, %v1523
    %v1525 = vpop.f32.mrb[0].mxu0
    %v1526 = vpop.f32.mrb[0].mxu0
    %v1527 = vadd.f32 0.0, %v1526
    %v1528 = vpop.f32.mrb[0].mxu0
    %1529 = vmatprep.mubr.bf16.mxu0 %v472
    %1530 = vmatmul.mubr.bf16.gmra.mrb[0].mxu0 %v441
    %v1531 = vpop.f32.mrb[0].mxu0
    %v1532 = vadd.f32 0.0, %v1531
    %v1533 = vpop.f32.mrb[0].mxu0
    %v1534 = vpop.f32.mrb[0].mxu0
    %v1535 = vadd.f32 0.0, %v1534
    %v1536 = vpop.f32.mrb[0].mxu0
    %1537 = vmatprep.mubr.bf16.mxu0 %v473
    %1538 = vmatmul.mubr.bf16.gmra.mrb[0].mxu0 %v442
    %v1539 = vpop.f32.mrb[0].mxu0
    %v1540 = vadd.f32 0.0, %v1539
    %v1541 = vpop.f32.mrb[0].mxu0
    %v1542 = vpop.f32.mrb[0].mxu0
    %v1543 = vadd.f32 0.0, %v1542
    %v1544 = vpop.f32.mrb[0].mxu0
    %1545 = vmatprep.mubr.bf16.mxu0 %v474
    %1546 = vmatmul.mubr.bf16.gmra.mrb[0].mxu0 %v443
    %v1547 = vpop.f32.mrb[0].mxu0
    %v1548 = vadd.f32 0.0, %v1547
    %v1549 = vpop.f32.mrb[0].mxu0
    %v1550 = vpop.f32.mrb[0].mxu0
    %v1551 = vadd.f32 0.0, %v1550
    %v1552 = vpop.f32.mrb[0].mxu0
    %1553 = vmatprep.mubr.bf16.mxu0 %v475
    %1554 = vmatmul.mubr.bf16.gmra.mrb[0].mxu0 %v444
    %v1555 = vpop.f32.mrb[0].mxu0
    %v1556 = vadd.f32 0.0, %v1555
    %v1557 = vpop.f32.mrb[0].mxu0
    %v1558 = vpop.f32.mrb[0].mxu0
    %v1559 = vadd.f32 0.0, %v1558
    %v1560 = vpop.f32.mrb[0].mxu0
    %1561 = vmatprep.mubr.bf16.mxu0 %v476
    %1562 = vmatmul.mubr.bf16.gmra.mrb[0].mxu0 %v445
    %v1563 = vpop.f32.mrb[0].mxu0
    %v1564 = vadd.f32 0.0, %v1563
    %v1565 = vpop.f32.mrb[0].mxu0
    %v1566 = vpop.f32.mrb[0].mxu0
    %v1567 = vadd.f32 0.0, %v1566
    %v1568 = vpop.f32.mrb[0].mxu0
    %1569 = vmatprep.mubr.bf16.mxu0 %v477
    %1570 = vmatmul.mubr.bf16.gmra.mrb[0].mxu0 %v446
    %v1571 = vpop.f32.mrb[0].mxu0
    %v1572 = vadd.f32 0.0, %v1571
    %v1573 = vpop.f32.mrb[0].mxu0
    %v1574 = vpop.f32.mrb[0].mxu0
    %v1575 = vadd.f32 0.0, %v1574
    %v1576 = vpop.f32.mrb[0].mxu0
    %1577 = vmatprep.mubr.bf16.mxu0 %v478
    %1578 = vmatmul.mubr.bf16.gmra.mrb[0].mxu0 %v447
    %v1579 = vpop.f32.mrb[0].mxu0
    %v1580 = vadd.f32 0.0, %v1579
    %v1581 = vpop.f32.mrb[0].mxu0
    %v1582 = vpop.f32.mrb[0].mxu0
    %v1583 = vadd.f32 0.0, %v1582
    %v1584 = vpop.f32.mrb[0].mxu0
    %1585 = vmatprep.mubr.bf16.mxu0 %v479
    %1586 = vmatmul.mubr.bf16.gmra.mrb[0].mxu0 %v448
    %v1587 = vpop.f32.mrb[0].mxu0
    %v1588 = vadd.f32 0.0, %v1587
    %v1589 = vpop.f32.mrb[0].mxu0
    %v1590 = vpop.f32.mrb[0].mxu0
    %v1591 = vadd.f32 0.0, %v1590
    %v1592 = vpop.f32.mrb[0].mxu0
    %1593 = vdwg.mxu0
    %1594 = vmatprep.subr.bf16.mxu0 0
    %1595 = vmatpush1.bf16.msra.mxu0 %v1177
    %1596 = vmatprep.subr.bf16.mxu0 0
    %1597 = vmatpush1.bf16.msra.mxu0 %v1178
    %1598 = vmatprep.subr.bf16.mxu0 0
    %1599 = vmatpush1.bf16.msra.mxu0 %v1179
    %1600 = vmatprep.subr.bf16.mxu0 0
    %1601 = vmatpush1.bf16.msra.mxu0 %v1180
    %1602 = vmatprep.subr.bf16.mxu0 0
    %1603 = vmatpush1.bf16.msra.mxu0 %v1181
    %1604 = vmatprep.subr.bf16.mxu0 0
    %1605 = vmatpush1.bf16.msra.mxu0 %v1182
    %1606 = vmatprep.subr.bf16.mxu0 0
    %1607 = vmatpush1.bf16.msra.mxu0 %v1183
    %1608 = vmatprep.subr.bf16.mxu0 0
    %1609 = vmatpush1.bf16.msra.mxu0 %v1184
    %1610 = vmatprep.subr.bf16.mxu0 0
    %1611 = vmatpush1.bf16.msra.mxu0 %v1185
    %1612 = vmatprep.subr.bf16.mxu0 0
    %1613 = vmatpush1.bf16.msra.mxu0 %v1186
    %1614 = vmatprep.subr.bf16.mxu0 0
    %1615 = vmatpush1.bf16.msra.mxu0 %v1187
    %1616 = vmatprep.subr.bf16.mxu0 0
    %1617 = vmatpush1.bf16.msra.mxu0 %v1188
    %1618 = vmatprep.subr.bf16.mxu0 0
    %1619 = vmatpush1.bf16.msra.mxu0 %v1189
    %1620 = vmatprep.subr.bf16.mxu0 0
    %1621 = vmatpush1.bf16.msra.mxu0 %v1190
    %1622 = vmatprep.subr.bf16.mxu0 0
    %1623 = vmatpush1.bf16.msra.mxu0 %v1191
    %1624 = vmatprep.subr.bf16.mxu0 0
    %1625 = vmatpush1.bf16.msra.mxu0 %v1192
    %1626 = vmatprep.mubr.bf16.mxu0 %v419
    %1627 = vmatmul.mubr.bf16.gmra.mrb[0].mxu0 %v664
    %v1628 = vpop.f32.mrb[0].mxu0
    %v1629 = vadd.f32 %v1340, %v1628
    %v1630 = vpop.f32.mrb[0].mxu0
    %v1631 = vpop.f32.mrb[0].mxu0
    %v1632 = vadd.f32 %v1343, %v1631
    %v1633 = vpop.f32.mrb[0].mxu0
    %1634 = vmatprep.mubr.bf16.mxu0 %v420
    %1635 = vmatmul.mubr.bf16.gmra.mrb[0].mxu0 %v665
    %v1636 = vpop.f32.mrb[0].mxu0
    %v1637 = vadd.f32 %v1348, %v1636
    %v1638 = vpop.f32.mrb[0].mxu0
    %v1639 = vpop.f32.mrb[0].mxu0
    %v1640 = vadd.f32 %v1351, %v1639
    %v1641 = vpop.f32.mrb[0].mxu0
    %1642 = vmatprep.mubr.bf16.mxu0 %v421
    %1643 = vmatmul.mubr.bf16.gmra.mrb[0].mxu0 %v666
    %v1644 = vpop.f32.mrb[0].mxu0
    %v1645 = vadd.f32 %v1356, %v1644
    %v1646 = vpop.f32.mrb[0].mxu0
    %v1647 = vpop.f32.mrb[0].mxu0
    %v1648 = vadd.f32 %v1359, %v1647
    %v1649 = vpop.f32.mrb[0].mxu0
    %1650 = vmatprep.mubr.bf16.mxu0 %v422
    %1651 = vmatmul.mubr.bf16.gmra.mrb[0].mxu0 %v667
    %v1652 = vpop.f32.mrb[0].mxu0
    %v1653 = vadd.f32 %v1364, %v1652
    %v1654 = vpop.f32.mrb[0].mxu0
    %v1655 = vpop.f32.mrb[0].mxu0
    %v1656 = vadd.f32 %v1367, %v1655
    %v1657 = vpop.f32.mrb[0].mxu0
    %1658 = vmatprep.mubr.bf16.mxu0 %v423
    %1659 = vmatmul.mubr.bf16.gmra.mrb[0].mxu0 %v668
    %v1660 = vpop.f32.mrb[0].mxu0
    %v1661 = vadd.f32 %v1372, %v1660
    %v1662 = vpop.f32.mrb[0].mxu0
    %v1663 = vpop.f32.mrb[0].mxu0
    %v1664 = vadd.f32 %v1375, %v1663
    %v1665 = vpop.f32.mrb[0].mxu0
    %1666 = vmatprep.mubr.bf16.mxu0 %v424
    %1667 = vmatmul.mubr.bf16.gmra.mrb[0].mxu0 %v669
    %v1668 = vpop.f32.mrb[0].mxu0
    %v1669 = vadd.f32 %v1380, %v1668
    %v1670 = vpop.f32.mrb[0].mxu0
    %v1671 = vpop.f32.mrb[0].mxu0
    %v1672 = vadd.f32 %v1383, %v1671
    %v1673 = vpop.f32.mrb[0].mxu0
    %1674 = vmatprep.mubr.bf16.mxu0 %v425
    %1675 = vmatmul.mubr.bf16.gmra.mrb[0].mxu0 %v670
    %v1676 = vpop.f32.mrb[0].mxu0
    %v1677 = vadd.f32 %v1388, %v1676
    %v1678 = vpop.f32.mrb[0].mxu0
    %v1679 = vpop.f32.mrb[0].mxu0
    %v1680 = vadd.f32 %v1391, %v1679
    %v1681 = vpop.f32.mrb[0].mxu0
    %1682 = vmatprep.mubr.bf16.mxu0 %v426
    %1683 = vmatmul.mubr.bf16.gmra.mrb[0].mxu0 %v671
    %v1684 = vpop.f32.mrb[0].mxu0
    %v1685 = vadd.f32 %v1396, %v1684
    %v1686 = vpop.f32.mrb[0].mxu0
    %v1687 = vpop.f32.mrb[0].mxu0
    %v1688 = vadd.f32 %v1399, %v1687
    %v1689 = vpop.f32.mrb[0].mxu0
    %1690 = vmatprep.mubr.bf16.mxu0 %v427
    %1691 = vmatmul.mubr.bf16.gmra.mrb[0].mxu0 %v672
    %v1692 = vpop.f32.mrb[0].mxu0
    %v1693 = vadd.f32 %v1404, %v1692
    %v1694 = vpop.f32.mrb[0].mxu0
    %v1695 = vpop.f32.mrb[0].mxu0
    %v1696 = vadd.f32 %v1407, %v1695
    %v1697 = vpop.f32.mrb[0].mxu0
    %1698 = vmatprep.mubr.bf16.mxu0 %v428
    %1699 = vmatmul.mubr.bf16.gmra.mrb[0].mxu0 %v673
    %v1700 = vpop.f32.mrb[0].mxu0
    %v1701 = vadd.f32 %v1412, %v1700
    %v1702 = vpop.f32.mrb[0].mxu0
    %v1703 = vpop.f32.mrb[0].mxu0
    %v1704 = vadd.f32 %v1415, %v1703
    %v1705 = vpop.f32.mrb[0].mxu0
    %1706 = vmatprep.mubr.bf16.mxu0 %v429
    %1707 = vmatmul.mubr.bf16.gmra.mrb[0].mxu0 %v674
    %v1708 = vpop.f32.mrb[0].mxu0
    %v1709 = vadd.f32 %v1420, %v1708
    %v1710 = vpop.f32.mrb[0].mxu0
    %v1711 = vpop.f32.mrb[0].mxu0
    %v1712 = vadd.f32 %v1423, %v1711
    %v1713 = vpop.f32.mrb[0].mxu0
    %1714 = vmatprep.mubr.bf16.mxu0 %v430
    %1715 = vmatmul.mubr.bf16.gmra.mrb[0].mxu0 %v675
    %v1716 = vpop.f32.mrb[0].mxu0
    %v1717 = vadd.f32 %v1428, %v1716
    %v1718 = vpop.f32.mrb[0].mxu0
    %v1719 = vpop.f32.mrb[0].mxu0
    %v1720 = vadd.f32 %v1431, %v1719
    %v1721 = vpop.f32.mrb[0].mxu0
    %1722 = vmatprep.mubr.bf16.mxu0 %v431
    %1723 = vmatmul.mubr.bf16.gmra.mrb[0].mxu0 %v676
    %v1724 = vpop.f32.mrb[0].mxu0
    %v1725 = vadd.f32 %v1436, %v1724
    %v1726 = vpop.f32.mrb[0].mxu0
    %v1727 = vpop.f32.mrb[0].mxu0
    %v1728 = vadd.f32 %v1439, %v1727
    %v1729 = vpop.f32.mrb[0].mxu0
    %1730 = vmatprep.mubr.bf16.mxu0 %v432
    %1731 = vmatmul.mubr.bf16.gmra.mrb[0].mxu0 %v677
    %v1732 = vpop.f32.mrb[0].mxu0
    %v1733 = vadd.f32 %v1444, %v1732
    %v1734 = vpop.f32.mrb[0].mxu0
    %v1735 = vpop.f32.mrb[0].mxu0
    %v1736 = vadd.f32 %v1447, %v1735
    %v1737 = vpop.f32.mrb[0].mxu0
    %1738 = vmatprep.mubr.bf16.mxu0 %v433
    %1739 = vmatmul.mubr.bf16.gmra.mrb[0].mxu0 %v678
    %v1740 = vpop.f32.mrb[0].mxu0
    %v1741 = vadd.f32 %v1452, %v1740
    %v1742 = vpop.f32.mrb[0].mxu0
    %v1743 = vpop.f32.mrb[0].mxu0
    %v1744 = vadd.f32 %v1455, %v1743
    %v1745 = vpop.f32.mrb[0].mxu0
    %1746 = vmatprep.mubr.bf16.mxu0 %v711
    %1747 = vmatmul.mubr.bf16.gmra.mrb[0].mxu0 %v679
    %v1748 = vpop.f32.mrb[0].mxu0
    %v1749 = vadd.f32 %v1460, %v1748
    %v1750 = vpop.f32.mrb[0].mxu0
    %v1751 = vpop.f32.mrb[0].mxu0
    %v1752 = vadd.f32 %v1463, %v1751
    %v1753 = vpop.f32.mrb[0].mxu0
    %1754 = vmatprep.mubr.bf16.mxu0 %v434
    %1755 = vmatmul.mubr.bf16.gmra.mrb[0].mxu0 %v664
    %v1756 = vpop.f32.mrb[0].mxu0
    %v1757 = vadd.f32 %v1468, %v1756
    %v1758 = vpop.f32.mrb[0].mxu0
    %v1759 = vpop.f32.mrb[0].mxu0
    %v1760 = vadd.f32 %v1471, %v1759
    %v1761 = vpop.f32.mrb[0].mxu0
    %1762 = vmatprep.mubr.bf16.mxu0 %v435
    %1763 = vmatmul.mubr.bf16.gmra.mrb[0].mxu0 %v680
    %v1764 = vpop.f32.mrb[0].mxu0
    %v1765 = vadd.f32 %v1476, %v1764
    %v1766 = vpop.f32.mrb[0].mxu0
    %v1767 = vpop.f32.mrb[0].mxu0
    %v1768 = vadd.f32 %v1479, %v1767
    %v1769 = vpop.f32.mrb[0].mxu0
    %1770 = vmatprep.mubr.bf16.mxu0 %v436
    %1771 = vmatmul.mubr.bf16.gmra.mrb[0].mxu0 %v681
    %v1772 = vpop.f32.mrb[0].mxu0
    %v1773 = vadd.f32 %v1484, %v1772
    %v1774 = vpop.f32.mrb[0].mxu0
    %v1775 = vpop.f32.mrb[0].mxu0
    %v1776 = vadd.f32 %v1487, %v1775
    %v1777 = vpop.f32.mrb[0].mxu0
    %1778 = vmatprep.mubr.bf16.mxu0 %v437
    %1779 = vmatmul.mubr.bf16.gmra.mrb[0].mxu0 %v682
    %v1780 = vpop.f32.mrb[0].mxu0
    %v1781 = vadd.f32 %v1492, %v1780
    %v1782 = vpop.f32.mrb[0].mxu0
    %v1783 = vpop.f32.mrb[0].mxu0
    %v1784 = vadd.f32 %v1495, %v1783
    %v1785 = vpop.f32.mrb[0].mxu0
    %1786 = vmatprep.mubr.bf16.mxu0 %v438
    %1787 = vmatmul.mubr.bf16.gmra.mrb[0].mxu0 %v683
    %v1788 = vpop.f32.mrb[0].mxu0
    %v1789 = vadd.f32 %v1500, %v1788
    %v1790 = vpop.f32.mrb[0].mxu0
    %v1791 = vpop.f32.mrb[0].mxu0
    %v1792 = vadd.f32 %v1503, %v1791
    %v1793 = vpop.f32.mrb[0].mxu0
    %1794 = vmatprep.mubr.bf16.mxu0 %v439
    %1795 = vmatmul.mubr.bf16.gmra.mrb[0].mxu0 %v684
    %v1796 = vpop.f32.mrb[0].mxu0
    %v1797 = vadd.f32 %v1508, %v1796
    %v1798 = vpop.f32.mrb[0].mxu0
    %v1799 = vpop.f32.mrb[0].mxu0
    %v1800 = vadd.f32 %v1511, %v1799
    %v1801 = vpop.f32.mrb[0].mxu0
    %1802 = vmatprep.mubr.bf16.mxu0 %v440
    %1803 = vmatmul.mubr.bf16.gmra.mrb[0].mxu0 %v685
    %v1804 = vpop.f32.mrb[0].mxu0
    %v1805 = vadd.f32 %v1516, %v1804
    %v1806 = vpop.f32.mrb[0].mxu0
    %v1807 = vpop.f32.mrb[0].mxu0
    %v1808 = vadd.f32 %v1519, %v1807
    %v1809 = vpop.f32.mrb[0].mxu0
    %1810 = vmatprep.mubr.bf16.mxu0 %v441
    %1811 = vmatmul.mubr.bf16.gmra.mrb[0].mxu0 %v686
    %v1812 = vpop.f32.mrb[0].mxu0
    %v1813 = vadd.f32 %v1524, %v1812
    %v1814 = vpop.f32.mrb[0].mxu0
    %v1815 = vpop.f32.mrb[0].mxu0
    %v1816 = vadd.f32 %v1527, %v1815
    %v1817 = vpop.f32.mrb[0].mxu0
    %1818 = vmatprep.mubr.bf16.mxu0 %v442
    %1819 = vmatmul.mubr.bf16.gmra.mrb[0].mxu0 %v687
    %v1820 = vpop.f32.mrb[0].mxu0
    %v1821 = vadd.f32 %v1532, %v1820
    %v1822 = vpop.f32.mrb[0].mxu0
    %v1823 = vpop.f32.mrb[0].mxu0
    %v1824 = vadd.f32 %v1535, %v1823
    %v1825 = vpop.f32.mrb[0].mxu0
    %1826 = vmatprep.mubr.bf16.mxu0 %v443
    %1827 = vmatmul.mubr.bf16.gmra.mrb[0].mxu0 %v688
    %v1828 = vpop.f32.mrb[0].mxu0
    %v1829 = vadd.f32 %v1540, %v1828
    %v1830 = vpop.f32.mrb[0].mxu0
    %v1831 = vpop.f32.mrb[0].mxu0
    %v1832 = vadd.f32 %v1543, %v1831
    %v1833 = vpop.f32.mrb[0].mxu0
    %1834 = vmatprep.mubr.bf16.mxu0 %v444
    %1835 = vmatmul.mubr.bf16.gmra.mrb[0].mxu0 %v689
    %v1836 = vpop.f32.mrb[0].mxu0
    %v1837 = vadd.f32 %v1548, %v1836
    %v1838 = vpop.f32.mrb[0].mxu0
    %v1839 = vpop.f32.mrb[0].mxu0
    %v1840 = vadd.f32 %v1551, %v1839
    %v1841 = vpop.f32.mrb[0].mxu0
    %1842 = vmatprep.mubr.bf16.mxu0 %v445
    %1843 = vmatmul.mubr.bf16.gmra.mrb[0].mxu0 %v690
    %v1844 = vpop.f32.mrb[0].mxu0
    %v1845 = vadd.f32 %v1556, %v1844
    %v1846 = vpop.f32.mrb[0].mxu0
    %v1847 = vpop.f32.mrb[0].mxu0
    %v1848 = vadd.f32 %v1559, %v1847
    %v1849 = vpop.f32.mrb[0].mxu0
    %1850 = vmatprep.mubr.bf16.mxu0 %v446
    %1851 = vmatmul.mubr.bf16.gmra.mrb[0].mxu0 %v691
    %v1852 = vpop.f32.mrb[0].mxu0
    %v1853 = vadd.f32 %v1564, %v1852
    %v1854 = vpop.f32.mrb[0].mxu0
    %v1855 = vpop.f32.mrb[0].mxu0
    %v1856 = vadd.f32 %v1567, %v1855
    %v1857 = vpop.f32.mrb[0].mxu0
    %1858 = vmatprep.mubr.bf16.mxu0 %v447
    %1859 = vmatmul.mubr.bf16.gmra.mrb[0].mxu0 %v692
    %v1860 = vpop.f32.mrb[0].mxu0
    %v1861 = vadd.f32 %v1572, %v1860
    %v1862 = vpop.f32.mrb[0].mxu0
    %v1863 = vpop.f32.mrb[0].mxu0
    %v1864 = vadd.f32 %v1575, %v1863
    %v1865 = vpop.f32.mrb[0].mxu0
    %1866 = vmatprep.mubr.bf16.mxu0 %v448
    %1867 = vmatmul.mubr.bf16.gmra.mrb[0].mxu0 %v693
    %v1868 = vpop.f32.mrb[0].mxu0
    %v1869 = vadd.f32 %v1580, %v1868
    %v1870 = vpop.f32.mrb[0].mxu0
    %v1871 = vpop.f32.mrb[0].mxu0
    %v1872 = vadd.f32 %v1583, %v1871
    %v1873 = vpop.f32.mrb[0].mxu0
    %1874 = vmatprep.mubr.bf16.mxu0 %v712
    %1875 = vmatmul.mubr.bf16.gmra.mrb[0].mxu0 %v694
    %v1876 = vpop.f32.mrb[0].mxu0
    %v1877 = vadd.f32 %v1588, %v1876
    %v1878 = vpop.f32.mrb[0].mxu0
    %v1879 = vpop.f32.mrb[0].mxu0
    %v1880 = vadd.f32 %v1591, %v1879
    %v1881 = vpop.f32.mrb[0].mxu0
    %1882 = vdwg.mxu0
    %1883 = vmatprep.subr.bf16.mxu0 0
    %1884 = vmatpush1.bf16.msra.mxu0 %v1193
    %1885 = vmatprep.subr.bf16.mxu0 0
    %1886 = vmatpush1.bf16.msra.mxu0 %v1194
    %1887 = vmatprep.subr.bf16.mxu0 0
    %1888 = vmatpush1.bf16.msra.mxu0 %v1195
    %1889 = vmatprep.subr.bf16.mxu0 0
    %1890 = vmatpush1.bf16.msra.mxu0 %v1196
    %1891 = vmatprep.subr.bf16.mxu0 0
    %1892 = vmatpush1.bf16.msra.mxu0 %v1197
    %1893 = vmatprep.subr.bf16.mxu0 0
    %1894 = vmatpush1.bf16.msra.mxu0 %v1198
    %1895 = vmatprep.subr.bf16.mxu0 0
    %1896 = vmatpush1.bf16.msra.mxu0 %v1199
    %1897 = vmatprep.subr.bf16.mxu0 0
    %1898 = vmatpush1.bf16.msra.mxu0 %v1200
    %1899 = vmatprep.subr.bf16.mxu0 0
    %1900 = vmatpush1.bf16.msra.mxu0 %v1201
    %1901 = vmatprep.subr.bf16.mxu0 0
    %1902 = vmatpush1.bf16.msra.mxu0 %v1202
    %1903 = vmatprep.subr.bf16.mxu0 0
    %1904 = vmatpush1.bf16.msra.mxu0 %v1203
    %1905 = vmatprep.subr.bf16.mxu0 0
    %1906 = vmatpush1.bf16.msra.mxu0 %v1204
    %1907 = vmatprep.subr.bf16.mxu0 0
    %1908 = vmatpush1.bf16.msra.mxu0 %v1205
    %1909 = vmatprep.subr.bf16.mxu0 0
    %1910 = vmatpush1.bf16.msra.mxu0 %v1206
    %1911 = vmatprep.subr.bf16.mxu0 0
    %1912 = vmatpush1.bf16.msra.mxu0 %v1207
    %1913 = vmatprep.subr.bf16.mxu0 0
    %1914 = vmatpush1.bf16.msra.mxu0 %v1208
    %1915 = vmatprep.mubr.bf16.mxu0 %v665
    %1916 = vmatmul.mubr.bf16.gmra.mrb[0].mxu0 %v450
    %v1917 = vpop.f32.mrb[0].mxu0
    %v1918 = vadd.f32 %v1629, %v1917
    %v1919 = vpop.f32.mrb[0].mxu0
    %v1920 = vpop.f32.mrb[0].mxu0
    %v1921 = vadd.f32 %v1632, %v1920
    %v1922 = vpop.f32.mrb[0].mxu0
    %1923 = vmatprep.mubr.bf16.mxu0 %v666
    %1924 = vmatmul.mubr.bf16.gmra.mrb[0].mxu0 %v451
    %v1925 = vpop.f32.mrb[0].mxu0
    %v1926 = vadd.f32 %v1637, %v1925
    %v1927 = vpop.f32.mrb[0].mxu0
    %v1928 = vpop.f32.mrb[0].mxu0
    %v1929 = vadd.f32 %v1640, %v1928
    %v1930 = vpop.f32.mrb[0].mxu0
    %1931 = vmatprep.mubr.bf16.mxu0 %v667
    %1932 = vmatmul.mubr.bf16.gmra.mrb[0].mxu0 %v452
    %v1933 = vpop.f32.mrb[0].mxu0
    %v1934 = vadd.f32 %v1645, %v1933
    %v1935 = vpop.f32.mrb[0].mxu0
    %v1936 = vpop.f32.mrb[0].mxu0
    %v1937 = vadd.f32 %v1648, %v1936
    %v1938 = vpop.f32.mrb[0].mxu0
    %1939 = vmatprep.mubr.bf16.mxu0 %v668
    %1940 = vmatmul.mubr.bf16.gmra.mrb[0].mxu0 %v453
    %v1941 = vpop.f32.mrb[0].mxu0
    %v1942 = vadd.f32 %v1653, %v1941
    %v1943 = vpop.f32.mrb[0].mxu0
    %v1944 = vpop.f32.mrb[0].mxu0
    %v1945 = vadd.f32 %v1656, %v1944
    %v1946 = vpop.f32.mrb[0].mxu0
    %1947 = vmatprep.mubr.bf16.mxu0 %v669
    %1948 = vmatmul.mubr.bf16.gmra.mrb[0].mxu0 %v454
    %v1949 = vpop.f32.mrb[0].mxu0
    %v1950 = vadd.f32 %v1661, %v1949
    %v1951 = vpop.f32.mrb[0].mxu0
    %v1952 = vpop.f32.mrb[0].mxu0
    %v1953 = vadd.f32 %v1664, %v1952
    %v1954 = vpop.f32.mrb[0].mxu0
    %1955 = vmatprep.mubr.bf16.mxu0 %v670
    %1956 = vmatmul.mubr.bf16.gmra.mrb[0].mxu0 %v455
    %v1957 = vpop.f32.mrb[0].mxu0
    %v1958 = vadd.f32 %v1669, %v1957
    %v1959 = vpop.f32.mrb[0].mxu0
    %v1960 = vpop.f32.mrb[0].mxu0
    %v1961 = vadd.f32 %v1672, %v1960
    %v1962 = vpop.f32.mrb[0].mxu0
    %1963 = vmatprep.mubr.bf16.mxu0 %v671
    %1964 = vmatmul.mubr.bf16.gmra.mrb[0].mxu0 %v456
    %v1965 = vpop.f32.mrb[0].mxu0
    %v1966 = vadd.f32 %v1677, %v1965
    %v1967 = vpop.f32.mrb[0].mxu0
    %v1968 = vpop.f32.mrb[0].mxu0
    %v1969 = vadd.f32 %v1680, %v1968
    %v1970 = vpop.f32.mrb[0].mxu0
    %1971 = vmatprep.mubr.bf16.mxu0 %v672
    %1972 = vmatmul.mubr.bf16.gmra.mrb[0].mxu0 %v457
    %v1973 = vpop.f32.mrb[0].mxu0
    %v1974 = vadd.f32 %v1685, %v1973
    %v1975 = vpop.f32.mrb[0].mxu0
    %v1976 = vpop.f32.mrb[0].mxu0
    %v1977 = vadd.f32 %v1688, %v1976
    %v1978 = vpop.f32.mrb[0].mxu0
    %1979 = vmatprep.mubr.bf16.mxu0 %v673
    %1980 = vmatmul.mubr.bf16.gmra.mrb[0].mxu0 %v458
    %v1981 = vpop.f32.mrb[0].mxu0
    %v1982 = vadd.f32 %v1693, %v1981
    %v1983 = vpop.f32.mrb[0].mxu0
    %v1984 = vpop.f32.mrb[0].mxu0
    %v1985 = vadd.f32 %v1696, %v1984
    %v1986 = vpop.f32.mrb[0].mxu0
    %1987 = vmatprep.mubr.bf16.mxu0 %v674
    %1988 = vmatmul.mubr.bf16.gmra.mrb[0].mxu0 %v459
    %v1989 = vpop.f32.mrb[0].mxu0
    %v1990 = vadd.f32 %v1701, %v1989
    %v1991 = vpop.f32.mrb[0].mxu0
    %v1992 = vpop.f32.mrb[0].mxu0
    %v1993 = vadd.f32 %v1704, %v1992
    %v1994 = vpop.f32.mrb[0].mxu0
    %1995 = vmatprep.mubr.bf16.mxu0 %v675
    %1996 = vmatmul.mubr.bf16.gmra.mrb[0].mxu0 %v460
    %v1997 = vpop.f32.mrb[0].mxu0
    %v1998 = vadd.f32 %v1709, %v1997
    %v1999 = vpop.f32.mrb[0].mxu0
    %v2000 = vpop.f32.mrb[0].mxu0
    %v2001 = vadd.f32 %v1712, %v2000
    %v2002 = vpop.f32.mrb[0].mxu0
    %2003 = vmatprep.mubr.bf16.mxu0 %v676
    %2004 = vmatmul.mubr.bf16.gmra.mrb[0].mxu0 %v461
    %v2005 = vpop.f32.mrb[0].mxu0
    %v2006 = vadd.f32 %v1717, %v2005
    %v2007 = vpop.f32.mrb[0].mxu0
    %v2008 = vpop.f32.mrb[0].mxu0
    %v2009 = vadd.f32 %v1720, %v2008
    %v2010 = vpop.f32.mrb[0].mxu0
    %2011 = vmatprep.mubr.bf16.mxu0 %v677
    %2012 = vmatmul.mubr.bf16.gmra.mrb[0].mxu0 %v462
    %v2013 = vpop.f32.mrb[0].mxu0
    %v2014 = vadd.f32 %v1725, %v2013
    %v2015 = vpop.f32.mrb[0].mxu0
    %v2016 = vpop.f32.mrb[0].mxu0
    %v2017 = vadd.f32 %v1728, %v2016
    %v2018 = vpop.f32.mrb[0].mxu0
    %2019 = vmatprep.mubr.bf16.mxu0 %v678
    %2020 = vmatmul.mubr.bf16.gmra.mrb[0].mxu0 %v463
    %v2021 = vpop.f32.mrb[0].mxu0
    %v2022 = vadd.f32 %v1733, %v2021
    %v2023 = vpop.f32.mrb[0].mxu0
    %v2024 = vpop.f32.mrb[0].mxu0
    %v2025 = vadd.f32 %v1736, %v2024
    %v2026 = vpop.f32.mrb[0].mxu0
    %2027 = vmatprep.mubr.bf16.mxu0 %v679
    %2028 = vmatmul.mubr.bf16.gmra.mrb[0].mxu0 %v464
    %v2029 = vpop.f32.mrb[0].mxu0
    %v2030 = vadd.f32 %v1741, %v2029
    %v2031 = vpop.f32.mrb[0].mxu0
    %v2032 = vpop.f32.mrb[0].mxu0
    %v2033 = vadd.f32 %v1744, %v2032
    %v2034 = vpop.f32.mrb[0].mxu0
    %2035 = vmatprep.mubr.bf16.mxu0 %v727
    %2036 = vmatmul.mubr.bf16.gmra.mrb[0].mxu0 %v713
    %v2037 = vpop.f32.mrb[0].mxu0
    %v2038 = vadd.f32 %v1749, %v2037
    %v2039 = vpop.f32.mrb[0].mxu0
    %v2040 = vpop.f32.mrb[0].mxu0
    %v2041 = vadd.f32 %v1752, %v2040
    %v2042 = vpop.f32.mrb[0].mxu0
    %2043 = vmatprep.mubr.bf16.mxu0 %v680
    %2044 = vmatmul.mubr.bf16.gmra.mrb[0].mxu0 %v465
    %v2045 = vpop.f32.mrb[0].mxu0
    %v2046 = vadd.f32 %v1757, %v2045
    %v2047 = vpop.f32.mrb[0].mxu0
    %v2048 = vpop.f32.mrb[0].mxu0
    %v2049 = vadd.f32 %v1760, %v2048
    %v2050 = vpop.f32.mrb[0].mxu0
    %2051 = vmatprep.mubr.bf16.mxu0 %v681
    %2052 = vmatmul.mubr.bf16.gmra.mrb[0].mxu0 %v466
    %v2053 = vpop.f32.mrb[0].mxu0
    %v2054 = vadd.f32 %v1765, %v2053
    %v2055 = vpop.f32.mrb[0].mxu0
    %v2056 = vpop.f32.mrb[0].mxu0
    %v2057 = vadd.f32 %v1768, %v2056
    %v2058 = vpop.f32.mrb[0].mxu0
    %2059 = vmatprep.mubr.bf16.mxu0 %v682
    %2060 = vmatmul.mubr.bf16.gmra.mrb[0].mxu0 %v467
    %v2061 = vpop.f32.mrb[0].mxu0
    %v2062 = vadd.f32 %v1773, %v2061
    %v2063 = vpop.f32.mrb[0].mxu0
    %v2064 = vpop.f32.mrb[0].mxu0
    %v2065 = vadd.f32 %v1776, %v2064
    %v2066 = vpop.f32.mrb[0].mxu0
    %2067 = vmatprep.mubr.bf16.mxu0 %v683
    %2068 = vmatmul.mubr.bf16.gmra.mrb[0].mxu0 %v468
    %v2069 = vpop.f32.mrb[0].mxu0
    %v2070 = vadd.f32 %v1781, %v2069
    %v2071 = vpop.f32.mrb[0].mxu0
    %v2072 = vpop.f32.mrb[0].mxu0
    %v2073 = vadd.f32 %v1784, %v2072
    %v2074 = vpop.f32.mrb[0].mxu0
    %2075 = vmatprep.mubr.bf16.mxu0 %v684
    %2076 = vmatmul.mubr.bf16.gmra.mrb[0].mxu0 %v469
    %v2077 = vpop.f32.mrb[0].mxu0
    %v2078 = vadd.f32 %v1789, %v2077
    %v2079 = vpop.f32.mrb[0].mxu0
    %v2080 = vpop.f32.mrb[0].mxu0
    %v2081 = vadd.f32 %v1792, %v2080
    %v2082 = vpop.f32.mrb[0].mxu0
    %2083 = vmatprep.mubr.bf16.mxu0 %v685
    %2084 = vmatmul.mubr.bf16.gmra.mrb[0].mxu0 %v470
    %v2085 = vpop.f32.mrb[0].mxu0
    %v2086 = vadd.f32 %v1797, %v2085
    %v2087 = vpop.f32.mrb[0].mxu0
    %v2088 = vpop.f32.mrb[0].mxu0
    %v2089 = vadd.f32 %v1800, %v2088
    %v2090 = vpop.f32.mrb[0].mxu0
    %2091 = vmatprep.mubr.bf16.mxu0 %v686
    %2092 = vmatmul.mubr.bf16.gmra.mrb[0].mxu0 %v471
    %v2093 = vpop.f32.mrb[0].mxu0
    %v2094 = vadd.f32 %v1805, %v2093
    %v2095 = vpop.f32.mrb[0].mxu0
    %v2096 = vpop.f32.mrb[0].mxu0
    %v2097 = vadd.f32 %v1808, %v2096
    %v2098 = vpop.f32.mrb[0].mxu0
    %2099 = vmatprep.mubr.bf16.mxu0 %v687
    %2100 = vmatmul.mubr.bf16.gmra.mrb[0].mxu0 %v472
    %v2101 = vpop.f32.mrb[0].mxu0
    %v2102 = vadd.f32 %v1813, %v2101
    %v2103 = vpop.f32.mrb[0].mxu0
    %v2104 = vpop.f32.mrb[0].mxu0
    %v2105 = vadd.f32 %v1816, %v2104
    %v2106 = vpop.f32.mrb[0].mxu0
    %2107 = vmatprep.mubr.bf16.mxu0 %v688
    %2108 = vmatmul.mubr.bf16.gmra.mrb[0].mxu0 %v473
    %v2109 = vpop.f32.mrb[0].mxu0
    %v2110 = vadd.f32 %v1821, %v2109
    %v2111 = vpop.f32.mrb[0].mxu0
    %v2112 = vpop.f32.mrb[0].mxu0
    %v2113 = vadd.f32 %v1824, %v2112
    %v2114 = vpop.f32.mrb[0].mxu0
    %2115 = vmatprep.mubr.bf16.mxu0 %v689
    %2116 = vmatmul.mubr.bf16.gmra.mrb[0].mxu0 %v474
    %v2117 = vpop.f32.mrb[0].mxu0
    %v2118 = vadd.f32 %v1829, %v2117
    %v2119 = vpop.f32.mrb[0].mxu0
    %v2120 = vpop.f32.mrb[0].mxu0
    %v2121 = vadd.f32 %v1832, %v2120
    %v2122 = vpop.f32.mrb[0].mxu0
    %2123 = vmatprep.mubr.bf16.mxu0 %v690
    %2124 = vmatmul.mubr.bf16.gmra.mrb[0].mxu0 %v475
    %v2125 = vpop.f32.mrb[0].mxu0
    %v2126 = vadd.f32 %v1837, %v2125
    %v2127 = vpop.f32.mrb[0].mxu0
    %v2128 = vpop.f32.mrb[0].mxu0
    %v2129 = vadd.f32 %v1840, %v2128
    %v2130 = vpop.f32.mrb[0].mxu0
    %2131 = vmatprep.mubr.bf16.mxu0 %v691
    %2132 = vmatmul.mubr.bf16.gmra.mrb[0].mxu0 %v476
    %v2133 = vpop.f32.mrb[0].mxu0
    %v2134 = vadd.f32 %v1845, %v2133
    %v2135 = vpop.f32.mrb[0].mxu0
    %v2136 = vpop.f32.mrb[0].mxu0
    %v2137 = vadd.f32 %v1848, %v2136
    %v2138 = vpop.f32.mrb[0].mxu0
    %2139 = vmatprep.mubr.bf16.mxu0 %v692
    %2140 = vmatmul.mubr.bf16.gmra.mrb[0].mxu0 %v477
    %v2141 = vpop.f32.mrb[0].mxu0
    %v2142 = vadd.f32 %v1853, %v2141
    %v2143 = vpop.f32.mrb[0].mxu0
    %v2144 = vpop.f32.mrb[0].mxu0
    %v2145 = vadd.f32 %v1856, %v2144
    %v2146 = vpop.f32.mrb[0].mxu0
    %2147 = vmatprep.mubr.bf16.mxu0 %v693
    %2148 = vmatmul.mubr.bf16.gmra.mrb[0].mxu0 %v478
    %v2149 = vpop.f32.mrb[0].mxu0
    %v2150 = vadd.f32 %v1861, %v2149
    %v2151 = vpop.f32.mrb[0].mxu0
    %v2152 = vpop.f32.mrb[0].mxu0
    %v2153 = vadd.f32 %v1864, %v2152
    %v2154 = vpop.f32.mrb[0].mxu0
    %2155 = vmatprep.mubr.bf16.mxu0 %v694
    %2156 = vmatmul.mubr.bf16.gmra.mrb[0].mxu0 %v479
    %v2157 = vpop.f32.mrb[0].mxu0
    %v2158 = vadd.f32 %v1869, %v2157
    %v2159 = vpop.f32.mrb[0].mxu0
    %v2160 = vpop.f32.mrb[0].mxu0
    %v2161 = vadd.f32 %v1872, %v2160
    %v2162 = vpop.f32.mrb[0].mxu0
    %2163 = vmatprep.mubr.bf16.mxu0 %v728
    %2164 = vmatmul.mubr.bf16.gmra.mrb[0].mxu0 %v714
    %v2165 = vpop.f32.mrb[0].mxu0
    %v2166 = vadd.f32 %v1877, %v2165
    %v2167 = vpop.f32.mrb[0].mxu0
    %v2168 = vpop.f32.mrb[0].mxu0
    %v2169 = vadd.f32 %v1880, %v2168
    %v2170 = vpop.f32.mrb[0].mxu0
    %2171 = vdwg.mxu0
    %2172 = vmatprep.subr.bf16.mxu0 0
    %2173 = vmatpush1.bf16.msra.mxu0 %v1209
    %2174 = vmatprep.subr.bf16.mxu0 0
    %2175 = vmatpush1.bf16.msra.mxu0 %v1210
    %2176 = vmatprep.subr.bf16.mxu0 0
    %2177 = vmatpush1.bf16.msra.mxu0 %v1211
    %2178 = vmatprep.subr.bf16.mxu0 0
    %2179 = vmatpush1.bf16.msra.mxu0 %v1212
    %2180 = vmatprep.subr.bf16.mxu0 0
    %2181 = vmatpush1.bf16.msra.mxu0 %v1213
    %2182 = vmatprep.subr.bf16.mxu0 0
    %2183 = vmatpush1.bf16.msra.mxu0 %v1214
    %2184 = vmatprep.subr.bf16.mxu0 0
    %2185 = vmatpush1.bf16.msra.mxu0 %v1215
    %2186 = vmatprep.subr.bf16.mxu0 0
    %2187 = vmatpush1.bf16.msra.mxu0 %v1216
    %2188 = vmatprep.subr.bf16.mxu0 0
    %2189 = vmatpush1.bf16.msra.mxu0 %v1217
    %2190 = vmatprep.subr.bf16.mxu0 0
    %2191 = vmatpush1.bf16.msra.mxu0 %v1218
    %2192 = vmatprep.subr.bf16.mxu0 0
    %2193 = vmatpush1.bf16.msra.mxu0 %v1219
    %2194 = vmatprep.subr.bf16.mxu0 0
    %2195 = vmatpush1.bf16.msra.mxu0 %v1220
    %2196 = vmatprep.subr.bf16.mxu0 0
    %2197 = vmatpush1.bf16.msra.mxu0 %v1221
    %2198 = vmatprep.subr.bf16.mxu0 0
    %2199 = vmatpush1.bf16.msra.mxu0 %v1222
    %2200 = vmatprep.subr.bf16.mxu0 0
    %2201 = vmatpush1.bf16.msra.mxu0 %v1223
    %2202 = vmatprep.subr.bf16.mxu0 0
    %2203 = vmatpush1.bf16.msra.mxu0 %v1224
    %2204 = vmatprep.mubr.bf16.mxu0 %v451
    %2205 = vmatmul.mubr.bf16.gmra.mrb[0].mxu0 %v420
    %v2206 = vpop.f32.mrb[0].mxu0
    %v2207 = vadd.f32 %v1918, %v2206
    %v2208 = vpop.f32.mrb[0].mxu0
    %v2209 = vpop.f32.mrb[0].mxu0
    %v2210 = vadd.f32 %v1921, %v2209
    %v2211 = vpop.f32.mrb[0].mxu0
    %2212 = vmatprep.mubr.bf16.mxu0 %v452
    %2213 = vmatmul.mubr.bf16.gmra.mrb[0].mxu0 %v421
    %v2214 = vpop.f32.mrb[0].mxu0
    %v2215 = vadd.f32 %v1926, %v2214
    %v2216 = vpop.f32.mrb[0].mxu0
    %v2217 = vpop.f32.mrb[0].mxu0
    %v2218 = vadd.f32 %v1929, %v2217
    %v2219 = vpop.f32.mrb[0].mxu0
    %2220 = vmatprep.mubr.bf16.mxu0 %v453
    %2221 = vmatmul.mubr.bf16.gmra.mrb[0].mxu0 %v422
    %v2222 = vpop.f32.mrb[0].mxu0
    %v2223 = vadd.f32 %v1934, %v2222
    %v2224 = vpop.f32.mrb[0].mxu0
    %v2225 = vpop.f32.mrb[0].mxu0
    %v2226 = vadd.f32 %v1937, %v2225
    %v2227 = vpop.f32.mrb[0].mxu0
    %2228 = vmatprep.mubr.bf16.mxu0 %v454
    %2229 = vmatmul.mubr.bf16.gmra.mrb[0].mxu0 %v423
    %v2230 = vpop.f32.mrb[0].mxu0
    %v2231 = vadd.f32 %v1942, %v2230
    %v2232 = vpop.f32.mrb[0].mxu0
    %v2233 = vpop.f32.mrb[0].mxu0
    %v2234 = vadd.f32 %v1945, %v2233
    %v2235 = vpop.f32.mrb[0].mxu0
    %2236 = vmatprep.mubr.bf16.mxu0 %v455
    %2237 = vmatmul.mubr.bf16.gmra.mrb[0].mxu0 %v424
    %v2238 = vpop.f32.mrb[0].mxu0
    %v2239 = vadd.f32 %v1950, %v2238
    %v2240 = vpop.f32.mrb[0].mxu0
    %v2241 = vpop.f32.mrb[0].mxu0
    %v2242 = vadd.f32 %v1953, %v2241
    %v2243 = vpop.f32.mrb[0].mxu0
    %2244 = vmatprep.mubr.bf16.mxu0 %v456
    %2245 = vmatmul.mubr.bf16.gmra.mrb[0].mxu0 %v425
    %v2246 = vpop.f32.mrb[0].mxu0
    %v2247 = vadd.f32 %v1958, %v2246
    %v2248 = vpop.f32.mrb[0].mxu0
    %v2249 = vpop.f32.mrb[0].mxu0
    %v2250 = vadd.f32 %v1961, %v2249
    %v2251 = vpop.f32.mrb[0].mxu0
    %2252 = vmatprep.mubr.bf16.mxu0 %v457
    %2253 = vmatmul.mubr.bf16.gmra.mrb[0].mxu0 %v426
    %v2254 = vpop.f32.mrb[0].mxu0
    %v2255 = vadd.f32 %v1966, %v2254
    %v2256 = vpop.f32.mrb[0].mxu0
    %v2257 = vpop.f32.mrb[0].mxu0
    %v2258 = vadd.f32 %v1969, %v2257
    %v2259 = vpop.f32.mrb[0].mxu0
    %2260 = vmatprep.mubr.bf16.mxu0 %v458
    %2261 = vmatmul.mubr.bf16.gmra.mrb[0].mxu0 %v427
    %v2262 = vpop.f32.mrb[0].mxu0
    %v2263 = vadd.f32 %v1974, %v2262
    %v2264 = vpop.f32.mrb[0].mxu0
    %v2265 = vpop.f32.mrb[0].mxu0
    %v2266 = vadd.f32 %v1977, %v2265
    %v2267 = vpop.f32.mrb[0].mxu0
    %2268 = vmatprep.mubr.bf16.mxu0 %v459
    %2269 = vmatmul.mubr.bf16.gmra.mrb[0].mxu0 %v428
    %v2270 = vpop.f32.mrb[0].mxu0
    %v2271 = vadd.f32 %v1982, %v2270
    %v2272 = vpop.f32.mrb[0].mxu0
    %v2273 = vpop.f32.mrb[0].mxu0
    %v2274 = vadd.f32 %v1985, %v2273
    %v2275 = vpop.f32.mrb[0].mxu0
    %2276 = vmatprep.mubr.bf16.mxu0 %v460
    %2277 = vmatmul.mubr.bf16.gmra.mrb[0].mxu0 %v429
    %v2278 = vpop.f32.mrb[0].mxu0
    %v2279 = vadd.f32 %v1990, %v2278
    %v2280 = vpop.f32.mrb[0].mxu0
    %v2281 = vpop.f32.mrb[0].mxu0
    %v2282 = vadd.f32 %v1993, %v2281
    %v2283 = vpop.f32.mrb[0].mxu0
    %2284 = vmatprep.mubr.bf16.mxu0 %v461
    %2285 = vmatmul.mubr.bf16.gmra.mrb[0].mxu0 %v430
    %v2286 = vpop.f32.mrb[0].mxu0
    %v2287 = vadd.f32 %v1998, %v2286
    %v2288 = vpop.f32.mrb[0].mxu0
    %v2289 = vpop.f32.mrb[0].mxu0
    %v2290 = vadd.f32 %v2001, %v2289
    %v2291 = vpop.f32.mrb[0].mxu0
    %2292 = vmatprep.mubr.bf16.mxu0 %v462
    %2293 = vmatmul.mubr.bf16.gmra.mrb[0].mxu0 %v431
    %v2294 = vpop.f32.mrb[0].mxu0
    %v2295 = vadd.f32 %v2006, %v2294
    %v2296 = vpop.f32.mrb[0].mxu0
    %v2297 = vpop.f32.mrb[0].mxu0
    %v2298 = vadd.f32 %v2009, %v2297
    %v2299 = vpop.f32.mrb[0].mxu0
    %2300 = vmatprep.mubr.bf16.mxu0 %v463
    %2301 = vmatmul.mubr.bf16.gmra.mrb[0].mxu0 %v432
    %v2302 = vpop.f32.mrb[0].mxu0
    %v2303 = vadd.f32 %v2014, %v2302
    %v2304 = vpop.f32.mrb[0].mxu0
    %v2305 = vpop.f32.mrb[0].mxu0
    %v2306 = vadd.f32 %v2017, %v2305
    %v2307 = vpop.f32.mrb[0].mxu0
    %2308 = vmatprep.mubr.bf16.mxu0 %v464
    %2309 = vmatmul.mubr.bf16.gmra.mrb[0].mxu0 %v433
    %v2310 = vpop.f32.mrb[0].mxu0
    %v2311 = vadd.f32 %v2022, %v2310
    %v2312 = vpop.f32.mrb[0].mxu0
    %v2313 = vpop.f32.mrb[0].mxu0
    %v2314 = vadd.f32 %v2025, %v2313
    %v2315 = vpop.f32.mrb[0].mxu0
    %2316 = vmatprep.mubr.bf16.mxu0 %v713
    %2317 = vmatmul.mubr.bf16.gmra.mrb[0].mxu0 %v711
    %v2318 = vpop.f32.mrb[0].mxu0
    %v2319 = vadd.f32 %v2030, %v2318
    %v2320 = vpop.f32.mrb[0].mxu0
    %v2321 = vpop.f32.mrb[0].mxu0
    %v2322 = vadd.f32 %v2033, %v2321
    %v2323 = vpop.f32.mrb[0].mxu0
    %2324 = vmatprep.mubr.bf16.mxu0 %v449
    %2325 = vmatmul.mubr.bf16.gmra.mrb[0].mxu0 %v418
    %v2326 = vpop.f32.mrb[0].mxu0
    %v2327 = vadd.f32 %v2038, %v2326
    %v2328 = vpop.f32.mrb[0].mxu0
    %v2329 = vpop.f32.mrb[0].mxu0
    %v2330 = vadd.f32 %v2041, %v2329
    %v2331 = vpop.f32.mrb[0].mxu0
    %2332 = vmatprep.mubr.bf16.mxu0 %v466
    %2333 = vmatmul.mubr.bf16.gmra.mrb[0].mxu0 %v435
    %v2334 = vpop.f32.mrb[0].mxu0
    %v2335 = vadd.f32 %v2046, %v2334
    %v2336 = vpop.f32.mrb[0].mxu0
    %v2337 = vpop.f32.mrb[0].mxu0
    %v2338 = vadd.f32 %v2049, %v2337
    %v2339 = vpop.f32.mrb[0].mxu0
    %2340 = vmatprep.mubr.bf16.mxu0 %v467
    %2341 = vmatmul.mubr.bf16.gmra.mrb[0].mxu0 %v436
    %v2342 = vpop.f32.mrb[0].mxu0
    %v2343 = vadd.f32 %v2054, %v2342
    %v2344 = vpop.f32.mrb[0].mxu0
    %v2345 = vpop.f32.mrb[0].mxu0
    %v2346 = vadd.f32 %v2057, %v2345
    %v2347 = vpop.f32.mrb[0].mxu0
    %2348 = vmatprep.mubr.bf16.mxu0 %v468
    %2349 = vmatmul.mubr.bf16.gmra.mrb[0].mxu0 %v437
    %v2350 = vpop.f32.mrb[0].mxu0
    %v2351 = vadd.f32 %v2062, %v2350
    %v2352 = vpop.f32.mrb[0].mxu0
    %v2353 = vpop.f32.mrb[0].mxu0
    %v2354 = vadd.f32 %v2065, %v2353
    %v2355 = vpop.f32.mrb[0].mxu0
    %2356 = vmatprep.mubr.bf16.mxu0 %v469
    %2357 = vmatmul.mubr.bf16.gmra.mrb[0].mxu0 %v438
    %v2358 = vpop.f32.mrb[0].mxu0
    %v2359 = vadd.f32 %v2070, %v2358
    %v2360 = vpop.f32.mrb[0].mxu0
    %v2361 = vpop.f32.mrb[0].mxu0
    %v2362 = vadd.f32 %v2073, %v2361
    %v2363 = vpop.f32.mrb[0].mxu0
    %2364 = vmatprep.mubr.bf16.mxu0 %v470
    %2365 = vmatmul.mubr.bf16.gmra.mrb[0].mxu0 %v439
    %v2366 = vpop.f32.mrb[0].mxu0
    %v2367 = vadd.f32 %v2078, %v2366
    %v2368 = vpop.f32.mrb[0].mxu0
    %v2369 = vpop.f32.mrb[0].mxu0
    %v2370 = vadd.f32 %v2081, %v2369
    %v2371 = vpop.f32.mrb[0].mxu0
    %2372 = vmatprep.mubr.bf16.mxu0 %v471
    %2373 = vmatmul.mubr.bf16.gmra.mrb[0].mxu0 %v440
    %v2374 = vpop.f32.mrb[0].mxu0
    %v2375 = vadd.f32 %v2086, %v2374
    %v2376 = vpop.f32.mrb[0].mxu0
    %v2377 = vpop.f32.mrb[0].mxu0
    %v2378 = vadd.f32 %v2089, %v2377
    %v2379 = vpop.f32.mrb[0].mxu0
    %2380 = vmatprep.mubr.bf16.mxu0 %v472
    %2381 = vmatmul.mubr.bf16.gmra.mrb[0].mxu0 %v441
    %v2382 = vpop.f32.mrb[0].mxu0
    %v2383 = vadd.f32 %v2094, %v2382
    %v2384 = vpop.f32.mrb[0].mxu0
    %v2385 = vpop.f32.mrb[0].mxu0
    %v2386 = vadd.f32 %v2097, %v2385
    %v2387 = vpop.f32.mrb[0].mxu0
    %2388 = vmatprep.mubr.bf16.mxu0 %v473
    %2389 = vmatmul.mubr.bf16.gmra.mrb[0].mxu0 %v442
    %v2390 = vpop.f32.mrb[0].mxu0
    %v2391 = vadd.f32 %v2102, %v2390
    %v2392 = vpop.f32.mrb[0].mxu0
    %v2393 = vpop.f32.mrb[0].mxu0
    %v2394 = vadd.f32 %v2105, %v2393
    %v2395 = vpop.f32.mrb[0].mxu0
    %2396 = vmatprep.mubr.bf16.mxu0 %v474
    %2397 = vmatmul.mubr.bf16.gmra.mrb[0].mxu0 %v443
    %v2398 = vpop.f32.mrb[0].mxu0
    %v2399 = vadd.f32 %v2110, %v2398
    %v2400 = vpop.f32.mrb[0].mxu0
    %v2401 = vpop.f32.mrb[0].mxu0
    %v2402 = vadd.f32 %v2113, %v2401
    %v2403 = vpop.f32.mrb[0].mxu0
    %2404 = vmatprep.mubr.bf16.mxu0 %v475
    %2405 = vmatmul.mubr.bf16.gmra.mrb[0].mxu0 %v444
    %v2406 = vpop.f32.mrb[0].mxu0
    %v2407 = vadd.f32 %v2118, %v2406
    %v2408 = vpop.f32.mrb[0].mxu0
    %v2409 = vpop.f32.mrb[0].mxu0
    %v2410 = vadd.f32 %v2121, %v2409
    %v2411 = vpop.f32.mrb[0].mxu0
    %2412 = vmatprep.mubr.bf16.mxu0 %v476
    %2413 = vmatmul.mubr.bf16.gmra.mrb[0].mxu0 %v445
    %v2414 = vpop.f32.mrb[0].mxu0
    %v2415 = vadd.f32 %v2126, %v2414
    %v2416 = vpop.f32.mrb[0].mxu0
    %v2417 = vpop.f32.mrb[0].mxu0
    %v2418 = vadd.f32 %v2129, %v2417
    %v2419 = vpop.f32.mrb[0].mxu0
    %2420 = vmatprep.mubr.bf16.mxu0 %v477
    %2421 = vmatmul.mubr.bf16.gmra.mrb[0].mxu0 %v446
    %v2422 = vpop.f32.mrb[0].mxu0
    %v2423 = vadd.f32 %v2134, %v2422
    %v2424 = vpop.f32.mrb[0].mxu0
    %v2425 = vpop.f32.mrb[0].mxu0
    %v2426 = vadd.f32 %v2137, %v2425
    %v2427 = vpop.f32.mrb[0].mxu0
    %2428 = vmatprep.mubr.bf16.mxu0 %v478
    %2429 = vmatmul.mubr.bf16.gmra.mrb[0].mxu0 %v447
    %v2430 = vpop.f32.mrb[0].mxu0
    %v2431 = vadd.f32 %v2142, %v2430
    %v2432 = vpop.f32.mrb[0].mxu0
    %v2433 = vpop.f32.mrb[0].mxu0
    %v2434 = vadd.f32 %v2145, %v2433
    %v2435 = vpop.f32.mrb[0].mxu0
    %2436 = vmatprep.mubr.bf16.mxu0 %v479
    %2437 = vmatmul.mubr.bf16.gmra.mrb[0].mxu0 %v448
    %v2438 = vpop.f32.mrb[0].mxu0
    %v2439 = vadd.f32 %v2150, %v2438
    %v2440 = vpop.f32.mrb[0].mxu0
    %v2441 = vpop.f32.mrb[0].mxu0
    %v2442 = vadd.f32 %v2153, %v2441
    %v2443 = vpop.f32.mrb[0].mxu0
    %2444 = vmatprep.mubr.bf16.mxu0 %v714
    %2445 = vmatmul.mubr.bf16.gmra.mrb[0].mxu0 %v712
    %v2446 = vpop.f32.mrb[0].mxu0
    %v2447 = vadd.f32 %v2158, %v2446
    %v2448 = vpop.f32.mrb[0].mxu0
    %v2449 = vpop.f32.mrb[0].mxu0
    %v2450 = vadd.f32 %v2161, %v2449
    %v2451 = vpop.f32.mrb[0].mxu0
    %2452 = vmatprep.mubr.bf16.mxu0 %v449
    %2453 = vmatmul.mubr.bf16.gmra.mrb[0].mxu0 %v418
    %v2454 = vpop.f32.mrb[0].mxu0
    %v2455 = vadd.f32 %v2166, %v2454
    %v2456 = vpop.f32.mrb[0].mxu0
    %v2457 = vpop.f32.mrb[0].mxu0
    %v2458 = vadd.f32 %v2169, %v2457
    %v2459 = vpop.f32.mrb[0].mxu0
    %2460 = vdwg.mxu0
    %2461 = vmatprep.subr.bf16.mxu0 0
    %2462 = vmatpush1.bf16.msra.mxu0 %v1225
    %2463 = vmatprep.subr.bf16.mxu0 0
    %2464 = vmatpush1.bf16.msra.mxu0 %v1226
    %2465 = vmatprep.subr.bf16.mxu0 0
    %2466 = vmatpush1.bf16.msra.mxu0 %v1227
    %2467 = vmatprep.subr.bf16.mxu0 0
    %2468 = vmatpush1.bf16.msra.mxu0 %v1228
    %2469 = vmatprep.subr.bf16.mxu0 0
    %2470 = vmatpush1.bf16.msra.mxu0 %v1229
    %2471 = vmatprep.subr.bf16.mxu0 0
    %2472 = vmatpush1.bf16.msra.mxu0 %v1230
    %2473 = vmatprep.subr.bf16.mxu0 0
    %2474 = vmatpush1.bf16.msra.mxu0 %v1231
    %2475 = vmatprep.subr.bf16.mxu0 0
    %2476 = vmatpush1.bf16.msra.mxu0 %v1232
    %2477 = vmatprep.subr.bf16.mxu0 0
    %2478 = vmatpush1.bf16.msra.mxu0 0
    %2479 = vmatprep.subr.bf16.mxu0 0
    %2480 = vmatpush1.bf16.msra.mxu0 0
    %2481 = vmatprep.subr.bf16.mxu0 0
    %2482 = vmatpush1.bf16.msra.mxu0 0
    %2483 = vmatprep.subr.bf16.mxu0 0
    %2484 = vmatpush1.bf16.msra.mxu0 0
    %2485 = vmatprep.subr.bf16.mxu0 0
    %2486 = vmatpush1.bf16.msra.mxu0 0
    %2487 = vmatprep.subr.bf16.mxu0 0
    %2488 = vmatpush1.bf16.msra.mxu0 0
    %2489 = vmatprep.subr.bf16.mxu0 0
    %2490 = vmatpush1.bf16.msra.mxu0 0
    %2491 = vmatprep.subr.bf16.mxu0 0
    %2492 = vmatpush1.bf16.msra.mxu0 0
    %2493 = vmatprep.mubr.bf16.mxu0 0
    %2494 = vmatmul.mubr.bf16.gmra.mrb[0].mxu0 %v666
    %v2495 = vpop.f32.mrb[0].mxu0
    %v2496 = vadd.f32 %v2207, %v2495
    %v2497 = vpop.f32.mrb[0].mxu0
    %v2498 = vpop.f32.mrb[0].mxu0
    %v2499 = vadd.f32 %v2210, %v2498
    %v2500 = vpop.f32.mrb[0].mxu0
    %2501 = vmatprep.mubr.bf16.mxu0 0
    %2502 = vmatmul.mubr.bf16.gmra.mrb[0].mxu0 %v667
    %v2503 = vpop.f32.mrb[0].mxu0
    %v2504 = vadd.f32 %v2215, %v2503
    %v2505 = vpop.f32.mrb[0].mxu0
    %v2506 = vpop.f32.mrb[0].mxu0
    %v2507 = vadd.f32 %v2218, %v2506
    %v2508 = vpop.f32.mrb[0].mxu0
    %2509 = vmatprep.mubr.bf16.mxu0 0
    %2510 = vmatmul.mubr.bf16.gmra.mrb[0].mxu0 %v668
    %v2511 = vpop.f32.mrb[0].mxu0
    %v2512 = vadd.f32 %v2223, %v2511
    %v2513 = vpop.f32.mrb[0].mxu0
    %v2514 = vpop.f32.mrb[0].mxu0
    %v2515 = vadd.f32 %v2226, %v2514
    %v2516 = vpop.f32.mrb[0].mxu0
    %2517 = vmatprep.mubr.bf16.mxu0 0
    %2518 = vmatmul.mubr.bf16.gmra.mrb[0].mxu0 %v669
    %v2519 = vpop.f32.mrb[0].mxu0
    %v2520 = vadd.f32 %v2231, %v2519
    %v2521 = vpop.f32.mrb[0].mxu0
    %v2522 = vpop.f32.mrb[0].mxu0
    %v2523 = vadd.f32 %v2234, %v2522
    %v2524 = vpop.f32.mrb[0].mxu0
    %2525 = vmatprep.mubr.bf16.mxu0 0
    %2526 = vmatmul.mubr.bf16.gmra.mrb[0].mxu0 %v670
    %v2527 = vpop.f32.mrb[0].mxu0
    %v2528 = vadd.f32 %v2239, %v2527
    %v2529 = vpop.f32.mrb[0].mxu0
    %v2530 = vpop.f32.mrb[0].mxu0
    %v2531 = vadd.f32 %v2242, %v2530
    %v2532 = vpop.f32.mrb[0].mxu0
    %2533 = vmatprep.mubr.bf16.mxu0 0
    %2534 = vmatmul.mubr.bf16.gmra.mrb[0].mxu0 %v671
    %v2535 = vpop.f32.mrb[0].mxu0
    %v2536 = vadd.f32 %v2247, %v2535
    %v2537 = vpop.f32.mrb[0].mxu0
    %v2538 = vpop.f32.mrb[0].mxu0
    %v2539 = vadd.f32 %v2250, %v2538
    %v2540 = vpop.f32.mrb[0].mxu0
    %2541 = vmatprep.mubr.bf16.mxu0 0
    %2542 = vmatmul.mubr.bf16.gmra.mrb[0].mxu0 %v672
    %v2543 = vpop.f32.mrb[0].mxu0
    %v2544 = vadd.f32 %v2255, %v2543
    %v2545 = vpop.f32.mrb[0].mxu0
    %v2546 = vpop.f32.mrb[0].mxu0
    %v2547 = vadd.f32 %v2258, %v2546
    %v2548 = vpop.f32.mrb[0].mxu0
    %2549 = vmatprep.mubr.bf16.mxu0 0
    %2550 = vmatmul.mubr.bf16.gmra.mrb[0].mxu0 %v673
    %v2551 = vpop.f32.mrb[0].mxu0
    %v2552 = vadd.f32 %v2263, %v2551
    %v2553 = vpop.f32.mrb[0].mxu0
    %v2554 = vpop.f32.mrb[0].mxu0
    %v2555 = vadd.f32 %v2266, %v2554
    %v2556 = vpop.f32.mrb[0].mxu0
    %2557 = vmatprep.mubr.bf16.mxu0 0
    %2558 = vmatmul.mubr.bf16.gmra.mrb[0].mxu0 %v674
    %v2559 = vpop.f32.mrb[0].mxu0
    %v2560 = vadd.f32 %v2271, %v2559
    %v2561 = vpop.f32.mrb[0].mxu0
    %v2562 = vpop.f32.mrb[0].mxu0
    %v2563 = vadd.f32 %v2274, %v2562
    %v2564 = vpop.f32.mrb[0].mxu0
    %2565 = vmatprep.mubr.bf16.mxu0 0
    %2566 = vmatmul.mubr.bf16.gmra.mrb[0].mxu0 %v675
    %v2567 = vpop.f32.mrb[0].mxu0
    %v2568 = vadd.f32 %v2279, %v2567
    %v2569 = vpop.f32.mrb[0].mxu0
    %v2570 = vpop.f32.mrb[0].mxu0
    %v2571 = vadd.f32 %v2282, %v2570
    %v2572 = vpop.f32.mrb[0].mxu0
    %2573 = vmatprep.mubr.bf16.mxu0 0
    %2574 = vmatmul.mubr.bf16.gmra.mrb[0].mxu0 %v676
    %v2575 = vpop.f32.mrb[0].mxu0
    %v2576 = vadd.f32 %v2287, %v2575
    %v2577 = vpop.f32.mrb[0].mxu0
    %v2578 = vpop.f32.mrb[0].mxu0
    %v2579 = vadd.f32 %v2290, %v2578
    %v2580 = vpop.f32.mrb[0].mxu0
    %2581 = vmatprep.mubr.bf16.mxu0 0
    %2582 = vmatmul.mubr.bf16.gmra.mrb[0].mxu0 %v677
    %v2583 = vpop.f32.mrb[0].mxu0
    %v2584 = vadd.f32 %v2295, %v2583
    %v2585 = vpop.f32.mrb[0].mxu0
    %v2586 = vpop.f32.mrb[0].mxu0
    %v2587 = vadd.f32 %v2298, %v2586
    %v2588 = vpop.f32.mrb[0].mxu0
    %2589 = vmatprep.mubr.bf16.mxu0 0
    %2590 = vmatmul.mubr.bf16.gmra.mrb[0].mxu0 %v678
    %v2591 = vpop.f32.mrb[0].mxu0
    %v2592 = vadd.f32 %v2303, %v2591
    %v2593 = vpop.f32.mrb[0].mxu0
    %v2594 = vpop.f32.mrb[0].mxu0
    %v2595 = vadd.f32 %v2306, %v2594
    %v2596 = vpop.f32.mrb[0].mxu0
    %2597 = vmatprep.mubr.bf16.mxu0 0
    %2598 = vmatmul.mubr.bf16.gmra.mrb[0].mxu0 %v679
    %v2599 = vpop.f32.mrb[0].mxu0
    %v2600 = vadd.f32 %v2311, %v2599
    %v2601 = vpop.f32.mrb[0].mxu0
    %v2602 = vpop.f32.mrb[0].mxu0
    %v2603 = vadd.f32 %v2314, %v2602
    %v2604 = vpop.f32.mrb[0].mxu0
    %2605 = vmatprep.mubr.bf16.mxu0 0
    %2606 = vmatmul.mubr.bf16.gmra.mrb[0].mxu0 %v727
    %v2607 = vpop.f32.mrb[0].mxu0
    %v2608 = vadd.f32 %v2319, %v2607
    %v2609 = vpop.f32.mrb[0].mxu0
    %v2610 = vpop.f32.mrb[0].mxu0
    %v2611 = vadd.f32 %v2322, %v2610
    %v2612 = vpop.f32.mrb[0].mxu0
    %2613 = vmatprep.mubr.bf16.mxu0 0
    %2614 = vmatmul.mubr.bf16.gmra.mrb[0].mxu0 %v664
    %v2615 = vpop.f32.mrb[0].mxu0
    %v2616 = vadd.f32 %v2327, %v2615
    %v2617 = vpop.f32.mrb[0].mxu0
    %v2618 = vpop.f32.mrb[0].mxu0
    %v2619 = vadd.f32 %v2330, %v2618
    %v2620 = vpop.f32.mrb[0].mxu0
    %2621 = vmatprep.mubr.bf16.mxu0 0
    %2622 = vmatmul.mubr.bf16.gmra.mrb[0].mxu0 %v681
    %v2623 = vpop.f32.mrb[0].mxu0
    %v2624 = vadd.f32 %v2335, %v2623
    %v2625 = vpop.f32.mrb[0].mxu0
    %v2626 = vpop.f32.mrb[0].mxu0
    %v2627 = vadd.f32 %v2338, %v2626
    %v2628 = vpop.f32.mrb[0].mxu0
    %2629 = vmatprep.mubr.bf16.mxu0 0
    %2630 = vmatmul.mubr.bf16.gmra.mrb[0].mxu0 %v682
    %v2631 = vpop.f32.mrb[0].mxu0
    %v2632 = vadd.f32 %v2343, %v2631
    %v2633 = vpop.f32.mrb[0].mxu0
    %v2634 = vpop.f32.mrb[0].mxu0
    %v2635 = vadd.f32 %v2346, %v2634
    %v2636 = vpop.f32.mrb[0].mxu0
    %2637 = vmatprep.mubr.bf16.mxu0 0
    %2638 = vmatmul.mubr.bf16.gmra.mrb[0].mxu0 %v683
    %v2639 = vpop.f32.mrb[0].mxu0
    %v2640 = vadd.f32 %v2351, %v2639
    %v2641 = vpop.f32.mrb[0].mxu0
    %v2642 = vpop.f32.mrb[0].mxu0
    %v2643 = vadd.f32 %v2354, %v2642
    %v2644 = vpop.f32.mrb[0].mxu0
    %2645 = vmatprep.mubr.bf16.mxu0 0
    %2646 = vmatmul.mubr.bf16.gmra.mrb[0].mxu0 %v684
    %v2647 = vpop.f32.mrb[0].mxu0
    %v2648 = vadd.f32 %v2359, %v2647
    %v2649 = vpop.f32.mrb[0].mxu0
    %v2650 = vpop.f32.mrb[0].mxu0
    %v2651 = vadd.f32 %v2362, %v2650
    %v2652 = vpop.f32.mrb[0].mxu0
    %2653 = vmatprep.mubr.bf16.mxu0 0
    %2654 = vmatmul.mubr.bf16.gmra.mrb[0].mxu0 %v685
    %v2655 = vpop.f32.mrb[0].mxu0
    %v2656 = vadd.f32 %v2367, %v2655
    %v2657 = vpop.f32.mrb[0].mxu0
    %v2658 = vpop.f32.mrb[0].mxu0
    %v2659 = vadd.f32 %v2370, %v2658
    %v2660 = vpop.f32.mrb[0].mxu0
    %2661 = vmatprep.mubr.bf16.mxu0 0
    %2662 = vmatmul.mubr.bf16.gmra.mrb[0].mxu0 %v686
    %v2663 = vpop.f32.mrb[0].mxu0
    %v2664 = vadd.f32 %v2375, %v2663
    %v2665 = vpop.f32.mrb[0].mxu0
    %v2666 = vpop.f32.mrb[0].mxu0
    %v2667 = vadd.f32 %v2378, %v2666
    %v2668 = vpop.f32.mrb[0].mxu0
    %2669 = vmatprep.mubr.bf16.mxu0 0
    %2670 = vmatmul.mubr.bf16.gmra.mrb[0].mxu0 %v687
    %v2671 = vpop.f32.mrb[0].mxu0
    %v2672 = vadd.f32 %v2383, %v2671
    %v2673 = vpop.f32.mrb[0].mxu0
    %v2674 = vpop.f32.mrb[0].mxu0
    %v2675 = vadd.f32 %v2386, %v2674
    %v2676 = vpop.f32.mrb[0].mxu0
    %2677 = vmatprep.mubr.bf16.mxu0 0
    %2678 = vmatmul.mubr.bf16.gmra.mrb[0].mxu0 %v688
    %v2679 = vpop.f32.mrb[0].mxu0
    %v2680 = vadd.f32 %v2391, %v2679
    %v2681 = vpop.f32.mrb[0].mxu0
    %v2682 = vpop.f32.mrb[0].mxu0
    %v2683 = vadd.f32 %v2394, %v2682
    %v2684 = vpop.f32.mrb[0].mxu0
    %2685 = vmatprep.mubr.bf16.mxu0 0
    %2686 = vmatmul.mubr.bf16.gmra.mrb[0].mxu0 %v689
    %v2687 = vpop.f32.mrb[0].mxu0
    %v2688 = vadd.f32 %v2399, %v2687
    %v2689 = vpop.f32.mrb[0].mxu0
    %v2690 = vpop.f32.mrb[0].mxu0
    %v2691 = vadd.f32 %v2402, %v2690
    %v2692 = vpop.f32.mrb[0].mxu0
    %2693 = vmatprep.mubr.bf16.mxu0 0
    %2694 = vmatmul.mubr.bf16.gmra.mrb[0].mxu0 %v690
    %v2695 = vpop.f32.mrb[0].mxu0
    %v2696 = vadd.f32 %v2407, %v2695
    %v2697 = vpop.f32.mrb[0].mxu0
    %v2698 = vpop.f32.mrb[0].mxu0
    %v2699 = vadd.f32 %v2410, %v2698
    %v2700 = vpop.f32.mrb[0].mxu0
    %2701 = vmatprep.mubr.bf16.mxu0 0
    %2702 = vmatmul.mubr.bf16.gmra.mrb[0].mxu0 %v691
    %v2703 = vpop.f32.mrb[0].mxu0
    %v2704 = vadd.f32 %v2415, %v2703
    %v2705 = vpop.f32.mrb[0].mxu0
    %v2706 = vpop.f32.mrb[0].mxu0
    %v2707 = vadd.f32 %v2418, %v2706
    %v2708 = vpop.f32.mrb[0].mxu0
    %2709 = vmatprep.mubr.bf16.mxu0 0
    %2710 = vmatmul.mubr.bf16.gmra.mrb[0].mxu0 %v692
    %v2711 = vpop.f32.mrb[0].mxu0
    %v2712 = vadd.f32 %v2423, %v2711
    %v2713 = vpop.f32.mrb[0].mxu0
    %v2714 = vpop.f32.mrb[0].mxu0
    %v2715 = vadd.f32 %v2426, %v2714
    %v2716 = vpop.f32.mrb[0].mxu0
    %2717 = vmatprep.mubr.bf16.mxu0 0
    %2718 = vmatmul.mubr.bf16.gmra.mrb[0].mxu0 %v693
    %v2719 = vpop.f32.mrb[0].mxu0
    %v2720 = vadd.f32 %v2431, %v2719
    %v2721 = vpop.f32.mrb[0].mxu0
    %v2722 = vpop.f32.mrb[0].mxu0
    %v2723 = vadd.f32 %v2434, %v2722
    %v2724 = vpop.f32.mrb[0].mxu0
    %2725 = vmatprep.mubr.bf16.mxu0 0
    %2726 = vmatmul.mubr.bf16.gmra.mrb[0].mxu0 %v694
    %v2727 = vpop.f32.mrb[0].mxu0
    %v2728 = vadd.f32 %v2439, %v2727
    %v2729 = vpop.f32.mrb[0].mxu0
    %v2730 = vpop.f32.mrb[0].mxu0
    %v2731 = vadd.f32 %v2442, %v2730
    %v2732 = vpop.f32.mrb[0].mxu0
    %2733 = vmatprep.mubr.bf16.mxu0 0
    %2734 = vmatmul.mubr.bf16.gmra.mrb[0].mxu0 %v728
    %v2735 = vpop.f32.mrb[0].mxu0
    %v2736 = vadd.f32 %v2447, %v2735
    %v2737 = vpop.f32.mrb[0].mxu0
    %v2738 = vpop.f32.mrb[0].mxu0
    %v2739 = vadd.f32 %v2450, %v2738
    %v2740 = vpop.f32.mrb[0].mxu0
    %2741 = vmatprep.mubr.bf16.mxu0 0
    %2742 = vmatmul.mubr.bf16.gmra.mrb[0].mxu0 %v664
    %v2743 = vpop.f32.mrb[0].mxu0
    %v2744 = vadd.f32 %v2455, %v2743
    %v2745 = vpop.f32.mrb[0].mxu0
    %v2746 = vpop.f32.mrb[0].mxu0
    %v2747 = vadd.f32 %v2458, %v2746
    %v2748 = vpop.f32.mrb[0].mxu0
    %2749 = vdwg.mxu0
    %v2750 = vadd.f32 %v2496, %v2499
    %v2751 = vadd.f32 %v2750, %v2504
    %v2752 = vadd.f32 %v2751, %v2507
    %v2753 = vadd.f32 %v2752, %v2512
    %v2754 = vadd.f32 %v2753, %v2515
    %v2755 = vadd.f32 %v2754, %v2520
    %v2756 = vadd.f32 %v2755, %v2523
    %v2757 = vadd.f32 %v2756, %v2528
    %v2758 = vadd.f32 %v2757, %v2531
    %v2759 = vadd.f32 %v2758, %v2536
    %v2760 = vadd.f32 %v2759, %v2539
    %v2761 = vadd.f32 %v2760, %v2544
    %v2762 = vadd.f32 %v2761, %v2547
    %v2763 = vadd.f32 %v2762, %v2552
    %v2764 = vadd.f32 %v2763, %v2555
    %v2765 = vadd.f32 %v2764, %v2560
    %v2766 = vadd.f32 %v2765, %v2563
    %v2767 = vadd.f32 %v2766, %v2568
    %v2768 = vadd.f32 %v2767, %v2571
    %v2769 = vadd.f32 %v2768, %v2576
    %v2770 = vadd.f32 %v2769, %v2579
    %v2771 = vadd.f32 %v2770, %v2584
    %v2772 = vadd.f32 %v2771, %v2587
    %v2773 = vadd.f32 %v2772, %v2592
    %v2774 = vadd.f32 %v2773, %v2595
    %v2775 = vadd.f32 %v2774, %v2600
    %v2776 = vadd.f32 %v2775, %v2603
    %v2777 = vadd.f32 %v2776, %v2608
    %v2778 = vadd.f32 %v2777, %v2611
    %v2779 = vadd.f32 %v2778, %v2616
    %v2780 = vadd.f32 %v2779, %v2619
    %v2781 = vadd.f32 %v2780, %v2624
    %v2782 = vadd.f32 %v2781, %v2627
    %v2783 = vadd.f32 %v2782, %v2632
    %v2784 = vadd.f32 %v2783, %v2635
    %v2785 = vadd.f32 %v2784, %v2640
    %v2786 = vadd.f32 %v2785, %v2643
    %v2787 = vadd.f32 %v2786, %v2648
    %v2788 = vadd.f32 %v2787, %v2651
    %v2789 = vadd.f32 %v2788, %v2656
    %v2790 = vadd.f32 %v2789, %v2659
    %v2791 = vadd.f32 %v2790, %v2664
    %v2792 = vadd.f32 %v2791, %v2667
    %v2793 = vadd.f32 %v2792, %v2672
    %v2794 = vadd.f32 %v2793, %v2675
    %v2795 = vadd.f32 %v2794, %v2680
    %v2796 = vadd.f32 %v2795, %v2683
    %v2797 = vadd.f32 %v2796, %v2688
    %v2798 = vadd.f32 %v2797, %v2691
    %v2799 = vadd.f32 %v2798, %v2696
    %v2800 = vadd.f32 %v2799, %v2699
    %v2801 = vadd.f32 %v2800, %v2704
    %v2802 = vadd.f32 %v2801, %v2707
    %v2803 = vadd.f32 %v2802, %v2712
    %v2804 = vadd.f32 %v2803, %v2715
    %v2805 = vadd.f32 %v2804, %v2720
    %v2806 = vadd.f32 %v2805, %v2723
    %v2807 = vadd.f32 %v2806, %v2728
    %v2808 = vadd.f32 %v2807, %v2731
    %v2809 = vadd.f32 %v2808, %v2736
    %v2810 = vadd.f32 %v2809, %v2739
    %v2811 = vadd.f32 %v2810, %v2744
    %v2812 = vadd.f32 %v2811, %v2747
    %v2813 = vrot.slane %v2812, 4
    %v2814 = vadd.f32 %v2812, %v2813
    %v2815 = vrot.slane %v2814, 2
    %v2816 = vadd.f32 %v2814, %v2815
    %v2817 = vrot.slane %v2816, 1
    %v2818 = vadd.f32 %v2816, %v2817
    %2819 = vst [vmem:[#allocation8] sm:$0x1] %v2818
    %v2820 = vmul.f32 %v2496, %v2496
    %v2821 = vmul.f32 %v2499, %v2499
    %v2822 = vmul.f32 %v2504, %v2504
    %v2823 = vmul.f32 %v2507, %v2507
    %v2824 = vmul.f32 %v2512, %v2512
    %v2825 = vmul.f32 %v2515, %v2515
    %v2826 = vmul.f32 %v2520, %v2520
    %v2827 = vmul.f32 %v2523, %v2523
    %v2828 = vmul.f32 %v2528, %v2528
    %v2829 = vmul.f32 %v2531, %v2531
    %v2830 = vmul.f32 %v2536, %v2536
    %v2831 = vmul.f32 %v2539, %v2539
    %v2832 = vmul.f32 %v2544, %v2544
    %v2833 = vmul.f32 %v2547, %v2547
    %v2834 = vmul.f32 %v2552, %v2552
    %v2835 = vmul.f32 %v2555, %v2555
    %v2836 = vmul.f32 %v2560, %v2560
    %v2837 = vmul.f32 %v2563, %v2563
    %v2838 = vmul.f32 %v2568, %v2568
    %v2839 = vmul.f32 %v2571, %v2571
    %v2840 = vmul.f32 %v2576, %v2576
    %v2841 = vmul.f32 %v2579, %v2579
    %v2842 = vmul.f32 %v2584, %v2584
    %v2843 = vmul.f32 %v2587, %v2587
    %v2844 = vmul.f32 %v2592, %v2592
    %v2845 = vmul.f32 %v2595, %v2595
    %v2846 = vmul.f32 %v2600, %v2600
    %v2847 = vmul.f32 %v2603, %v2603
    %v2848 = vmul.f32 %v2608, %v2608
    %v2849 = vmul.f32 %v2611, %v2611
    %v2850 = vmul.f32 %v2616, %v2616
    %v2851 = vmul.f32 %v2619, %v2619
    %v2852 = vmul.f32 %v2624, %v2624
    %v2853 = vmul.f32 %v2627, %v2627
    %v2854 = vmul.f32 %v2632, %v2632
    %v2855 = vmul.f32 %v2635, %v2635
    %v2856 = vmul.f32 %v2640, %v2640
    %v2857 = vmul.f32 %v2643, %v2643
    %v2858 = vmul.f32 %v2648, %v2648
    %v2859 = vmul.f32 %v2651, %v2651
    %v2860 = vmul.f32 %v2656, %v2656
    %v2861 = vmul.f32 %v2659, %v2659
    %v2862 = vmul.f32 %v2664, %v2664
    %v2863 = vmul.f32 %v2667, %v2667
    %v2864 = vmul.f32 %v2672, %v2672
    %v2865 = vmul.f32 %v2675, %v2675
    %v2866 = vmul.f32 %v2680, %v2680
    %v2867 = vmul.f32 %v2683, %v2683
    %v2868 = vmul.f32 %v2688, %v2688
    %v2869 = vmul.f32 %v2691, %v2691
    %v2870 = vmul.f32 %v2696, %v2696
    %v2871 = vmul.f32 %v2699, %v2699
    %v2872 = vmul.f32 %v2704, %v2704
    %v2873 = vmul.f32 %v2707, %v2707
    %v2874 = vmul.f32 %v2712, %v2712
    %v2875 = vmul.f32 %v2715, %v2715
    %v2876 = vmul.f32 %v2720, %v2720
    %v2877 = vmul.f32 %v2723, %v2723
    %v2878 = vmul.f32 %v2728, %v2728
    %v2879 = vmul.f32 %v2731, %v2731
    %v2880 = vmul.f32 %v2736, %v2736
    %v2881 = vmul.f32 %v2739, %v2739
    %v2882 = vmul.f32 %v2744, %v2744
    %v2883 = vmul.f32 %v2747, %v2747
    %v2884 = vadd.f32 %v2820, %v2821
    %v2885 = vadd.f32 %v2884, %v2822
    %v2886 = vadd.f32 %v2885, %v2823
    %v2887 = vadd.f32 %v2886, %v2824
    %v2888 = vadd.f32 %v2887, %v2825
    %v2889 = vadd.f32 %v2888, %v2826
    %v2890 = vadd.f32 %v2889, %v2827
    %v2891 = vadd.f32 %v2890, %v2828
    %v2892 = vadd.f32 %v2891, %v2829
    %v2893 = vadd.f32 %v2892, %v2830
    %v2894 = vadd.f32 %v2893, %v2831
    %v2895 = vadd.f32 %v2894, %v2832
    %v2896 = vadd.f32 %v2895, %v2833
    %v2897 = vadd.f32 %v2896, %v2834
    %v2898 = vadd.f32 %v2897, %v2835
    %v2899 = vadd.f32 %v2898, %v2836
    %v2900 = vadd.f32 %v2899, %v2837
    %v2901 = vadd.f32 %v2900, %v2838
    %v2902 = vadd.f32 %v2901, %v2839
    %v2903 = vadd.f32 %v2902, %v2840
    %v2904 = vadd.f32 %v2903, %v2841
    %v2905 = vadd.f32 %v2904, %v2842
    %v2906 = vadd.f32 %v2905, %v2843
    %v2907 = vadd.f32 %v2906, %v2844
    %v2908 = vadd.f32 %v2907, %v2845
    %v2909 = vadd.f32 %v2908, %v2846
    %v2910 = vadd.f32 %v2909, %v2847
    %v2911 = vadd.f32 %v2910, %v2848
    %v2912 = vadd.f32 %v2911, %v2849
    %v2913 = vadd.f32 %v2912, %v2850
    %v2914 = vadd.f32 %v2913, %v2851
    %v2915 = vadd.f32 %v2914, %v2852
    %v2916 = vadd.f32 %v2915, %v2853
    %v2917 = vadd.f32 %v2916, %v2854
    %v2918 = vadd.f32 %v2917, %v2855
    %v2919 = vadd.f32 %v2918, %v2856
    %v2920 = vadd.f32 %v2919, %v2857
    %v2921 = vadd.f32 %v2920, %v2858
    %v2922 = vadd.f32 %v2921, %v2859
    %v2923 = vadd.f32 %v2922, %v2860
    %v2924 = vadd.f32 %v2923, %v2861
    %v2925 = vadd.f32 %v2924, %v2862
    %v2926 = vadd.f32 %v2925, %v2863
    %v2927 = vadd.f32 %v2926, %v2864
    %v2928 = vadd.f32 %v2927, %v2865
    %v2929 = vadd.f32 %v2928, %v2866
    %v2930 = vadd.f32 %v2929, %v2867
    %v2931 = vadd.f32 %v2930, %v2868
    %v2932 = vadd.f32 %v2931, %v2869
    %v2933 = vadd.f32 %v2932, %v2870
    %v2934 = vadd.f32 %v2933, %v2871
    %v2935 = vadd.f32 %v2934, %v2872
    %v2936 = vadd.f32 %v2935, %v2873
    %v2937 = vadd.f32 %v2936, %v2874
    %v2938 = vadd.f32 %v2937, %v2875
    %v2939 = vadd.f32 %v2938, %v2876
    %v2940 = vadd.f32 %v2939, %v2877
    %v2941 = vadd.f32 %v2940, %v2878
    %v2942 = vadd.f32 %v2941, %v2879
    %v2943 = vadd.f32 %v2942, %v2880
    %v2944 = vadd.f32 %v2943, %v2881
    %v2945 = vadd.f32 %v2944, %v2882
    %v2946 = vadd.f32 %v2945, %v2883
    %v2947 = vrot.slane %v2946, 4
    %v2948 = vadd.f32 %v2946, %v2947
    %v2949 = vrot.slane %v2948, 2
    %v2950 = vadd.f32 %v2948, %v2949
    %v2951 = vrot.slane %v2950, 1
    %v2952 = vadd.f32 %v2950, %v2951
    %2953 = vst [vmem:[#allocation10] sm:$0x1] %v2952
    %v2954 = vpack.c.bf16 %v2499, %v2496
    %v2955 = vpack.c.bf16 %v2507, %v2504
    %v2956 = vpack.c.bf16 %v2515, %v2512
    %v2957 = vpack.c.bf16 %v2523, %v2520
    %v2958 = vpack.c.bf16 %v2531, %v2528
    %v2959 = vpack.c.bf16 %v2539, %v2536
    %v2960 = vpack.c.bf16 %v2547, %v2544
    %v2961 = vpack.c.bf16 %v2555, %v2552
    %v2962 = vpack.c.bf16 %v2563, %v2560
    %v2963 = vpack.c.bf16 %v2571, %v2568
    %v2964 = vpack.c.bf16 %v2579, %v2576
    %v2965 = vpack.c.bf16 %v2587, %v2584
    %v2966 = vpack.c.bf16 %v2595, %v2592
    %v2967 = vpack.c.bf16 %v2603, %v2600
    %v2968 = vpack.c.bf16 %v2611, %v2608
    %v2969 = vpack.c.bf16 %v2619, %v2616
    %v2970 = vpack.c.bf16 %v2627, %v2624
    %v2971 = vpack.c.bf16 %v2635, %v2632
    %v2972 = vpack.c.bf16 %v2643, %v2640
    %v2973 = vpack.c.bf16 %v2651, %v2648
    %v2974 = vpack.c.bf16 %v2659, %v2656
    %v2975 = vpack.c.bf16 %v2667, %v2664
    %v2976 = vpack.c.bf16 %v2675, %v2672
    %v2977 = vpack.c.bf16 %v2683, %v2680
    %v2978 = vpack.c.bf16 %v2691, %v2688
    %v2979 = vpack.c.bf16 %v2699, %v2696
    %v2980 = vpack.c.bf16 %v2707, %v2704
    %v2981 = vpack.c.bf16 %v2715, %v2712
    %v2982 = vpack.c.bf16 %v2723, %v2720
    %v2983 = vpack.c.bf16 %v2731, %v2728
    %v2984 = vpack.c.bf16 %v2739, %v2736
    %v2985 = vpack.c.bf16 %v2747, %v2744
    %v3018 = vunpack.c.l.b16 %v2954
    %v3019 = vunpack.c.h.b16 %v2954
    %v3020 = vunpack.c.l.b16 %v2955
    %v3021 = vunpack.c.h.b16 %v2955
    %v3022 = vunpack.c.l.b16 %v2956
    %v3023 = vunpack.c.h.b16 %v2956
    %v3024 = vunpack.c.l.b16 %v2957
    %v3025 = vunpack.c.h.b16 %v2957
    %v3026 = vunpack.c.l.b16 %v2958
    %v3027 = vunpack.c.h.b16 %v2958
    %v3028 = vunpack.c.l.b16 %v2959
    %v3029 = vunpack.c.h.b16 %v2959
    %v3030 = vunpack.c.l.b16 %v2960
    %v3031 = vunpack.c.h.b16 %v2960
    %v3032 = vunpack.c.l.b16 %v2961
    %v3033 = vunpack.c.h.b16 %v2961
    %v3034 = vunpack.c.l.b16 %v2962
    %v3035 = vunpack.c.h.b16 %v2962
    %v3036 = vunpack.c.l.b16 %v2963
    %v3037 = vunpack.c.h.b16 %v2963
    %v3038 = vunpack.c.l.b16 %v2964
    %v3039 = vunpack.c.h.b16 %v2964
    %v3040 = vunpack.c.l.b16 %v2965
    %v3041 = vunpack.c.h.b16 %v2965
    %v3042 = vunpack.c.l.b16 %v2966
    %v3043 = vunpack.c.h.b16 %v2966
    %v3044 = vunpack.c.l.b16 %v2967
    %v3045 = vunpack.c.h.b16 %v2967
    %v3046 = vunpack.c.l.b16 %v2968
    %v3047 = vunpack.c.h.b16 %v2968
    %v3048 = vunpack.c.l.b16 %v2969
    %v3049 = vunpack.c.h.b16 %v2969
    %v3050 = vunpack.c.l.b16 %v2970
    %v3051 = vunpack.c.h.b16 %v2970
    %v3052 = vunpack.c.l.b16 %v2971
    %v3053 = vunpack.c.h.b16 %v2971
    %v3054 = vunpack.c.l.b16 %v2972
    %v3055 = vunpack.c.h.b16 %v2972
    %v3056 = vunpack.c.l.b16 %v2973
    %v3057 = vunpack.c.h.b16 %v2973
    %v3058 = vunpack.c.l.b16 %v2974
    %v3059 = vunpack.c.h.b16 %v2974
    %v3060 = vunpack.c.l.b16 %v2975
    %v3061 = vunpack.c.h.b16 %v2975
    %v3062 = vunpack.c.l.b16 %v2976
    %v3063 = vunpack.c.h.b16 %v2976
    %v3064 = vunpack.c.l.b16 %v2977
    %v3065 = vunpack.c.h.b16 %v2977
    %v3066 = vunpack.c.l.b16 %v2978
    %v3067 = vunpack.c.h.b16 %v2978
    %v3068 = vunpack.c.l.b16 %v2979
    %v3069 = vunpack.c.h.b16 %v2979
    %v3070 = vunpack.c.l.b16 %v2980
    %v3071 = vunpack.c.h.b16 %v2980
    %v3072 = vunpack.c.l.b16 %v2981
    %v3073 = vunpack.c.h.b16 %v2981
    %v3074 = vunpack.c.l.b16 %v2982
    %v3075 = vunpack.c.h.b16 %v2982
    %v3076 = vunpack.c.l.b16 %v2983
    %v3077 = vunpack.c.h.b16 %v2983
    %v3078 = vunpack.c.l.b16 %v2984
    %v3079 = vunpack.c.h.b16 %v2984
    %v3080 = vunpack.c.l.b16 %v2985
    %v3081 = vunpack.c.h.b16 %v2985
    %v3082 = vpack.c.b16 %v3018, %v3018
    %v3083 = vpack.c.b16 %v3019, %v3019
    %v3084 = vpack.c.b16 %v3020, %v3020
    %v3085 = vpack.c.b16 %v3021, %v3021
    %v3086 = vpack.c.b16 %v3022, %v3022
    %v3087 = vpack.c.b16 %v3023, %v3023
    %v3088 = vpack.c.b16 %v3024, %v3024
    %v3089 = vpack.c.b16 %v3025, %v3025
    %v3090 = vpack.c.b16 %v3026, %v3026
    %v3091 = vpack.c.b16 %v3027, %v3027
    %v3092 = vpack.c.b16 %v3028, %v3028
    %v3093 = vpack.c.b16 %v3029, %v3029
    %v3094 = vpack.c.b16 %v3030, %v3030
    %v3095 = vpack.c.b16 %v3031, %v3031
    %v3096 = vpack.c.b16 %v3032, %v3032
    %v3097 = vpack.c.b16 %v3033, %v3033
    %v3098 = vpack.c.b16 %v3034, %v3034
    %v3099 = vpack.c.b16 %v3035, %v3035
    %v3100 = vpack.c.b16 %v3036, %v3036
    %v3101 = vpack.c.b16 %v3037, %v3037
    %v3102 = vpack.c.b16 %v3038, %v3038
    %v3103 = vpack.c.b16 %v3039, %v3039
    %v3104 = vpack.c.b16 %v3040, %v3040
    %v3105 = vpack.c.b16 %v3041, %v3041
    %v3106 = vpack.c.b16 %v3042, %v3042
    %v3107 = vpack.c.b16 %v3043, %v3043
    %v3108 = vpack.c.b16 %v3044, %v3044
    %v3109 = vpack.c.b16 %v3045, %v3045
    %v3110 = vpack.c.b16 %v3046, %v3046
    %v3111 = vpack.c.b16 %v3047, %v3047
    %v3112 = vpack.c.b16 %v3048, %v3048
    %v3113 = vpack.c.b16 %v3049, %v3049
    %v3114 = vpack.c.b16 %v3050, %v3050
    %v3115 = vpack.c.b16 %v3051, %v3051
    %v3116 = vpack.c.b16 %v3052, %v3052
    %v3117 = vpack.c.b16 %v3053, %v3053
    %v3118 = vpack.c.b16 %v3054, %v3054
    %v3119 = vpack.c.b16 %v3055, %v3055
    %v3120 = vpack.c.b16 %v3056, %v3056
    %v3121 = vpack.c.b16 %v3057, %v3057
    %v3122 = vpack.c.b16 %v3058, %v3058
    %v3123 = vpack.c.b16 %v3059, %v3059
    %v3124 = vpack.c.b16 %v3060, %v3060
    %v3125 = vpack.c.b16 %v3061, %v3061
    %v3126 = vpack.c.b16 %v3062, %v3062
    %v3127 = vpack.c.b16 %v3063, %v3063
    %v3128 = vpack.c.b16 %v3064, %v3064
    %v3129 = vpack.c.b16 %v3065, %v3065
    %v3130 = vpack.c.b16 %v3066, %v3066
    %v3131 = vpack.c.b16 %v3067, %v3067
    %v3132 = vpack.c.b16 %v3068, %v3068
    %v3133 = vpack.c.b16 %v3069, %v3069
    %v3134 = vpack.c.b16 %v3070, %v3070
    %v3135 = vpack.c.b16 %v3071, %v3071
    %v3136 = vpack.c.b16 %v3072, %v3072
    %v3137 = vpack.c.b16 %v3073, %v3073
    %v3138 = vpack.c.b16 %v3074, %v3074
    %v3139 = vpack.c.b16 %v3075, %v3075
    %v3140 = vpack.c.b16 %v3076, %v3076
    %v3141 = vpack.c.b16 %v3077, %v3077
    %v3142 = vpack.c.b16 %v3078, %v3078
    %v3143 = vpack.c.b16 %v3079, %v3079
    %v3144 = vpack.c.b16 %v3080, %v3080
    %v3145 = vpack.c.b16 %v3081, %v3081
    %3210 = vst [vmem:[#allocation7] sm:$0xf] %v3082
    %3211 = vst [vmem:[#allocation7 + $0x4] sm:$0xf] %v3083
    %3212 = vst [vmem:[#allocation7 + $0x8] sm:$0xf] %v3084
    %3213 = vst [vmem:[#allocation7 + $0xc] sm:$0xf] %v3085
    %3214 = vst [vmem:[#allocation7 + $0x10] sm:$0xf] %v3086
    %3215 = vst [vmem:[#allocation7 + $0x14] sm:$0xf] %v3087
    %3216 = vst [vmem:[#allocation7 + $0x18] sm:$0xf] %v3088
    %3217 = vst [vmem:[#allocation7 + $0x1c] sm:$0xf] %v3089
    %3218 = vst [vmem:[#allocation7 + $0x20] sm:$0xf] %v3090
    %3219 = vst [vmem:[#allocation7 + $0x24] sm:$0xf] %v3091
    %3220 = vst [vmem:[#allocation7 + $0x28] sm:$0xf] %v3092
    %3221 = vst [vmem:[#allocation7 + $0x2c] sm:$0xf] %v3093
    %3222 = vst [vmem:[#allocation7 + $0x30] sm:$0xf] %v3094
    %3223 = vst [vmem:[#allocation7 + $0x34] sm:$0xf] %v3095
    %3224 = vst [vmem:[#allocation7 + $0x38] sm:$0xf] %v3096
    %3225 = vst [vmem:[#allocation7 + $0x3c] sm:$0xf] %v3097
    %3226 = vst [vmem:[#allocation7 + $0x40] sm:$0xf] %v3098
    %3227 = vst [vmem:[#allocation7 + $0x44] sm:$0xf] %v3099
    %3228 = vst [vmem:[#allocation7 + $0x48] sm:$0xf] %v3100
    %3229 = vst [vmem:[#allocation7 + $0x4c] sm:$0xf] %v3101
    %3230 = vst [vmem:[#allocation7 + $0x50] sm:$0xf] %v3102
    %3231 = vst [vmem:[#allocation7 + $0x54] sm:$0xf] %v3103
    %3232 = vst [vmem:[#allocation7 + $0x58] sm:$0xf] %v3104
    %3233 = vst [vmem:[#allocation7 + $0x5c] sm:$0xf] %v3105
    %3234 = vst [vmem:[#allocation7 + $0x60] sm:$0xf] %v3106
    %3235 = vst [vmem:[#allocation7 + $0x64] sm:$0xf] %v3107
    %3236 = vst [vmem:[#allocation7 + $0x68] sm:$0xf] %v3108
    %3237 = vst [vmem:[#allocation7 + $0x6c] sm:$0xf] %v3109
    %3238 = vst [vmem:[#allocation7 + $0x70] sm:$0xf] %v3110
    %3239 = vst [vmem:[#allocation7 + $0x74] sm:$0xf] %v3111
    %3240 = vst [vmem:[#allocation7 + $0x78] sm:$0xf] %v3112
    %3241 = vst [vmem:[#allocation7 + $0x7c] sm:$0xf] %v3113
    %3242 = vst [vmem:[#allocation7 + $0x80] sm:$0xf] %v3114
    %3243 = vst [vmem:[#allocation7 + $0x84] sm:$0xf] %v3115
    %3244 = vst [vmem:[#allocation7 + $0x88] sm:$0xf] %v3116
    %3245 = vst [vmem:[#allocation7 + $0x8c] sm:$0xf] %v3117
    %3246 = vst [vmem:[#allocation7 + $0x90] sm:$0xf] %v3118
    %3247 = vst [vmem:[#allocation7 + $0x94] sm:$0xf] %v3119
    %3248 = vst [vmem:[#allocation7 + $0x98] sm:$0xf] %v3120
    %3249 = vst [vmem:[#allocation7 + $0x9c] sm:$0xf] %v3121
    %3250 = vst [vmem:[#allocation7 + $0xa0] sm:$0xf] %v3122
    %3251 = vst [vmem:[#allocation7 + $0xa4] sm:$0xf] %v3123
    %3252 = vst [vmem:[#allocation7 + $0xa8] sm:$0xf] %v3124
    %3253 = vst [vmem:[#allocation7 + $0xac] sm:$0xf] %v3125
    %3254 = vst [vmem:[#allocation7 + $0xb0] sm:$0xf] %v3126
    %3255 = vst [vmem:[#allocation7 + $0xb4] sm:$0xf] %v3127
    %3256 = vst [vmem:[#allocation7 + $0xb8] sm:$0xf] %v3128
    %3257 = vst [vmem:[#allocation7 + $0xbc] sm:$0xf] %v3129
    %3258 = vst [vmem:[#allocation7 + $0xc0] sm:$0xf] %v3130
    %3259 = vst [vmem:[#allocation7 + $0xc4] sm:$0xf] %v3131
    %3260 = vst [vmem:[#allocation7 + $0xc8] sm:$0xf] %v3132
    %3261 = vst [vmem:[#allocation7 + $0xcc] sm:$0xf] %v3133
    %3262 = vst [vmem:[#allocation7 + $0xd0] sm:$0xf] %v3134
    %3263 = vst [vmem:[#allocation7 + $0xd4] sm:$0xf] %v3135
    %3264 = vst [vmem:[#allocation7 + $0xd8] sm:$0xf] %v3136
    %3265 = vst [vmem:[#allocation7 + $0xdc] sm:$0xf] %v3137
    %3266 = vst [vmem:[#allocation7 + $0xe0] sm:$0xf] %v3138
    %3267 = vst [vmem:[#allocation7 + $0xe4] sm:$0xf] %v3139
    %3268 = vst [vmem:[#allocation7 + $0xe8] sm:$0xf] %v3140
    %3269 = vst [vmem:[#allocation7 + $0xec] sm:$0xf] %v3141
    %3270 = vst [vmem:[#allocation7 + $0xf0] sm:$0xf] %v3142
    %3271 = vst [vmem:[#allocation7 + $0xf4] sm:$0xf] %v3143
    %3272 = vst [vmem:[#allocation7 + $0xf8] sm:$0xf] %v3144
    %3273 = vst [vmem:[#allocation7 + $0xfc] sm:$0xf] %v3145
    // Predicated region
    $region18: #{tpu_custom_call.1} parent=1 // pred_check
      _
    $region19: #{tpu_custom_call.1} parent=1 // pred_check_branch
      %3275 = sbr.rel (0) target = $region21
    $region20: #{tpu_custom_call.1} parent=1 // pred_region
      %s3277 = ssub.s32 4096, 4096
      %3278 = vsyncadd [#allocation4], %s3277
      %s3279 = sshll.u32 [#allocation7], 4
      %s3280 = int_to_ptr.vmem [resolvable:$true] %s3279
      %3285 = dma.vmem_to_hbm [thread:$0]  %s3280, 4096, %s2, [#allocation4], 64, 64, 4
    $region21: #{tpu_custom_call.1} parent=1 // pred_fallthru
      _
    // Predicated region
    $region22: #{tpu_custom_call.1} parent=1 // pred_check
      _
    $region23: #{tpu_custom_call.1} parent=1 // pred_check_branch
      %3287 = sbr.rel (0) target = $region25
    $region24: #{tpu_custom_call.1} parent=1 // pred_region
      %s3289 = ssub.s32 16, 16
      %3290 = vsyncadd [#allocation9], %s3289
      %s3292 = sshll.u32 [#allocation8], 4
      %s3293 = int_to_ptr.vmem [resolvable:$true] %s3292
      %3295 = dma.vmem_to_hbm [thread:$0]  %s3293, 16, %s3, [#allocation9]
    $region25: #{tpu_custom_call.1} parent=1 // pred_fallthru
      _
    // Predicated region
    $region26: #{tpu_custom_call.1} parent=1 // pred_check
      _
    $region27: #{tpu_custom_call.1} parent=1 // pred_check_branch
      %3297 = sbr.rel (0) target = $region29
    $region28: #{tpu_custom_call.1} parent=1 // pred_region
      %s3299 = ssub.s32 16, 16
      %3300 = vsyncadd [#allocation9], %s3299
      %s3302 = sshll.u32 [#allocation10], 4
      %s3303 = int_to_ptr.vmem [resolvable:$true] %s3302
      %3305 = dma.vmem_to_hbm [thread:$0]  %s3303, 16, %s4, [#allocation9]
    $region29: #{tpu_custom_call.1} parent=1 // pred_fallthru
      _
    // Predicated region
    $region30: #{tpu_custom_call.1} parent=1 // pred_check
      _
    $region31: #{tpu_custom_call.1} parent=1 // pred_check_branch
      %3307 = sbr.rel (0) target = $region33
    $region32: #{tpu_custom_call.1} parent=1 // pred_region
      %3308 = dma.done [#allocation4], 4096
    $region33: #{tpu_custom_call.1} parent=1 // pred_fallthru
      _
    // Predicated region
    $region34: #{tpu_custom_call.1} parent=1 // pred_check
      _
    $region35: #{tpu_custom_call.1} parent=1 // pred_check_branch
      %3310 = sbr.rel (0) target = $region37
    $region36: #{tpu_custom_call.1} parent=1 // pred_region
      %3311 = dma.done [#allocation9], 16
    $region37: #{tpu_custom_call.1} parent=1 // pred_fallthru
      _
    // Predicated region
    $region38: #{tpu_custom_call.1} parent=1 // pred_check
      _
    $region39: #{tpu_custom_call.1} parent=1 // pred_check_branch
      %3313 = sbr.rel (0) target = $region41
    $region40: #{tpu_custom_call.1} parent=1 // pred_region
      %3314 = dma.done [#allocation9], 16
    $region41: #{tpu_custom_call.1} parent=1 // pred_fallthru
      _
    %3315 = vsyncpa [#allocation3], 1
    %3316 = vsyncpa [#allocation6], 1
    %3317 = vsyncpa [#allocation4], 1
    %3318 = vsyncpa [#allocation9], 1

</llo_original>
